<compile_context>
chip_gen: v7x
topology: tpu7x:2x2x1
jax: 0.10.0
libtpu: 0.0.40
codegen_flags: <defaults>
</compile_context>

<pallas_src>
import functools

import jax
import jax.numpy as jnp
from jax import lax
from jax.experimental import pallas as pl
from jax.experimental.pallas import tpu as pltpu

LN_EPS = 1e-3                 # matches norm_args {'eps': 0.001}
LANE = 128                    # lane width  (pad output-channel dims to this)
SUB = 16                      # sublane multiple used for bf16 row tiles
VMEM_LIMIT = 32 * 1024 * 1024 # explicit scoped-VMEM cap (safe on v5e/v6e/v7x)


def _round_up(x, m):
    return (x + m - 1) // m * m


# ----------------------------------------------------------------------------- kernels


def _linear_kernel(x_ref, w_ref, b_ref, o_ref):
    """y = x @ W + b   (bf16 operands, f32 accumulation)."""
    y = jnp.dot(x_ref[...], w_ref[...], preferred_element_type=jnp.float32)
    o_ref[...] = (y + b_ref[...]).astype(o_ref.dtype)


def _deconv_ln_silu_kernel(p_ref, k_ref, g_ref, b_ref, o_ref, *, cout):
    """(patches @ packed-kernel) -> LayerNorm(eps=1e-3, over true cout) -> SiLU."""
    y = jnp.dot(p_ref[...], k_ref[...], preferred_element_type=jnp.float32)
    # Padded weight columns are exactly zero, so sums over the padded lane width equal sums
    # over the true width; single pass: sum and sum-of-squares, divide by true cout once.
    inv_c = 1.0 / cout
    s1 = jnp.sum(y, axis=-1, keepdims=True)
    s2 = jnp.sum(y * y, axis=-1, keepdims=True)
    mu = s1 * inv_c
    var = s2 * inv_c - mu * mu
    yhat = (y - mu) * lax.rsqrt(var + LN_EPS)
    yhat = yhat * g_ref[...] + b_ref[...]
    o_ref[...] = (yhat * jax.nn.sigmoid(yhat)).astype(o_ref.dtype)


def _deconv_bias_kernel(p_ref, k_ref, b_ref, o_ref):
    """Final layer: (patches @ packed-kernel) + bias + 0.5 (no norm / activation)."""
    y = jnp.dot(p_ref[...], k_ref[...], preferred_element_type=jnp.float32)
    o_ref[...] = (y + b_ref[...] + 0.5).astype(o_ref.dtype)


# ----------------------------------------------------------------------------- wrappers


def _linear_pallas(x, w_p, b_p, f_true):
    """x:(N, Din) f32 -> (N, f_true) bf16 via row-tiled pallas matmul."""
    n, din = x.shape
    fp = w_p.shape[1]
    tm = min(256, _round_up(n, SUB))
    n_pad = _round_up(n, tm)
    xb = x.astype(jnp.bfloat16)
    if n_pad != n:
        xb = jnp.pad(xb, ((0, n_pad - n), (0, 0)))
    out = pl.pallas_call(
        _linear_kernel,
        out_shape=jax.ShapeDtypeStruct((n_pad, fp), jnp.bfloat16),
        grid=(n_pad // tm,),
        in_specs=[
            pl.BlockSpec((tm, din), lambda i: (i, 0)),
            pl.BlockSpec((din, fp), lambda i: (0, 0)),   # weight resident across row tiles
            pl.BlockSpec((1, fp), lambda i: (0, 0)),
        ],
        out_specs=pl.BlockSpec((tm, fp), lambda i: (i, 0)),
        compiler_params=pltpu.CompilerParams(
            dimension_semantics=("parallel",),
            vmem_limit_bytes=VMEM_LIMIT),
    )(xb, w_p, b_p)
    return out[:n, :f_true]


def _build_patches(x_nhwc):
    """Sub-pixel im2col: (B,H,W,C) -> (4 parities, B*H*W, 4*C) bf16, tap order (u,v)."""
    x = x_nhwc.astype(jnp.bfloat16)
    b, h, w, c = x.shape
    xpad = jnp.pad(x, ((0, 0), (1, 1), (1, 1), (0, 0)))
    pats = []
    for a in range(2):
        for bb in range(2):
            taps = []
            for u in range(2):
                for v in range(2):
                    taps.append(xpad[:, a + u:a + u + h, bb + v:bb + v + w, :])
            pats.append(jnp.concatenate(taps, axis=-1).reshape(b * h * w, 4 * c))
    return jnp.stack(pats, axis=0)


def _interleave(o4, b, h, w, c):
    """(4, B*H*W, C) parity-major -> (B, 2H, 2W, C): out[:, 2i+a, 2j+p, :] = o4[(a,p), i*W+j, :]."""
    o = o4.reshape(2, 2, b, h, w, c)
    o = o.transpose(2, 3, 0, 4, 1, 5)
    return o.reshape(b, 2 * h, 2 * w, c)


def _deconv_layer_pallas(x_nhwc, layer_p, cout, last):
    """One ConvTranspose2d(k4,s2,p1) [+ LN + SiLU, or + bias + 0.5], NHWC in/out."""
    b, h, w, c = x_nhwc.shape
    k_p = layer_p["K"]                       # (4, 4*C, CP) bf16
    cp = k_p.shape[-1]
    kd = 4 * c
    patches = _build_patches(x_nhwc)         # (4, R, 4*C)
    r = b * h * w
    tm = min(256, _round_up(r, SUB))
    r_pad = _round_up(r, tm)
    if r_pad != r:
        patches = jnp.pad(patches, ((0, 0), (0, r_pad - r), (0, 0)))
    grid = (4, r_pad // tm)                  # parity outer -> packed weight DMA'd once per parity

    p_spec = pl.BlockSpec((None, tm, kd), lambda p, i: (p, i, 0))
    k_spec = pl.BlockSpec((None, kd, cp), lambda p, i: (p, 0, 0))
    v_spec = pl.BlockSpec((1, cp), lambda p, i: (0, 0))
    o_spec = pl.BlockSpec((None, tm, cp), lambda p, i: (p, i, 0))
    cparams = pltpu.CompilerParams(
        dimension_semantics=("parallel", "parallel"),
        vmem_limit_bytes=VMEM_LIMIT)
    out_dtype = jnp.float32 if last else jnp.bfloat16

    if last:
        out4 = pl.pallas_call(
            _deconv_bias_kernel,
            out_shape=jax.ShapeDtypeStruct((4, r_pad, cp), out_dtype),
            grid=grid,
            in_specs=[p_spec, k_spec, v_spec],
            out_specs=o_spec,
            compiler_params=cparams,
        )(patches, k_p, layer_p["bias"])
    else:
        out4 = pl.pallas_call(
            functools.partial(_deconv_ln_silu_kernel, cout=cout),
            out_shape=jax.ShapeDtypeStruct((4, r_pad, cp), out_dtype),
            grid=grid,
            in_specs=[p_spec, k_spec, v_spec, v_spec],
            out_specs=o_spec,
            compiler_params=cparams,
        )(patches, k_p, layer_p["gamma"], layer_p["beta"])

    out4 = out4[:, :r, :cout]                # drop padded rows / padded lanes
    return _interleave(out4, b, h, w, cout)


def cnn_decoder_forward(latent_states, packed, cfg):
    """Mirrors CNNDecoder.forward: latent (..., L) -> {key: (..., C_k, 64, 64)}."""
    cm = cfg["channels_multiplier"]
    output_channels = cfg["output_channels"]
    lead = latent_states.shape[:-1]
    din = latent_states.shape[-1]
    x = latent_states.reshape(-1, din)
    n = x.shape[0]

    feat = _linear_pallas(x, packed["lin_w"], packed["lin_b"], cfg["cnn_encoder_output_dim"])
    c0 = 8 * cm
    h = feat.reshape(n, c0, 4, 4).transpose(0, 2, 3, 1)          # Unflatten (NCHW) -> NHWC

    out_ch = [4 * cm, 2 * cm, cm, sum(output_channels)]
    for l in range(4):
        h = _deconv_layer_pallas(h, packed["conv"][l], cout=out_ch[l], last=(l == 3))

    ctot = sum(output_channels)
    out = h.transpose(0, 3, 1, 2).reshape(*lead, ctot, *cfg["image_size"])  # NHWC -> NCHW
    rec, off = {}, 0
    for k, c in zip(cfg["keys"], output_channels):
        rec[k] = out[..., off:off + c, :, :]
        off += c
    return rec


# ----------------------------------------------------------------------------- parameter packing


def _pack_deconv_weight(w, cout_pad):
    """torch ConvTranspose2d weight (Cin, Cout, 4, 4) -> (4 parities, 4*Cin, cout_pad) bf16."""
    cin, cout = w.shape[:2]
    mats = []
    for a in range(2):
        for b in range(2):
            rows = []
            for u in range(2):
                for v in range(2):
                    rows.append(w[:, :, 3 - a - 2 * u, 3 - b - 2 * v])   # (Cin, Cout)
            mats.append(jnp.concatenate(rows, axis=0))                   # (4*Cin, Cout)
    k = jnp.stack(mats, axis=0)
    k = jnp.pad(k, ((0, 0), (0, 0), (0, cout_pad - cout)))               # zero lane padding
    return k.astype(jnp.bfloat16)


def prepare_params(raw, cfg):
    f = cfg["cnn_encoder_output_dim"]
    fp = _round_up(f, LANE)
    lin_w = jnp.pad(raw["lin_w"].T, ((0, 0), (0, fp - f))).astype(jnp.bfloat16)  # (Din, Fp)
    lin_b = jnp.pad(raw["lin_b"], (0, fp - f)).reshape(1, fp).astype(jnp.float32)
    conv = []
    for l in range(4):
        w = raw["conv_w"][l]
        cout = w.shape[1]
        cp = _round_up(cout, LANE)
        entry = {"K": _pack_deconv_weight(w, cp)}
        if l < 3:
            entry["gamma"] = jnp.pad(raw["ln_gamma"][l], (0, cp - cout)).reshape(1, cp).astype(jnp.float32)
            entry["beta"] = jnp.pad(raw["ln_beta"][l], (0, cp - cout)).reshape(1, cp).astype(jnp.float32)
        else:
            entry["bias"] = jnp.pad(raw["conv_b"], (0, cp - cout)).reshape(1, cp).astype(jnp.float32)
        conv.append(entry)
    return {"lin_w": lin_w, "lin_b": lin_b, "conv": conv}


def init_params(key, cfg):
    """Synthetic parameters in torch layouts (Linear: (out,in); ConvT2d: (Cin,Cout,4,4))."""
    cm = cfg["channels_multiplier"]
    din = cfg["latent_state_size"]
    f = cfg["cnn_encoder_output_dim"]
    cin = [8 * cm, 4 * cm, 2 * cm, cm]
    cout = [4 * cm, 2 * cm, cm, sum(cfg["output_channels"])]
    ks = jax.random.split(key, 16)
    raw = {
        "lin_w": 0.05 * jax.random.normal(ks[0], (f, din), jnp.float32),
        "lin_b": 0.01 * jax.random.normal(ks[1], (f,), jnp.float32),
        "conv_w": [0.1 * jax.random.normal(ks[2 + l], (cin[l], cout[l], 4, 4), jnp.float32)
                   for l in range(4)],
        "ln_gamma": [1.0 + 0.1 * jax.random.normal(ks[6 + l], (cout[l],), jnp.float32)
                     for l in range(3)],
        "ln_beta": [0.1 * jax.random.normal(ks[9 + l], (cout[l],), jnp.float32)
                    for l in range(3)],
        "conv_b": 0.01 * jax.random.normal(ks[12], (cout[3],), jnp.float32),
    }
    return raw


# ----------------------------------------------------------------------------- pure-JAX reference


def reference_forward(latent_states, raw, cfg):
    """Reference CNNDecoder forward (lax.conv with lhs_dilation == ConvTranspose2d)."""
    cm = cfg["channels_multiplier"]
    lead = latent_states.shape[:-1]
    din = latent_states.shape[-1]
    x = latent_states.reshape(-1, din)
    h = jnp.dot(x.astype(jnp.bfloat16), raw["lin_w"].T.astype(jnp.bfloat16),
                preferred_element_type=jnp.float32) + raw["lin_b"]
    n = x.shape[0]
    h = h.reshape(n, 8 * cm, 4, 4)
    for l in range(4):
        w = raw["conv_w"][l]                                        # (Cin, Cout, 4, 4)
        v = jnp.flip(w, axis=(2, 3)).transpose(1, 0, 2, 3)          # (Cout, Cin, 4, 4)
        h = lax.conv_general_dilated(
            h.astype(jnp.bfloat16), v.astype(jnp.bfloat16),
            window_strides=(1, 1), padding=((2, 2), (2, 2)), lhs_dilation=(2, 2),
            dimension_numbers=("NCHW", "OIHW", "NCHW"),
            preferred_element_type=jnp.float32)
        if l < 3:
            hc = h.transpose(0, 2, 3, 1)
            mu = hc.mean(-1, keepdims=True)
            var = ((hc - mu) ** 2).mean(-1, keepdims=True)
            hc = (hc - mu) * lax.rsqrt(var + LN_EPS)
            hc = hc * raw["ln_gamma"][l] + raw["ln_beta"][l]
            hc = hc * jax.nn.sigmoid(hc)
            h = hc.transpose(0, 3, 1, 2)
        else:
            h = h + raw["conv_b"][None, :, None, None] + 0.5
    ctot = sum(cfg["output_channels"])
    out = h.reshape(*lead, ctot, *cfg["image_size"])
    rec, off = {}, 0
    for k, c in zip(cfg["keys"], cfg["output_channels"]):
        rec[k] = out[..., off:off + c, :, :]
        off += c
    return rec


# ----------------------------------------------------------------------------- demo / test


if __name__ == "__main__":
    cfg = dict(
        keys=("rgb",),
        output_channels=(3,),
        channels_multiplier=4,
        latent_state_size=64,
        image_size=(64, 64),
    )
    cfg["cnn_encoder_output_dim"] = 8 * cfg["channels_multiplier"] * 4 * 4   # 512

    root = jax.random.PRNGKey(0)
    k_param, k_state = jax.random.split(root)
    raw = init_params(k_param, cfg)
    packed = prepare_params(raw, cfg)

    seq, batch = 2, 2
    latent = jax.random.normal(k_state, (seq, batch, cfg["latent_state_size"]), jnp.float32)

    fwd = jax.jit(functools.partial(cnn_decoder_forward, cfg=cfg))
    out = fwd(latent, packed)
    out = jax.block_until_ready(out)

    ref = reference_forward(latent, raw, cfg)
    ref = jax.block_until_ready(ref)

    for k, c in zip(cfg["keys"], cfg["output_channels"]):
        assert out[k].shape == (seq, batch, c, *cfg["image_size"]), out[k].shape
        err = float(jnp.max(jnp.abs(out[k].astype(jnp.float32) - ref[k].astype(jnp.float32))))
        assert err < 3e-2, f"max abs err vs reference: {err}"

    print("KERNEL_OK")
</pallas_src>

<mosaic_0001>
module attributes {stable_mosaic.version = 11 : i64} {
  func.func @_linear_kernel(%arg0: i32, %arg1: memref<16x64xbf16, #tpu.memory_space<vmem>>, %arg2: memref<64x512xbf16, #tpu.memory_space<vmem>>, %arg3: memref<1x512xf32, #tpu.memory_space<vmem>>, %arg4: memref<16x512xbf16, #tpu.memory_space<vmem>>) attributes {dimension_semantics = [#tpu.dimension_semantics<parallel>], iteration_bounds = array<i64: 1>, scalar_prefetch = 0 : i64, scratch_operands = 0 : i64, tpu.core_type = #tpu.core_type<tc>, window_params = [{transform_indices = @transform_0, window_bounds = array<i64: 16, 64>}, {pipeline_mode = #tpu.pipeline_mode<synchronous>, transform_indices = @transform_1, window_bounds = array<i64: 64, 512>}, {pipeline_mode = #tpu.pipeline_mode<synchronous>, transform_indices = @transform_2, window_bounds = array<i64: 1, 512>}, {transform_indices = @transform_3, window_bounds = array<i64: 16, 512>}]} {
    %c0 = arith.constant 0 : index
    %c0_0 = arith.constant 0 : index
    %0 = vector.load %arg1[%c0, %c0_0] : memref<16x64xbf16, #tpu.memory_space<vmem>>, vector<16x64xbf16>
    %c0_1 = arith.constant 0 : index
    %c0_2 = arith.constant 0 : index
    %1 = vector.load %arg2[%c0_1, %c0_2] : memref<64x512xbf16, #tpu.memory_space<vmem>>, vector<64x512xbf16>
    %cst = arith.constant dense<0.000000e+00> : vector<16x512xf32>
    %2 = tpu.matmul %0, %1, %cst {dimension_numbers = #tpu.dot_dimension_numbers<[1], [0], [0], [1], [0, 0, 1, 1], [], []>} : vector<16x64xbf16>, vector<64x512xbf16>, vector<16x512xf32> -> vector<16x512xf32>
    %c0_3 = arith.constant 0 : index
    %c0_4 = arith.constant 0 : index
    %3 = vector.load %arg3[%c0_3, %c0_4] : memref<1x512xf32, #tpu.memory_space<vmem>>, vector<1x512xf32>
    %4 = vector.broadcast %3 : vector<1x512xf32> to vector<16x512xf32>
    %5 = arith.addf %2, %4 : vector<16x512xf32>
    %6 = arith.truncf %5 : vector<16x512xf32> to vector<16x512xbf16>
    %c0_5 = arith.constant 0 : index
    %c0_6 = arith.constant 0 : index
    %7 = vector.load %arg4[%c0_5, %c0_6] : memref<16x512xbf16, #tpu.memory_space<vmem>>, vector<16x512xbf16>
    tpu.vector_store %arg4[%c0_5, %c0_6], %6 {strides = array<i32>} : memref<16x512xbf16, #tpu.memory_space<vmem>>, vector<16x512xbf16>,
    return
  }
  func.func @transform_0(%arg0: i32) -> (i32, i32) {
    %c0_i32 = arith.constant 0 : i32
    %c0_i32_0 = arith.constant 0 : i32
    return %arg0, %c0_i32 : i32, i32
  }
  func.func @transform_1(%arg0: i32) -> (i32, i32) {
    %c0_i32 = arith.constant 0 : i32
    %c0_i32_0 = arith.constant 0 : i32
    %c0_i32_1 = arith.constant 0 : i32
    return %c0_i32, %c0_i32_0 : i32, i32
  }
  func.func @transform_2(%arg0: i32) -> (i32, i32) {
    %c0_i32 = arith.constant 0 : i32
    %c0_i32_0 = arith.constant 0 : i32
    %c0_i32_1 = arith.constant 0 : i32
    return %c0_i32, %c0_i32_0 : i32, i32
  }
  func.func @transform_3(%arg0: i32) -> (i32, i32) {
    %c0_i32 = arith.constant 0 : i32
    %c0_i32_0 = arith.constant 0 : i32
    return %arg0, %c0_i32 : i32, i32
  }
}

module attributes {stable_mosaic.version = 11 : i64} {
  func.func @_deconv_ln_silu_kernel(%arg0: i32, %arg1: i32, %arg2: memref<1x64x128xbf16, #tpu.memory_space<vmem>>, %arg3: memref<1x128x128xbf16, #tpu.memory_space<vmem>>, %arg4: memref<1x128xf32, #tpu.memory_space<vmem>>, %arg5: memref<1x128xf32, #tpu.memory_space<vmem>>, %arg6: memref<1x64x128xbf16, #tpu.memory_space<vmem>>) attributes {dimension_semantics = [#tpu.dimension_semantics<parallel>, #tpu.dimension_semantics<parallel>], iteration_bounds = array<i64: 4, 1>, scalar_prefetch = 0 : i64, scratch_operands = 0 : i64, tpu.core_type = #tpu.core_type<tc>, window_params = [{transform_indices = @transform_0, window_bounds = array<i64: 1, 64, 128>}, {transform_indices = @transform_1, window_bounds = array<i64: 1, 128, 128>}, {pipeline_mode = #tpu.pipeline_mode<synchronous>, transform_indices = @transform_2, window_bounds = array<i64: 1, 128>}, {pipeline_mode = #tpu.pipeline_mode<synchronous>, transform_indices = @transform_3, window_bounds = array<i64: 1, 128>}, {transform_indices = @transform_4, window_bounds = array<i64: 1, 64, 128>}]} {
    %c0 = arith.constant 0 : index
    %c0_0 = arith.constant 0 : index
    %c0_1 = arith.constant 0 : index
    %0 = vector.load %arg2[%c0, %c0_0, %c0_1] : memref<1x64x128xbf16, #tpu.memory_space<vmem>>, vector<1x64x128xbf16>
    %1 = vector.shape_cast %0 : vector<1x64x128xbf16> to vector<64x128xbf16>
    %c0_2 = arith.constant 0 : index
    %c0_3 = arith.constant 0 : index
    %c0_4 = arith.constant 0 : index
    %2 = vector.load %arg3[%c0_2, %c0_3, %c0_4] : memref<1x128x128xbf16, #tpu.memory_space<vmem>>, vector<1x128x128xbf16>
    %3 = vector.shape_cast %2 : vector<1x128x128xbf16> to vector<128x128xbf16>
    %cst = arith.constant dense<0.000000e+00> : vector<64x128xf32>
    %4 = tpu.matmul %1, %3, %cst {dimension_numbers = #tpu.dot_dimension_numbers<[1], [0], [0], [1], [0, 0, 1, 1], [], []>} : vector<64x128xbf16>, vector<128x128xbf16>, vector<64x128xf32> -> vector<64x128xf32>
    %cst_5 = arith.constant dense<0.000000e+00> : vector<64xf32>
    %5 = vector.multi_reduction <add>, %4, %cst_5 [1] : vector<64x128xf32> to vector<64xf32>
    %6 = vector.shape_cast %5 : vector<64xf32> to vector<64x1xf32>
    %7 = arith.mulf %4, %4 : vector<64x128xf32>
    %cst_6 = arith.constant dense<0.000000e+00> : vector<64xf32>
    %8 = vector.multi_reduction <add>, %7, %cst_6 [1] : vector<64x128xf32> to vector<64xf32>
    %9 = vector.shape_cast %8 : vector<64xf32> to vector<64x1xf32>
    %cst_7 = arith.constant 6.250000e-02 : f32
    %10 = vector.broadcast %cst_7 : f32 to vector<64x1xf32>
    %11 = arith.mulf %6, %10 : vector<64x1xf32>
    %cst_8 = arith.constant 6.250000e-02 : f32
    %12 = vector.broadcast %cst_8 : f32 to vector<64x1xf32>
    %13 = arith.mulf %9, %12 : vector<64x1xf32>
    %14 = arith.mulf %11, %11 : vector<64x1xf32>
    %15 = arith.subf %13, %14 : vector<64x1xf32>
    %16 = vector.broadcast %11 : vector<64x1xf32> to vector<64x128xf32>
    %17 = arith.subf %4, %16 : vector<64x128xf32>
    %cst_9 = arith.constant 1.000000e-03 : f32
    %18 = vector.broadcast %cst_9 : f32 to vector<64x1xf32>
    %19 = arith.addf %15, %18 : vector<64x1xf32>
    %20 = math.rsqrt %19 : vector<64x1xf32>
    %21 = vector.broadcast %20 : vector<64x1xf32> to vector<64x128xf32>
    %22 = arith.mulf %17, %21 : vector<64x128xf32>
    %c0_10 = arith.constant 0 : index
    %c0_11 = arith.constant 0 : index
    %23 = vector.load %arg4[%c0_10, %c0_11] : memref<1x128xf32, #tpu.memory_space<vmem>>, vector<1x128xf32>
    %24 = vector.broadcast %23 : vector<1x128xf32> to vector<64x128xf32>
    %25 = arith.mulf %22, %24 : vector<64x128xf32>
    %c0_12 = arith.constant 0 : index
    %c0_13 = arith.constant 0 : index
    %26 = vector.load %arg5[%c0_12, %c0_13] : memref<1x128xf32, #tpu.memory_space<vmem>>, vector<1x128xf32>
    %27 = vector.broadcast %26 : vector<1x128xf32> to vector<64x128xf32>
    %28 = arith.addf %25, %27 : vector<64x128xf32>
    %29 = arith.negf %28 : vector<64x128xf32>
    %30 = math.exp %29 : vector<64x128xf32>
    %cst_14 = arith.constant 1.000000e+00 : f32
    %31 = vector.broadcast %cst_14 : f32 to vector<64x128xf32>
    %32 = arith.addf %31, %30 : vector<64x128xf32>
    %33 = arith.divf %31, %32 : vector<64x128xf32>
    %34 = arith.mulf %28, %33 : vector<64x128xf32>
    %35 = arith.truncf %34 : vector<64x128xf32> to vector<64x128xbf16>
    %c0_15 = arith.constant 0 : index
    %c0_16 = arith.constant 0 : index
    %c0_17 = arith.constant 0 : index
    %36 = vector.load %arg6[%c0_15, %c0_16, %c0_17] : memref<1x64x128xbf16, #tpu.memory_space<vmem>>, vector<1x64x128xbf16>
    %37 = vector.shape_cast %36 : vector<1x64x128xbf16> to vector<64x128xbf16>
    %38 = vector.shape_cast %35 : vector<64x128xbf16> to vector<1x64x128xbf16>
    tpu.vector_store %arg6[%c0_15, %c0_16, %c0_17], %38 {strides = array<i32>} : memref<1x64x128xbf16, #tpu.memory_space<vmem>>, vector<1x64x128xbf16>,
    return
  }
  func.func @transform_0(%arg0: i32, %arg1: i32) -> (i32, i32, i32) {
    %c0_i32 = arith.constant 0 : i32
    %c0_i32_0 = arith.constant 0 : i32
    return %arg0, %arg1, %c0_i32 : i32, i32, i32
  }
  func.func @transform_1(%arg0: i32, %arg1: i32) -> (i32, i32, i32) {
    %c0_i32 = arith.constant 0 : i32
    %c0_i32_0 = arith.constant 0 : i32
    %c0_i32_1 = arith.constant 0 : i32
    return %arg0, %c0_i32, %c0_i32_0 : i32, i32, i32
  }
  func.func @transform_2(%arg0: i32, %arg1: i32) -> (i32, i32) {
    %c0_i32 = arith.constant 0 : i32
    %c0_i32_0 = arith.constant 0 : i32
    %c0_i32_1 = arith.constant 0 : i32
    return %c0_i32, %c0_i32_0 : i32, i32
  }
  func.func @transform_3(%arg0: i32, %arg1: i32) -> (i32, i32) {
    %c0_i32 = arith.constant 0 : i32
    %c0_i32_0 = arith.constant 0 : i32
    %c0_i32_1 = arith.constant 0 : i32
    return %c0_i32, %c0_i32_0 : i32, i32
  }
  func.func @transform_4(%arg0: i32, %arg1: i32) -> (i32, i32, i32) {
    %c0_i32 = arith.constant 0 : i32
    %c0_i32_0 = arith.constant 0 : i32
    return %arg0, %arg1, %c0_i32 : i32, i32, i32
  }
}

module attributes {stable_mosaic.version = 11 : i64} {
  func.func @_deconv_ln_silu_kernel(%arg0: i32, %arg1: i32, %arg2: memref<1x256x64xbf16, #tpu.memory_space<vmem>>, %arg3: memref<1x64x128xbf16, #tpu.memory_space<vmem>>, %arg4: memref<1x128xf32, #tpu.memory_space<vmem>>, %arg5: memref<1x128xf32, #tpu.memory_space<vmem>>, %arg6: memref<1x256x128xbf16, #tpu.memory_space<vmem>>) attributes {dimension_semantics = [#tpu.dimension_semantics<parallel>, #tpu.dimension_semantics<parallel>], iteration_bounds = array<i64: 4, 1>, scalar_prefetch = 0 : i64, scratch_operands = 0 : i64, tpu.core_type = #tpu.core_type<tc>, window_params = [{transform_indices = @transform_0, window_bounds = array<i64: 1, 256, 64>}, {transform_indices = @transform_1, window_bounds = array<i64: 1, 64, 128>}, {pipeline_mode = #tpu.pipeline_mode<synchronous>, transform_indices = @transform_2, window_bounds = array<i64: 1, 128>}, {pipeline_mode = #tpu.pipeline_mode<synchronous>, transform_indices = @transform_3, window_bounds = array<i64: 1, 128>}, {transform_indices = @transform_4, window_bounds = array<i64: 1, 256, 128>}]} {
    %c0 = arith.constant 0 : index
    %c0_0 = arith.constant 0 : index
    %c0_1 = arith.constant 0 : index
    %0 = vector.load %arg2[%c0, %c0_0, %c0_1] : memref<1x256x64xbf16, #tpu.memory_space<vmem>>, vector<1x256x64xbf16>
    %1 = vector.shape_cast %0 : vector<1x256x64xbf16> to vector<256x64xbf16>
    %c0_2 = arith.constant 0 : index
    %c0_3 = arith.constant 0 : index
    %c0_4 = arith.constant 0 : index
    %2 = vector.load %arg3[%c0_2, %c0_3, %c0_4] : memref<1x64x128xbf16, #tpu.memory_space<vmem>>, vector<1x64x128xbf16>
    %3 = vector.shape_cast %2 : vector<1x64x128xbf16> to vector<64x128xbf16>
    %cst = arith.constant dense<0.000000e+00> : vector<256x128xf32>
    %4 = tpu.matmul %1, %3, %cst {dimension_numbers = #tpu.dot_dimension_numbers<[1], [0], [0], [1], [0, 0, 1, 1], [], []>} : vector<256x64xbf16>, vector<64x128xbf16>, vector<256x128xf32> -> vector<256x128xf32>
    %cst_5 = arith.constant dense<0.000000e+00> : vector<256xf32>
    %5 = vector.multi_reduction <add>, %4, %cst_5 [1] : vector<256x128xf32> to vector<256xf32>
    %6 = vector.shape_cast %5 : vector<256xf32> to vector<256x1xf32>
    %7 = arith.mulf %4, %4 : vector<256x128xf32>
    %cst_6 = arith.constant dense<0.000000e+00> : vector<256xf32>
    %8 = vector.multi_reduction <add>, %7, %cst_6 [1] : vector<256x128xf32> to vector<256xf32>
    %9 = vector.shape_cast %8 : vector<256xf32> to vector<256x1xf32>
    %cst_7 = arith.constant 1.250000e-01 : f32
    %10 = vector.broadcast %cst_7 : f32 to vector<256x1xf32>
    %11 = arith.mulf %6, %10 : vector<256x1xf32>
    %cst_8 = arith.constant 1.250000e-01 : f32
    %12 = vector.broadcast %cst_8 : f32 to vector<256x1xf32>
    %13 = arith.mulf %9, %12 : vector<256x1xf32>
    %14 = arith.mulf %11, %11 : vector<256x1xf32>
    %15 = arith.subf %13, %14 : vector<256x1xf32>
    %16 = vector.broadcast %11 : vector<256x1xf32> to vector<256x128xf32>
    %17 = arith.subf %4, %16 : vector<256x128xf32>
    %cst_9 = arith.constant 1.000000e-03 : f32
    %18 = vector.broadcast %cst_9 : f32 to vector<256x1xf32>
    %19 = arith.addf %15, %18 : vector<256x1xf32>
    %20 = math.rsqrt %19 : vector<256x1xf32>
    %21 = vector.broadcast %20 : vector<256x1xf32> to vector<256x128xf32>
    %22 = arith.mulf %17, %21 : vector<256x128xf32>
    %c0_10 = arith.constant 0 : index
    %c0_11 = arith.constant 0 : index
    %23 = vector.load %arg4[%c0_10, %c0_11] : memref<1x128xf32, #tpu.memory_space<vmem>>, vector<1x128xf32>
    %24 = vector.broadcast %23 : vector<1x128xf32> to vector<256x128xf32>
    %25 = arith.mulf %22, %24 : vector<256x128xf32>
    %c0_12 = arith.constant 0 : index
    %c0_13 = arith.constant 0 : index
    %26 = vector.load %arg5[%c0_12, %c0_13] : memref<1x128xf32, #tpu.memory_space<vmem>>, vector<1x128xf32>
    %27 = vector.broadcast %26 : vector<1x128xf32> to vector<256x128xf32>
    %28 = arith.addf %25, %27 : vector<256x128xf32>
    %29 = arith.negf %28 : vector<256x128xf32>
    %30 = math.exp %29 : vector<256x128xf32>
    %cst_14 = arith.constant 1.000000e+00 : f32
    %31 = vector.broadcast %cst_14 : f32 to vector<256x128xf32>
    %32 = arith.addf %31, %30 : vector<256x128xf32>
    %33 = arith.divf %31, %32 : vector<256x128xf32>
    %34 = arith.mulf %28, %33 : vector<256x128xf32>
    %35 = arith.truncf %34 : vector<256x128xf32> to vector<256x128xbf16>
    %c0_15 = arith.constant 0 : index
    %c0_16 = arith.constant 0 : index
    %c0_17 = arith.constant 0 : index
    %36 = vector.load %arg6[%c0_15, %c0_16, %c0_17] : memref<1x256x128xbf16, #tpu.memory_space<vmem>>, vector<1x256x128xbf16>
    %37 = vector.shape_cast %36 : vector<1x256x128xbf16> to vector<256x128xbf16>
    %38 = vector.shape_cast %35 : vector<256x128xbf16> to vector<1x256x128xbf16>
    tpu.vector_store %arg6[%c0_15, %c0_16, %c0_17], %38 {strides = array<i32>} : memref<1x256x128xbf16, #tpu.memory_space<vmem>>, vector<1x256x128xbf16>,
    return
  }
  func.func @transform_0(%arg0: i32, %arg1: i32) -> (i32, i32, i32) {
    %c0_i32 = arith.constant 0 : i32
    %c0_i32_0 = arith.constant 0 : i32
    return %arg0, %arg1, %c0_i32 : i32, i32, i32
  }
  func.func @transform_1(%arg0: i32, %arg1: i32) -> (i32, i32, i32) {
    %c0_i32 = arith.constant 0 : i32
    %c0_i32_0 = arith.constant 0 : i32
    %c0_i32_1 = arith.constant 0 : i32
    return %arg0, %c0_i32, %c0_i32_0 : i32, i32, i32
  }
  func.func @transform_2(%arg0: i32, %arg1: i32) -> (i32, i32) {
    %c0_i32 = arith.constant 0 : i32
    %c0_i32_0 = arith.constant 0 : i32
    %c0_i32_1 = arith.constant 0 : i32
    return %c0_i32, %c0_i32_0 : i32, i32
  }
  func.func @transform_3(%arg0: i32, %arg1: i32) -> (i32, i32) {
    %c0_i32 = arith.constant 0 : i32
    %c0_i32_0 = arith.constant 0 : i32
    %c0_i32_1 = arith.constant 0 : i32
    return %c0_i32, %c0_i32_0 : i32, i32
  }
  func.func @transform_4(%arg0: i32, %arg1: i32) -> (i32, i32, i32) {
    %c0_i32 = arith.constant 0 : i32
    %c0_i32_0 = arith.constant 0 : i32
    return %arg0, %arg1, %c0_i32 : i32, i32, i32
  }
}

module attributes {stable_mosaic.version = 11 : i64} {
  func.func @_deconv_ln_silu_kernel(%arg0: i32, %arg1: i32, %arg2: memref<1x256x32xbf16, #tpu.memory_space<vmem>>, %arg3: memref<1x32x128xbf16, #tpu.memory_space<vmem>>, %arg4: memref<1x128xf32, #tpu.memory_space<vmem>>, %arg5: memref<1x128xf32, #tpu.memory_space<vmem>>, %arg6: memref<1x256x128xbf16, #tpu.memory_space<vmem>>) attributes {dimension_semantics = [#tpu.dimension_semantics<parallel>, #tpu.dimension_semantics<parallel>], iteration_bounds = array<i64: 4, 4>, scalar_prefetch = 0 : i64, scratch_operands = 0 : i64, tpu.core_type = #tpu.core_type<tc>, window_params = [{transform_indices = @transform_0, window_bounds = array<i64: 1, 256, 32>}, {transform_indices = @transform_1, window_bounds = array<i64: 1, 32, 128>}, {pipeline_mode = #tpu.pipeline_mode<synchronous>, transform_indices = @transform_2, window_bounds = array<i64: 1, 128>}, {pipeline_mode = #tpu.pipeline_mode<synchronous>, transform_indices = @transform_3, window_bounds = array<i64: 1, 128>}, {transform_indices = @transform_4, window_bounds = array<i64: 1, 256, 128>}]} {
    %c0 = arith.constant 0 : index
    %c0_0 = arith.constant 0 : index
    %c0_1 = arith.constant 0 : index
    %0 = vector.load %arg2[%c0, %c0_0, %c0_1] : memref<1x256x32xbf16, #tpu.memory_space<vmem>>, vector<1x256x32xbf16>
    %1 = vector.shape_cast %0 : vector<1x256x32xbf16> to vector<256x32xbf16>
    %c0_2 = arith.constant 0 : index
    %c0_3 = arith.constant 0 : index
    %c0_4 = arith.constant 0 : index
    %2 = vector.load %arg3[%c0_2, %c0_3, %c0_4] : memref<1x32x128xbf16, #tpu.memory_space<vmem>>, vector<1x32x128xbf16>
    %3 = vector.shape_cast %2 : vector<1x32x128xbf16> to vector<32x128xbf16>
    %cst = arith.constant dense<0.000000e+00> : vector<256x128xf32>
    %4 = tpu.matmul %1, %3, %cst {dimension_numbers = #tpu.dot_dimension_numbers<[1], [0], [0], [1], [0, 0, 1, 1], [], []>} : vector<256x32xbf16>, vector<32x128xbf16>, vector<256x128xf32> -> vector<256x128xf32>
    %cst_5 = arith.constant dense<0.000000e+00> : vector<256xf32>
    %5 = vector.multi_reduction <add>, %4, %cst_5 [1] : vector<256x128xf32> to vector<256xf32>
    %6 = vector.shape_cast %5 : vector<256xf32> to vector<256x1xf32>
    %7 = arith.mulf %4, %4 : vector<256x128xf32>
    %cst_6 = arith.constant dense<0.000000e+00> : vector<256xf32>
    %8 = vector.multi_reduction <add>, %7, %cst_6 [1] : vector<256x128xf32> to vector<256xf32>
    %9 = vector.shape_cast %8 : vector<256xf32> to vector<256x1xf32>
    %cst_7 = arith.constant 2.500000e-01 : f32
    %10 = vector.broadcast %cst_7 : f32 to vector<256x1xf32>
    %11 = arith.mulf %6, %10 : vector<256x1xf32>
    %cst_8 = arith.constant 2.500000e-01 : f32
    %12 = vector.broadcast %cst_8 : f32 to vector<256x1xf32>
    %13 = arith.mulf %9, %12 : vector<256x1xf32>
    %14 = arith.mulf %11, %11 : vector<256x1xf32>
    %15 = arith.subf %13, %14 : vector<256x1xf32>
    %16 = vector.broadcast %11 : vector<256x1xf32> to vector<256x128xf32>
    %17 = arith.subf %4, %16 : vector<256x128xf32>
    %cst_9 = arith.constant 1.000000e-03 : f32
    %18 = vector.broadcast %cst_9 : f32 to vector<256x1xf32>
    %19 = arith.addf %15, %18 : vector<256x1xf32>
    %20 = math.rsqrt %19 : vector<256x1xf32>
    %21 = vector.broadcast %20 : vector<256x1xf32> to vector<256x128xf32>
    %22 = arith.mulf %17, %21 : vector<256x128xf32>
    %c0_10 = arith.constant 0 : index
    %c0_11 = arith.constant 0 : index
    %23 = vector.load %arg4[%c0_10, %c0_11] : memref<1x128xf32, #tpu.memory_space<vmem>>, vector<1x128xf32>
    %24 = vector.broadcast %23 : vector<1x128xf32> to vector<256x128xf32>
    %25 = arith.mulf %22, %24 : vector<256x128xf32>
    %c0_12 = arith.constant 0 : index
    %c0_13 = arith.constant 0 : index
    %26 = vector.load %arg5[%c0_12, %c0_13] : memref<1x128xf32, #tpu.memory_space<vmem>>, vector<1x128xf32>
    %27 = vector.broadcast %26 : vector<1x128xf32> to vector<256x128xf32>
    %28 = arith.addf %25, %27 : vector<256x128xf32>
    %29 = arith.negf %28 : vector<256x128xf32>
    %30 = math.exp %29 : vector<256x128xf32>
    %cst_14 = arith.constant 1.000000e+00 : f32
    %31 = vector.broadcast %cst_14 : f32 to vector<256x128xf32>
    %32 = arith.addf %31, %30 : vector<256x128xf32>
    %33 = arith.divf %31, %32 : vector<256x128xf32>
    %34 = arith.mulf %28, %33 : vector<256x128xf32>
    %35 = arith.truncf %34 : vector<256x128xf32> to vector<256x128xbf16>
    %c0_15 = arith.constant 0 : index
    %c0_16 = arith.constant 0 : index
    %c0_17 = arith.constant 0 : index
    %36 = vector.load %arg6[%c0_15, %c0_16, %c0_17] : memref<1x256x128xbf16, #tpu.memory_space<vmem>>, vector<1x256x128xbf16>
    %37 = vector.shape_cast %36 : vector<1x256x128xbf16> to vector<256x128xbf16>
    %38 = vector.shape_cast %35 : vector<256x128xbf16> to vector<1x256x128xbf16>
    tpu.vector_store %arg6[%c0_15, %c0_16, %c0_17], %38 {strides = array<i32>} : memref<1x256x128xbf16, #tpu.memory_space<vmem>>, vector<1x256x128xbf16>,
    return
  }
  func.func @transform_0(%arg0: i32, %arg1: i32) -> (i32, i32, i32) {
    %c0_i32 = arith.constant 0 : i32
    %c0_i32_0 = arith.constant 0 : i32
    return %arg0, %arg1, %c0_i32 : i32, i32, i32
  }
  func.func @transform_1(%arg0: i32, %arg1: i32) -> (i32, i32, i32) {
    %c0_i32 = arith.constant 0 : i32
    %c0_i32_0 = arith.constant 0 : i32
    %c0_i32_1 = arith.constant 0 : i32
    return %arg0, %c0_i32, %c0_i32_0 : i32, i32, i32
  }
  func.func @transform_2(%arg0: i32, %arg1: i32) -> (i32, i32) {
    %c0_i32 = arith.constant 0 : i32
    %c0_i32_0 = arith.constant 0 : i32
    %c0_i32_1 = arith.constant 0 : i32
    return %c0_i32, %c0_i32_0 : i32, i32
  }
  func.func @transform_3(%arg0: i32, %arg1: i32) -> (i32, i32) {
    %c0_i32 = arith.constant 0 : i32
    %c0_i32_0 = arith.constant 0 : i32
    %c0_i32_1 = arith.constant 0 : i32
    return %c0_i32, %c0_i32_0 : i32, i32
  }
  func.func @transform_4(%arg0: i32, %arg1: i32) -> (i32, i32, i32) {
    %c0_i32 = arith.constant 0 : i32
    %c0_i32_0 = arith.constant 0 : i32
    return %arg0, %arg1, %c0_i32 : i32, i32, i32
  }
}

module attributes {stable_mosaic.version = 11 : i64} {
  func.func @_deconv_bias_kernel(%arg0: i32, %arg1: i32, %arg2: memref<1x256x16xbf16, #tpu.memory_space<vmem>>, %arg3: memref<1x16x128xbf16, #tpu.memory_space<vmem>>, %arg4: memref<1x128xf32, #tpu.memory_space<vmem>>, %arg5: memref<1x256x128xf32, #tpu.memory_space<vmem>>) attributes {dimension_semantics = [#tpu.dimension_semantics<parallel>, #tpu.dimension_semantics<parallel>], iteration_bounds = array<i64: 4, 16>, scalar_prefetch = 0 : i64, scratch_operands = 0 : i64, tpu.core_type = #tpu.core_type<tc>, window_params = [{transform_indices = @transform_0, window_bounds = array<i64: 1, 256, 16>}, {transform_indices = @transform_1, window_bounds = array<i64: 1, 16, 128>}, {pipeline_mode = #tpu.pipeline_mode<synchronous>, transform_indices = @transform_2, window_bounds = array<i64: 1, 128>}, {transform_indices = @transform_3, window_bounds = array<i64: 1, 256, 128>}]} {
    %c0 = arith.constant 0 : index
    %c0_0 = arith.constant 0 : index
    %c0_1 = arith.constant 0 : index
    %0 = vector.load %arg2[%c0, %c0_0, %c0_1] : memref<1x256x16xbf16, #tpu.memory_space<vmem>>, vector<1x256x16xbf16>
    %1 = vector.shape_cast %0 : vector<1x256x16xbf16> to vector<256x16xbf16>
    %c0_2 = arith.constant 0 : index
    %c0_3 = arith.constant 0 : index
    %c0_4 = arith.constant 0 : index
    %2 = vector.load %arg3[%c0_2, %c0_3, %c0_4] : memref<1x16x128xbf16, #tpu.memory_space<vmem>>, vector<1x16x128xbf16>
    %3 = vector.shape_cast %2 : vector<1x16x128xbf16> to vector<16x128xbf16>
    %cst = arith.constant dense<0.000000e+00> : vector<256x128xf32>
    %4 = tpu.matmul %1, %3, %cst {dimension_numbers = #tpu.dot_dimension_numbers<[1], [0], [0], [1], [0, 0, 1, 1], [], []>} : vector<256x16xbf16>, vector<16x128xbf16>, vector<256x128xf32> -> vector<256x128xf32>
    %c0_5 = arith.constant 0 : index
    %c0_6 = arith.constant 0 : index
    %5 = vector.load %arg4[%c0_5, %c0_6] : memref<1x128xf32, #tpu.memory_space<vmem>>, vector<1x128xf32>
    %6 = vector.broadcast %5 : vector<1x128xf32> to vector<256x128xf32>
    %7 = arith.addf %4, %6 : vector<256x128xf32>
    %cst_7 = arith.constant 5.000000e-01 : f32
    %8 = vector.broadcast %cst_7 : f32 to vector<256x128xf32>
    %9 = arith.addf %7, %8 : vector<256x128xf32>
    %c0_8 = arith.constant 0 : index
    %c0_9 = arith.constant 0 : index
    %c0_10 = arith.constant 0 : index
    %10 = vector.load %arg5[%c0_8, %c0_9, %c0_10] : memref<1x256x128xf32, #tpu.memory_space<vmem>>, vector<1x256x128xf32>
    %11 = vector.shape_cast %10 : vector<1x256x128xf32> to vector<256x128xf32>
    %12 = vector.shape_cast %9 : vector<256x128xf32> to vector<1x256x128xf32>
    tpu.vector_store %arg5[%c0_8, %c0_9, %c0_10], %12 {strides = array<i32>} : memref<1x256x128xf32, #tpu.memory_space<vmem>>, vector<1x256x128xf32>,
    return
  }
  func.func @transform_0(%arg0: i32, %arg1: i32) -> (i32, i32, i32) {
    %c0_i32 = arith.constant 0 : i32
    %c0_i32_0 = arith.constant 0 : i32
    return %arg0, %arg1, %c0_i32 : i32, i32, i32
  }
  func.func @transform_1(%arg0: i32, %arg1: i32) -> (i32, i32, i32) {
    %c0_i32 = arith.constant 0 : i32
    %c0_i32_0 = arith.constant 0 : i32
    %c0_i32_1 = arith.constant 0 : i32
    return %arg0, %c0_i32, %c0_i32_0 : i32, i32, i32
  }
  func.func @transform_2(%arg0: i32, %arg1: i32) -> (i32, i32) {
    %c0_i32 = arith.constant 0 : i32
    %c0_i32_0 = arith.constant 0 : i32
    %c0_i32_1 = arith.constant 0 : i32
    return %c0_i32, %c0_i32_0 : i32, i32
  }
  func.func @transform_3(%arg0: i32, %arg1: i32) -> (i32, i32, i32) {
    %c0_i32 = arith.constant 0 : i32
    %c0_i32_0 = arith.constant 0 : i32
    return %arg0, %arg1, %c0_i32 : i32, i32, i32
  }
}

</mosaic_0001>

<llo_original>
// kernel: cnn_decoder_forward.5
$region0: #{cnn_decoder_forward.5}
  #allocation0 [shape = 'u32[]', space=smem, size = 0x4, offset = 0x4, fixed_abs, tag = 'smem constant byte address 0x4 - core index']
  #allocation1 [shape = 'u32[144,128]{1,0:T(1,128)}', space=vmem, size = 0x12000, scoped, tag = 'internal scratch']
  %s0 = inlined_call_operand.vmem [shape: bf16[16,64], index: 0, kind: input, shape index: {}]
  %s1 = inlined_call_operand.hbm [shape: bf16[64,512], index: 1, kind: input, shape index: {}]
  %s2 = inlined_call_operand.hbm [shape: f32[1,512], index: 2, kind: input, shape index: {}]
  %s3 = inlined_call_operand.vmem [shape: bf16[16,512], index: 3, kind: output, shape index: {}]
  %s4 = sld [smem:[#allocation0]]
  $region30: #{cnn_decoder_forward.5} parent=0
    _
  %s6 = ssub.s32 1, %s4
  %s7 = scalar_select 0, %s6, %s4
  $region1: #{cnn_decoder_forward.5} parent=0
    #allocation2 [shape = 'u8[65536]{0}', space=vmem, size = 0x10000, scoped, tag = 'input window, operand 1, single buffered']
    #allocation3 [shape = 's32[1]{0}', space=sflag, size = 0x4, scoped, tag = 'scoped memory for cnn_decoder_forward.5']
    #allocation4 [shape = 'u8[2048]{0}', space=vmem, size = 0x800, scoped, tag = 'input window, operand 2, single buffered']
    #allocation5 [shape = 's32[1]{0}', space=sflag, size = 0x4, scoped, tag = 'scoped memory for cnn_decoder_forward.5']
    %8 = vsyncpa [#allocation3], 0
    %9 = vsyncpa [#allocation5], 0
    // Predicated region
    $region2: #{cnn_decoder_forward.5} parent=1 // pred_check
      _
    $region3: #{cnn_decoder_forward.5} parent=1 // pred_check_branch
      %11 = sbr.rel (0) target = $region5
    $region4: #{cnn_decoder_forward.5} parent=1 // pred_region
      _
    $region5: #{cnn_decoder_forward.5} parent=1 // pred_fallthru
      _
    // Predicated region
    $region6: #{cnn_decoder_forward.5} parent=1 // pred_check
      _
    $region7: #{cnn_decoder_forward.5} parent=1 // pred_check_branch
      %13 = sbr.rel (0) target = $region9
    $region8: #{cnn_decoder_forward.5} parent=1 // pred_region
      %s15 = ssub.s32 2048, 2048
      %16 = vsyncadd [#allocation3], %s15
      %s17 = sshll.u32 [#allocation2], 4
      %s18 = int_to_ptr.vmem [resolvable:$true] %s17
      %23 = dma.hbm_to_vmem [thread:$0]  %s1, 2048, %s18, [#allocation3], 256, 256, 16
    $region9: #{cnn_decoder_forward.5} parent=1 // pred_fallthru
      _
    // Predicated region
    $region10: #{cnn_decoder_forward.5} parent=1 // pred_check
      _
    $region11: #{cnn_decoder_forward.5} parent=1 // pred_check_branch
      %25 = sbr.rel (0) target = $region13
    $region12: #{cnn_decoder_forward.5} parent=1 // pred_region
      %s27 = ssub.s32 64, 64
      %28 = vsyncadd [#allocation5], %s27
      %s30 = sshll.u32 [#allocation4], 4
      %s31 = int_to_ptr.vmem [resolvable:$true] %s30
      %33 = dma.hbm_to_vmem [thread:$0]  %s2, 64, %s31, [#allocation5]
    $region13: #{cnn_decoder_forward.5} parent=1 // pred_fallthru
      _
    // Predicated region
    $region14: #{cnn_decoder_forward.5} parent=1 // pred_check
      _
    $region15: #{cnn_decoder_forward.5} parent=1 // pred_check_branch
      %35 = sbr.rel (0) target = $region17
    $region16: #{cnn_decoder_forward.5} parent=1 // pred_region
      %36 = dma.done [#allocation3], 2048
    $region17: #{cnn_decoder_forward.5} parent=1 // pred_fallthru
      _
    // Predicated region
    $region18: #{cnn_decoder_forward.5} parent=1 // pred_check
      _
    $region19: #{cnn_decoder_forward.5} parent=1 // pred_check_branch
      %38 = sbr.rel (0) target = $region21
    $region20: #{cnn_decoder_forward.5} parent=1 // pred_region
      %39 = dma.done [#allocation5], 64
    $region21: #{cnn_decoder_forward.5} parent=1 // pred_fallthru
      _
    %v41 = vld [vmem:[%s0] sm:$0xf]
    %v42 = vld [vmem:[%s0 + $0x4] sm:$0xf]
    %v43 = vld [vmem:[#allocation2] sm:$0xff]
    %v44 = vld [vmem:[#allocation2 + $0x8] sm:$0xff]
    %v45 = vld [vmem:[#allocation2 + $0x10] sm:$0xff]
    %v46 = vld [vmem:[#allocation2 + $0x18] sm:$0xff]
    %v47 = vld [vmem:[#allocation2 + $0x20] sm:$0xff]
    %v48 = vld [vmem:[#allocation2 + $0x28] sm:$0xff]
    %v49 = vld [vmem:[#allocation2 + $0x30] sm:$0xff]
    %v50 = vld [vmem:[#allocation2 + $0x38] sm:$0xff]
    %v51 = vld [vmem:[#allocation2 + $0x40] sm:$0xff]
    %v52 = vld [vmem:[#allocation2 + $0x48] sm:$0xff]
    %v53 = vld [vmem:[#allocation2 + $0x50] sm:$0xff]
    %v54 = vld [vmem:[#allocation2 + $0x58] sm:$0xff]
    %v55 = vld [vmem:[#allocation2 + $0x60] sm:$0xff]
    %v56 = vld [vmem:[#allocation2 + $0x68] sm:$0xff]
    %v57 = vld [vmem:[#allocation2 + $0x70] sm:$0xff]
    %v58 = vld [vmem:[#allocation2 + $0x78] sm:$0xff]
    %v59 = vld [vmem:[#allocation4] sm:$0xf]
    %v61 = vlaneseq
    %v62 = vshrl.u32 %v61, 7
    %v63 = vsub.s32 0, %v62
    %v64 = vrot.slane %v59, %v63
    %v65 = vlaneseq
    %v66 = vshrl.u32 %v65, 7
    %v67 = vsub.s32 1, %v66
    %v68 = vrot.slane %v59, %v67
    %v69 = vlaneseq
    %v70 = vshrl.u32 %v69, 7
    %v71 = vsub.s32 2, %v70
    %v72 = vrot.slane %v59, %v71
    %v73 = vlaneseq
    %v74 = vshrl.u32 %v73, 7
    %v75 = vsub.s32 3, %v74
    %v76 = vrot.slane %v59, %v75
    %v83 = vunpack.c.l.b16 %v41
    %v84 = vunpack.c.l.b16 %v42
    %v85 = vpack.c.b16 %v84, %v83
    %v102 = vunpack.c.l.b16 %v43
    %v103 = vunpack.c.h.b16 %v43
    %v104 = vunpack.c.l.b16 %v44
    %v105 = vunpack.c.h.b16 %v44
    %v106 = vunpack.c.l.b16 %v45
    %v107 = vunpack.c.h.b16 %v45
    %v108 = vunpack.c.l.b16 %v46
    %v109 = vunpack.c.h.b16 %v46
    %v110 = vunpack.c.l.b16 %v47
    %v111 = vunpack.c.h.b16 %v47
    %v112 = vunpack.c.l.b16 %v48
    %v113 = vunpack.c.h.b16 %v48
    %v114 = vunpack.c.l.b16 %v49
    %v115 = vunpack.c.h.b16 %v49
    %v116 = vunpack.c.l.b16 %v50
    %v117 = vunpack.c.h.b16 %v50
    %v118 = vunpack.c.l.b16 %v51
    %v119 = vunpack.c.h.b16 %v51
    %v120 = vunpack.c.l.b16 %v52
    %v121 = vunpack.c.h.b16 %v52
    %v122 = vunpack.c.l.b16 %v53
    %v123 = vunpack.c.h.b16 %v53
    %v124 = vunpack.c.l.b16 %v54
    %v125 = vunpack.c.h.b16 %v54
    %v126 = vunpack.c.l.b16 %v55
    %v127 = vunpack.c.h.b16 %v55
    %v128 = vunpack.c.l.b16 %v56
    %v129 = vunpack.c.h.b16 %v56
    %v130 = vunpack.c.l.b16 %v57
    %v131 = vunpack.c.h.b16 %v57
    %v132 = vunpack.c.l.b16 %v58
    %v133 = vunpack.c.h.b16 %v58
    %v134 = vpack.c.b16 %v106, %v102
    %v135 = vpack.c.b16 %v107, %v103
    %v136 = vpack.c.b16 %v108, %v104
    %v137 = vpack.c.b16 %v109, %v105
    %v138 = vpack.c.b16 %v114, %v110
    %v139 = vpack.c.b16 %v115, %v111
    %v140 = vpack.c.b16 %v116, %v112
    %v141 = vpack.c.b16 %v117, %v113
    %v142 = vpack.c.b16 %v122, %v118
    %v143 = vpack.c.b16 %v123, %v119
    %v144 = vpack.c.b16 %v124, %v120
    %v145 = vpack.c.b16 %v125, %v121
    %v146 = vpack.c.b16 %v130, %v126
    %v147 = vpack.c.b16 %v131, %v127
    %v148 = vpack.c.b16 %v132, %v128
    %v149 = vpack.c.b16 %v133, %v129
    %vm166 = vcmask 523264
    %v168 = vsel %vm166, %v85, 0
    %170 = vmatprep.subr.bf16.mxu0 %v135
    %171 = vmatpush1.bf16.msra.mxu0 %v134
    %172 = vmatprep.subr.bf16.mxu0 %v139
    %173 = vmatpush1.bf16.msra.mxu0 %v138
    %174 = vmatprep.subr.bf16.mxu0 %v143
    %175 = vmatpush1.bf16.msra.mxu0 %v142
    %176 = vmatprep.subr.bf16.mxu0 %v147
    %177 = vmatpush1.bf16.msra.mxu0 %v146
    %178 = vmatprep.subr.bf16.mxu0 0
    %179 = vmatpush1.bf16.msra.mxu0 0
    %180 = vmatprep.subr.bf16.mxu0 0
    %181 = vmatpush1.bf16.msra.mxu0 0
    %182 = vmatprep.subr.bf16.mxu0 0
    %183 = vmatpush1.bf16.msra.mxu0 0
    %184 = vmatprep.subr.bf16.mxu0 0
    %185 = vmatpush1.bf16.msra.mxu0 0
    %186 = vmatprep.subr.bf16.mxu0 0
    %187 = vmatpush1.bf16.msra.mxu0 0
    %188 = vmatprep.subr.bf16.mxu0 0
    %189 = vmatpush1.bf16.msra.mxu0 0
    %190 = vmatprep.subr.bf16.mxu0 0
    %191 = vmatpush1.bf16.msra.mxu0 0
    %192 = vmatprep.subr.bf16.mxu0 0
    %193 = vmatpush1.bf16.msra.mxu0 0
    %194 = vmatprep.subr.bf16.mxu0 0
    %195 = vmatpush1.bf16.msra.mxu0 0
    %196 = vmatprep.subr.bf16.mxu0 0
    %197 = vmatpush1.bf16.msra.mxu0 0
    %198 = vmatprep.subr.bf16.mxu0 0
    %199 = vmatpush1.bf16.msra.mxu0 0
    %200 = vmatprep.subr.bf16.mxu0 0
    %201 = vmatpush1.bf16.msra.mxu0 0
    %202 = vmatprep.mubr.bf16.mxu0 0
    %203 = vmatmul.mubr.bf16.gmra.mrb[0].mxu0 %v168
    %v204 = vpop.f32.mrb[0].mxu0
    %v205 = vadd.f32 %v64, %v204
    %v206 = vpop.f32.mrb[0].mxu0
    %v207 = vadd.f32 %v68, %v206
    %v208 = vpop.f32.mrb[0].mxu0
    %v209 = vadd.f32 %v64, %v208
    %v210 = vpop.f32.mrb[0].mxu0
    %v211 = vadd.f32 %v68, %v210
    %212 = vdwg.mxu0
    %213 = vmatprep.subr.bf16.mxu0 %v137
    %214 = vmatpush1.bf16.msra.mxu0 %v136
    %215 = vmatprep.subr.bf16.mxu0 %v141
    %216 = vmatpush1.bf16.msra.mxu0 %v140
    %217 = vmatprep.subr.bf16.mxu0 %v145
    %218 = vmatpush1.bf16.msra.mxu0 %v144
    %219 = vmatprep.subr.bf16.mxu0 %v149
    %220 = vmatpush1.bf16.msra.mxu0 %v148
    %221 = vmatprep.subr.bf16.mxu0 0
    %222 = vmatpush1.bf16.msra.mxu0 0
    %223 = vmatprep.subr.bf16.mxu0 0
    %224 = vmatpush1.bf16.msra.mxu0 0
    %225 = vmatprep.subr.bf16.mxu0 0
    %226 = vmatpush1.bf16.msra.mxu0 0
    %227 = vmatprep.subr.bf16.mxu0 0
    %228 = vmatpush1.bf16.msra.mxu0 0
    %229 = vmatprep.subr.bf16.mxu0 0
    %230 = vmatpush1.bf16.msra.mxu0 0
    %231 = vmatprep.subr.bf16.mxu0 0
    %232 = vmatpush1.bf16.msra.mxu0 0
    %233 = vmatprep.subr.bf16.mxu0 0
    %234 = vmatpush1.bf16.msra.mxu0 0
    %235 = vmatprep.subr.bf16.mxu0 0
    %236 = vmatpush1.bf16.msra.mxu0 0
    %237 = vmatprep.subr.bf16.mxu0 0
    %238 = vmatpush1.bf16.msra.mxu0 0
    %239 = vmatprep.subr.bf16.mxu0 0
    %240 = vmatpush1.bf16.msra.mxu0 0
    %241 = vmatprep.subr.bf16.mxu0 0
    %242 = vmatpush1.bf16.msra.mxu0 0
    %243 = vmatprep.subr.bf16.mxu0 0
    %244 = vmatpush1.bf16.msra.mxu0 0
    %245 = vmatprep.mubr.bf16.mxu0 0
    %246 = vmatmul.mubr.bf16.gmra.mrb[0].mxu0 %v168
    %v247 = vpop.f32.mrb[0].mxu0
    %v248 = vadd.f32 %v72, %v247
    %v249 = vpop.f32.mrb[0].mxu0
    %v250 = vadd.f32 %v76, %v249
    %v251 = vpop.f32.mrb[0].mxu0
    %v252 = vadd.f32 %v72, %v251
    %v253 = vpop.f32.mrb[0].mxu0
    %v254 = vadd.f32 %v76, %v253
    %255 = vdwg.mxu0
    %v256 = vpack.c.bf16 %v209, %v205
    %v257 = vpack.c.bf16 %v211, %v207
    %v258 = vpack.c.bf16 %v252, %v248
    %v259 = vpack.c.bf16 %v254, %v250
    %v264 = vunpack.c.l.b16 %v256
    %v265 = vunpack.c.l.b16 %v257
    %v266 = vunpack.c.l.b16 %v258
    %v267 = vunpack.c.l.b16 %v259
    %v268 = vunpack.c.h.b16 %v256
    %v269 = vunpack.c.h.b16 %v257
    %v270 = vunpack.c.h.b16 %v258
    %v271 = vunpack.c.h.b16 %v259
    %v272 = vpack.c.b16 %v265, %v264
    %v273 = vpack.c.b16 %v267, %v266
    %v274 = vpack.c.b16 %v269, %v268
    %v275 = vpack.c.b16 %v271, %v270
    %280 = vst [vmem:[%s3] sm:$0xff] %v272
    %281 = vst [vmem:[%s3 + $0x8] sm:$0xff] %v273
    %282 = vst [vmem:[%s3 + $0x10] sm:$0xff] %v274
    %283 = vst [vmem:[%s3 + $0x18] sm:$0xff] %v275
    // Predicated region
    $region22: #{cnn_decoder_forward.5} parent=1 // pred_check
      _
    $region23: #{cnn_decoder_forward.5} parent=1 // pred_check_branch
      %285 = sbr.rel (0) target = $region25
    $region24: #{cnn_decoder_forward.5} parent=1 // pred_region
      _
    $region25: #{cnn_decoder_forward.5} parent=1 // pred_fallthru
      _
    // Predicated region
    $region26: #{cnn_decoder_forward.5} parent=1 // pred_check
      _
    $region27: #{cnn_decoder_forward.5} parent=1 // pred_check_branch
      %287 = sbr.rel (0) target = $region29
    $region28: #{cnn_decoder_forward.5} parent=1 // pred_region
      _
    $region29: #{cnn_decoder_forward.5} parent=1 // pred_fallthru
      _
    %288 = vsyncpa [#allocation3], 1
    %289 = vsyncpa [#allocation5], 1

// kernel: cnn_decoder_forward.6
$region0: #{cnn_decoder_forward.6}
  #allocation0 [shape = 'u32[]', space=smem, size = 0x4, offset = 0x4, fixed_abs, tag = 'smem constant byte address 0x4 - core index']
  #allocation1 [shape = 'u32[144,128]{1,0:T(1,128)}', space=vmem, size = 0x12000, scoped, tag = 'internal scratch']
  %s0 = inlined_call_operand.vmem [shape: bf16[4,64,128], index: 0, kind: input, shape index: {}]
  %s1 = inlined_call_operand.vmem [shape: bf16[4,128,128], index: 1, kind: input, shape index: {}]
  %s2 = inlined_call_operand.vmem [shape: f32[1,128], index: 2, kind: input, shape index: {}]
  %s3 = inlined_call_operand.vmem [shape: f32[1,128], index: 3, kind: input, shape index: {}]
  %s4 = inlined_call_operand.vmem [shape: bf16[4,64,128], index: 4, kind: output, shape index: {}]
  %s5 = sld [smem:[#allocation0]]
  $region49: #{cnn_decoder_forward.6} parent=0
    _
  %s7 = ssub.s32 1, %s5
  %s8 = scalar_select 0, %s7, %s5
  loop: start=0, step=1, limit=6
  $region2: #{cnn_decoder_forward.6} parent=0 // loop_pre_header
    _
  $region3: #{cnn_decoder_forward.6} parent=0 // loop_header
    %s10 = sphi 0, %s14
    %p11 = scmp.ge.s32.totalorder %s10, 6
    %s17 = sphi 0, %s29
    %s18 = sphi 0, %s25
    %s19 = sphi 0, %s17
    %s20 = sphi 0, %s18
    %s21 = sphi 0, %s19
    %s22 = sphi 0, %s20
    %s34 = sphi 0, %s36
    %s37 = sphi 0, %s34
    %s38 = sphi 0, %s37
    %s54 = sphi 0, %s38
    %s60 = sphi 0, %s62
    %s63 = sphi 0, %s60
    %s64 = sphi 0, %s63
    %s80 = sphi 0, %s64
    %s84 = sphi 0, %s84
    %s86 = sphi 0, %s84
    %s87 = sphi 0, %s86
    %s101 = sphi 0, %s87
    %s105 = sphi 0, %s105
    %s107 = sphi 0, %s105
    %s108 = sphi 0, %s107
    %s122 = sphi 0, %s108
    %s130 = sphi 0, %s132
    %s133 = sphi 0, %s130
    %s134 = sphi 0, %s133
    %s150 = sphi 0, %s134
  $region4: #{cnn_decoder_forward.6} parent=0 // loop_header_branch
    %13 = sbr.rel (%p11) target = $region8
  $region5: #{cnn_decoder_forward.6} parent=0 // loop_body
    %s15 = ssub.s32 %s10, 1
    %s16 = ssub.s32 %s10, 2
    %s23 = sadd.s32 1, %s18
    %p24 = scmp.ge.s32.totalorder %s23, 1
    %s25 = scalar_select %p24, 0, %s23
    %s26 = sadd.s32 1, %s17
    %s27 = scalar_select %p24, %s26, %s17
    %p28 = scmp.ge.s32.totalorder %s27, 4
    %s29 = scalar_select %p28, 0, %s27
    %s30 = ssub.s32 %s17, %s29
    %s31 = ssub.s32 %s18, %s25
    %s32 = sor.u32 %s30, %s31
    %p33 = scmp.eq.s32.totalorder %s32, 0
    %s35 = sadd.s32 %s34, 1
    %s36 = scalar_select %p33, %s34, %s35
    %p39 = pneg %p33
    %p40 = scmp.eq.s32.totalorder %s10, 3
    %p41 = por %p39, %p40
    %p42 = scmp.ne.s32.totalorder %s34, %s37
    %p43 = scmp.eq.s32.totalorder %s10, 0
    %p44 = por %p42, %p43
    %p45 = scmp.ne.s32.totalorder %s34, %s37
    %p46 = scmp.eq.s32.totalorder %s15, 3
    %p47 = por %p45, %p46
    %p48 = scmp.ne.s32.totalorder %s37, %s38
    %p49 = scmp.eq.s32.totalorder %s15, 0
    %p50 = por %p48, %p49
    %p51 = scmp.ne.s32.totalorder %s37, %s38
    %p52 = scmp.eq.s32.totalorder %s16, 3
    %p53 = por %p51, %p52
    %p55 = scmp.ne.s32.totalorder %s38, %s54
    %p56 = scmp.eq.s32.totalorder %s16, 0
    %p57 = por %p55, %p56
    %s58 = ssub.s32 %s17, %s29
    %p59 = scmp.eq.s32.totalorder %s58, 0
    %s61 = sadd.s32 %s60, 1
    %s62 = scalar_select %p59, %s60, %s61
    %p65 = pneg %p59
    %p66 = scmp.eq.s32.totalorder %s10, 3
    %p67 = por %p65, %p66
    %p68 = scmp.ne.s32.totalorder %s60, %s63
    %p69 = scmp.eq.s32.totalorder %s10, 0
    %p70 = por %p68, %p69
    %p71 = scmp.ne.s32.totalorder %s60, %s63
    %p72 = scmp.eq.s32.totalorder %s15, 3
    %p73 = por %p71, %p72
    %p74 = scmp.ne.s32.totalorder %s63, %s64
    %p75 = scmp.eq.s32.totalorder %s15, 0
    %p76 = por %p74, %p75
    %p77 = scmp.ne.s32.totalorder %s63, %s64
    %p78 = scmp.eq.s32.totalorder %s16, 3
    %p79 = por %p77, %p78
    %p81 = scmp.ne.s32.totalorder %s64, %s80
    %p82 = scmp.eq.s32.totalorder %s16, 0
    %p83 = por %p81, %p82
    %s85 = sadd.s32 %s84, 1
    %p88 = scmp.eq.s32.totalorder %s10, 3
    %p89 = scmp.ne.s32.totalorder %s84, %s86
    %p90 = scmp.eq.s32.totalorder %s10, 0
    %p91 = por %p89, %p90
    %p92 = scmp.ne.s32.totalorder %s84, %s86
    %p93 = scmp.eq.s32.totalorder %s15, 3
    %p94 = por %p92, %p93
    %p95 = scmp.ne.s32.totalorder %s86, %s87
    %p96 = scmp.eq.s32.totalorder %s15, 0
    %p97 = por %p95, %p96
    %p98 = scmp.ne.s32.totalorder %s86, %s87
    %p99 = scmp.eq.s32.totalorder %s16, 3
    %p100 = por %p98, %p99
    %p102 = scmp.ne.s32.totalorder %s87, %s101
    %p103 = scmp.eq.s32.totalorder %s16, 0
    %p104 = por %p102, %p103
    %s106 = sadd.s32 %s105, 1
    %p109 = scmp.eq.s32.totalorder %s10, 3
    %p110 = scmp.ne.s32.totalorder %s105, %s107
    %p111 = scmp.eq.s32.totalorder %s10, 0
    %p112 = por %p110, %p111
    %p113 = scmp.ne.s32.totalorder %s105, %s107
    %p114 = scmp.eq.s32.totalorder %s15, 3
    %p115 = por %p113, %p114
    %p116 = scmp.ne.s32.totalorder %s107, %s108
    %p117 = scmp.eq.s32.totalorder %s15, 0
    %p118 = por %p116, %p117
    %p119 = scmp.ne.s32.totalorder %s107, %s108
    %p120 = scmp.eq.s32.totalorder %s16, 3
    %p121 = por %p119, %p120
    %p123 = scmp.ne.s32.totalorder %s108, %s122
    %p124 = scmp.eq.s32.totalorder %s16, 0
    %p125 = por %p123, %p124
    %s126 = ssub.s32 %s17, %s29
    %s127 = ssub.s32 %s18, %s25
    %s128 = sor.u32 %s126, %s127
    %p129 = scmp.eq.s32.totalorder %s128, 0
    %s131 = sadd.s32 %s130, 1
    %s132 = scalar_select %p129, %s130, %s131
    %p135 = pneg %p129
    %p136 = scmp.eq.s32.totalorder %s10, 3
    %p137 = por %p135, %p136
    %p138 = scmp.ne.s32.totalorder %s130, %s133
    %p139 = scmp.eq.s32.totalorder %s10, 0
    %p140 = por %p138, %p139
    %p141 = scmp.ne.s32.totalorder %s130, %s133
    %p142 = scmp.eq.s32.totalorder %s15, 3
    %p143 = por %p141, %p142
    %p144 = scmp.ne.s32.totalorder %s133, %s134
    %p145 = scmp.eq.s32.totalorder %s15, 0
    %p146 = por %p144, %p145
    %p147 = scmp.ne.s32.totalorder %s133, %s134
    %p148 = scmp.eq.s32.totalorder %s16, 3
    %p149 = por %p147, %p148
    %p151 = scmp.ne.s32.totalorder %s134, %s150
    %p152 = scmp.eq.s32.totalorder %s16, 0
    %p153 = por %p151, %p152
    %p154 = scmp.le.s32.totalorder 1, %s10
    %p155 = scmp.lt.s32.totalorder %s10, 5
    %p156 = pnand %p154, %p155
    %p157 = pneg %p156
    // Predicated region
    $region9: #{cnn_decoder_forward.6} parent=5 // pred_check
      _
    $region10: #{cnn_decoder_forward.6} parent=5 // pred_check_branch
      %159 = sbr.rel (%p156) target = $region12
    $region11: #{cnn_decoder_forward.6} parent=5 // pred_region
      %s160 = ssub.s32 %s10, 1
      // Predicated region
      $region13: #{cnn_decoder_forward.6} parent=11 // pred_check
        %p161 = pneg %p97
      $region14: #{cnn_decoder_forward.6} parent=11 // pred_check_branch
        %163 = sbr.rel (%p161) target = $region16
      $region15: #{cnn_decoder_forward.6} parent=11 // pred_region
        _
      $region16: #{cnn_decoder_forward.6} parent=11 // pred_fallthru
        _
      // Predicated region
      $region17: #{cnn_decoder_forward.6} parent=11 // pred_check
        %p164 = pneg %p118
      $region18: #{cnn_decoder_forward.6} parent=11 // pred_check_branch
        %166 = sbr.rel (%p164) target = $region20
      $region19: #{cnn_decoder_forward.6} parent=11 // pred_region
        _
      $region20: #{cnn_decoder_forward.6} parent=11 // pred_fallthru
        _
    $region12: #{cnn_decoder_forward.6} parent=5 // pred_fallthru
      _
    %p167 = scmp.lt.s32.totalorder %s10, 4
    // Predicated region
    $region21: #{cnn_decoder_forward.6} parent=5 // pred_check
      %p168 = pneg %p167
    $region22: #{cnn_decoder_forward.6} parent=5 // pred_check_branch
      %170 = sbr.rel (%p168) target = $region24
    $region23: #{cnn_decoder_forward.6} parent=5 // pred_region
      // Predicated region
      $region25: #{cnn_decoder_forward.6} parent=23 // pred_check
        %p171 = pneg %p44
      $region26: #{cnn_decoder_forward.6} parent=23 // pred_check_branch
        %173 = sbr.rel (%p171) target = $region28
      $region27: #{cnn_decoder_forward.6} parent=23 // pred_region
        %s174 = smul.u32 8, %s18
        %p175 = scmp.lt.s32.totalorder %s17, 3
        %s176 = scalar_select %p175, %s17, 3
        %p177 = scmp.lt.s32.totalorder %s174, 7
        %s178 = scalar_select %p177, %s174, 7
        %s179 = smul.addr %s176, 8
        %s180 = sadd.s32 %s178, %s179
        %s181 = smul.addr %s180, 4
        %s182 = scalar_lea.vmem %s0, %s181
        %s183 = smul.u32 8, %s18
      $region28: #{cnn_decoder_forward.6} parent=23 // pred_fallthru
        _
      // Predicated region
      $region29: #{cnn_decoder_forward.6} parent=23 // pred_check
        %p184 = pneg %p70
      $region30: #{cnn_decoder_forward.6} parent=23 // pred_check_branch
        %186 = sbr.rel (%p184) target = $region32
      $region31: #{cnn_decoder_forward.6} parent=23 // pred_region
        %p187 = scmp.lt.s32.totalorder %s17, 3
        %s188 = scalar_select %p187, %s17, 3
        %s189 = smul.addr %s188, 16
        %s190 = smul.addr %s189, 4
        %s191 = scalar_lea.vmem %s1, %s190
      $region32: #{cnn_decoder_forward.6} parent=23 // pred_fallthru
        _
    $region24: #{cnn_decoder_forward.6} parent=5 // pred_fallthru
      _
    %p192 = scmp.le.s32.totalorder 1, %s10
    %p193 = scmp.lt.s32.totalorder %s10, 5
    %p194 = pnand %p192, %p193
    %p195 = pneg %p194
    // Predicated region
    $region33: #{cnn_decoder_forward.6} parent=5 // pred_check
      _
    $region34: #{cnn_decoder_forward.6} parent=5 // pred_check_branch
      %197 = sbr.rel (%p194) target = $region36
    $region35: #{cnn_decoder_forward.6} parent=5 // pred_region
      %s198 = ssub.s32 %s10, 1
      %s199 = smul.u32 8, %s20
      %p200 = scmp.lt.s32.totalorder %s19, 3
      %s201 = scalar_select %p200, %s19, 3
      %p202 = scmp.lt.s32.totalorder %s199, 7
      %s203 = scalar_select %p202, %s199, 7
      %s204 = smul.addr %s201, 8
      %s205 = sadd.s32 %s203, %s204
      %s206 = smul.addr %s205, 4
      %s207 = scalar_lea.vmem %s0, %s206
      %p208 = pneg %p50
      %p209 = pneg %p47
      %p210 = scmp.lt.s32.totalorder %s19, 3
      %s211 = scalar_select %p210, %s19, 3
      %s212 = smul.addr %s211, 16
      %s213 = smul.addr %s212, 4
      %s214 = scalar_lea.vmem %s1, %s213
      %p215 = pneg %p76
      %p216 = pneg %p73
      %p217 = pneg %p97
      %p218 = pneg %p94
      %p219 = pneg %p118
      %p220 = pneg %p115
      %p221 = pneg %p146
      %p222 = pneg %p143
      %s223 = smul.u32 8, %s20
      %p224 = scmp.lt.s32.totalorder %s19, 3
      %s225 = scalar_select %p224, %s19, 3
      %p226 = scmp.lt.s32.totalorder %s223, 7
      %s227 = scalar_select %p226, %s223, 7
      %s228 = smul.addr %s225, 8
      %s229 = sadd.s32 %s227, %s228
      %s230 = smul.addr %s229, 4
      %s231 = scalar_lea.vmem %s4, %s230
      %s232 = smul.u32 8, %s20
      %p233 = scmp.lt.s32.totalorder %s19, 3
      %s234 = scalar_select %p233, %s19, 3
      %p235 = scmp.lt.s32.totalorder %s232, 7
      %s236 = scalar_select %p235, %s232, 7
      %s237 = smul.addr %s234, 8
      %s238 = sadd.s32 %s236, %s237
      %s239 = smul.addr %s238, 4
      %s240 = scalar_lea.vmem %s0, %s239
      %s241 = smul.u32 8, %s20
      %p242 = scmp.lt.s32.totalorder %s19, 3
      %s243 = scalar_select %p242, %s19, 3
      %s244 = smul.addr %s243, 16
      %s245 = smul.addr %s244, 4
      %s246 = scalar_lea.vmem %s1, %s245
      %s247 = smul.u32 8, %s20
      %p248 = scmp.lt.s32.totalorder %s19, 3
      %s249 = scalar_select %p248, %s19, 3
      %p250 = scmp.lt.s32.totalorder %s247, 7
      %s251 = scalar_select %p250, %s247, 7
      %s252 = smul.addr %s249, 8
      %s253 = sadd.s32 %s251, %s252
      %s254 = smul.addr %s253, 4
      %s255 = scalar_lea.vmem %s4, %s254
      %s256 = smul.u32 8, %s20
      %v258 = vld [vmem:[%s240] sm:$0xf]
      %v259 = vld [vmem:[%s240 + $0x4] sm:$0xf]
      %v260 = vld [vmem:[%s240 + $0x8] sm:$0xf]
      %v261 = vld [vmem:[%s240 + $0xc] sm:$0xf]
      %v262 = vld [vmem:[%s240 + $0x10] sm:$0xf]
      %v263 = vld [vmem:[%s240 + $0x14] sm:$0xf]
      %v264 = vld [vmem:[%s240 + $0x18] sm:$0xf]
      %v265 = vld [vmem:[%s240 + $0x1c] sm:$0xf]
      %v266 = vld [vmem:[%s246] sm:$0xf]
      %v267 = vld [vmem:[%s246 + $0x4] sm:$0xf]
      %v268 = vld [vmem:[%s246 + $0x8] sm:$0xf]
      %v269 = vld [vmem:[%s246 + $0xc] sm:$0xf]
      %v270 = vld [vmem:[%s246 + $0x10] sm:$0xf]
      %v271 = vld [vmem:[%s246 + $0x14] sm:$0xf]
      %v272 = vld [vmem:[%s246 + $0x18] sm:$0xf]
      %v273 = vld [vmem:[%s246 + $0x1c] sm:$0xf]
      %v274 = vld [vmem:[%s246 + $0x20] sm:$0xf]
      %v275 = vld [vmem:[%s246 + $0x24] sm:$0xf]
      %v276 = vld [vmem:[%s246 + $0x28] sm:$0xf]
      %v277 = vld [vmem:[%s246 + $0x2c] sm:$0xf]
      %v278 = vld [vmem:[%s246 + $0x30] sm:$0xf]
      %v279 = vld [vmem:[%s246 + $0x34] sm:$0xf]
      %v280 = vld [vmem:[%s246 + $0x38] sm:$0xf]
      %v281 = vld [vmem:[%s246 + $0x3c] sm:$0xf]
      %v290 = vunpack.c.l.b16 %v258
      %v291 = vunpack.c.l.b16 %v259
      %v292 = vunpack.c.l.b16 %v260
      %v293 = vunpack.c.l.b16 %v261
      %v294 = vunpack.c.l.b16 %v262
      %v295 = vunpack.c.l.b16 %v263
      %v296 = vunpack.c.l.b16 %v264
      %v297 = vunpack.c.l.b16 %v265
      %v298 = vpack.c.b16 %v291, %v290
      %v299 = vpack.c.b16 %v293, %v292
      %v300 = vpack.c.b16 %v295, %v294
      %v301 = vpack.c.b16 %v297, %v296
      %v322 = vunpack.c.l.b16 %v266
      %v323 = vunpack.c.l.b16 %v267
      %v324 = vunpack.c.l.b16 %v268
      %v325 = vunpack.c.l.b16 %v269
      %v326 = vunpack.c.l.b16 %v270
      %v327 = vunpack.c.l.b16 %v271
      %v328 = vunpack.c.l.b16 %v272
      %v329 = vunpack.c.l.b16 %v273
      %v330 = vunpack.c.l.b16 %v274
      %v331 = vunpack.c.l.b16 %v275
      %v332 = vunpack.c.l.b16 %v276
      %v333 = vunpack.c.l.b16 %v277
      %v334 = vunpack.c.l.b16 %v278
      %v335 = vunpack.c.l.b16 %v279
      %v336 = vunpack.c.l.b16 %v280
      %v337 = vunpack.c.l.b16 %v281
      %v338 = vpack.c.b16 %v323, %v322
      %v339 = vpack.c.b16 %v325, %v324
      %v340 = vpack.c.b16 %v327, %v326
      %v341 = vpack.c.b16 %v329, %v328
      %v342 = vpack.c.b16 %v331, %v330
      %v343 = vpack.c.b16 %v333, %v332
      %v344 = vpack.c.b16 %v335, %v334
      %v345 = vpack.c.b16 %v337, %v336
      %354 = vmatprep.subr.bf16.mxu0 0
      %355 = vmatpush1.bf16.msra.mxu0 %v338
      %356 = vmatprep.subr.bf16.mxu0 0
      %357 = vmatpush1.bf16.msra.mxu0 %v339
      %358 = vmatprep.subr.bf16.mxu0 0
      %359 = vmatpush1.bf16.msra.mxu0 %v340
      %360 = vmatprep.subr.bf16.mxu0 0
      %361 = vmatpush1.bf16.msra.mxu0 %v341
      %362 = vmatprep.subr.bf16.mxu0 0
      %363 = vmatpush1.bf16.msra.mxu0 %v342
      %364 = vmatprep.subr.bf16.mxu0 0
      %365 = vmatpush1.bf16.msra.mxu0 %v343
      %366 = vmatprep.subr.bf16.mxu0 0
      %367 = vmatpush1.bf16.msra.mxu0 %v344
      %368 = vmatprep.subr.bf16.mxu0 0
      %369 = vmatpush1.bf16.msra.mxu0 %v345
      %370 = vmatprep.subr.bf16.mxu0 0
      %371 = vmatpush1.bf16.msra.mxu0 0
      %372 = vmatprep.subr.bf16.mxu0 0
      %373 = vmatpush1.bf16.msra.mxu0 0
      %374 = vmatprep.subr.bf16.mxu0 0
      %375 = vmatpush1.bf16.msra.mxu0 0
      %376 = vmatprep.subr.bf16.mxu0 0
      %377 = vmatpush1.bf16.msra.mxu0 0
      %378 = vmatprep.subr.bf16.mxu0 0
      %379 = vmatpush1.bf16.msra.mxu0 0
      %380 = vmatprep.subr.bf16.mxu0 0
      %381 = vmatpush1.bf16.msra.mxu0 0
      %382 = vmatprep.subr.bf16.mxu0 0
      %383 = vmatpush1.bf16.msra.mxu0 0
      %384 = vmatprep.subr.bf16.mxu0 0
      %385 = vmatpush1.bf16.msra.mxu0 0
      %386 = vmatprep.mubr.bf16.mxu0 0
      %387 = vmatmul.mubr.bf16.gmra.mrb[0].mxu0 %v298
      %v388 = vpop.f32.mrb[0].mxu0
      %v389 = vadd.f32 0.0, %v388
      %v390 = vpop.f32.mrb[0].mxu0
      %v391 = vpop.f32.mrb[0].mxu0
      %v392 = vadd.f32 0.0, %v391
      %v393 = vpop.f32.mrb[0].mxu0
      %394 = vmatprep.mubr.bf16.mxu0 0
      %395 = vmatmul.mubr.bf16.gmra.mrb[0].mxu0 %v299
      %v396 = vpop.f32.mrb[0].mxu0
      %v397 = vadd.f32 0.0, %v396
      %v398 = vpop.f32.mrb[0].mxu0
      %v399 = vpop.f32.mrb[0].mxu0
      %v400 = vadd.f32 0.0, %v399
      %v401 = vpop.f32.mrb[0].mxu0
      %402 = vmatprep.mubr.bf16.mxu0 0
      %403 = vmatmul.mubr.bf16.gmra.mrb[0].mxu0 %v300
      %v404 = vpop.f32.mrb[0].mxu0
      %v405 = vadd.f32 0.0, %v404
      %v406 = vpop.f32.mrb[0].mxu0
      %v407 = vpop.f32.mrb[0].mxu0
      %v408 = vadd.f32 0.0, %v407
      %v409 = vpop.f32.mrb[0].mxu0
      %410 = vmatprep.mubr.bf16.mxu0 0
      %411 = vmatmul.mubr.bf16.gmra.mrb[0].mxu0 %v301
      %v412 = vpop.f32.mrb[0].mxu0
      %v413 = vadd.f32 0.0, %v412
      %v414 = vpop.f32.mrb[0].mxu0
      %v415 = vpop.f32.mrb[0].mxu0
      %v416 = vadd.f32 0.0, %v415
      %v417 = vpop.f32.mrb[0].mxu0
      %418 = vdwg.mxu0
      %419 = vadd.xlane.f32.xlu0 %v389
      %v420 = vpop.xlane.xlu0 %419
      %421 = vadd.xlane.f32.xlu0 %v392
      %v422 = vpop.xlane.xlu0 %421
      %423 = vadd.xlane.f32.xlu0 %v397
      %v424 = vpop.xlane.xlu0 %423
      %425 = vadd.xlane.f32.xlu0 %v400
      %v426 = vpop.xlane.xlu0 %425
      %427 = vadd.xlane.f32.xlu0 %v405
      %v428 = vpop.xlane.xlu0 %427
      %429 = vadd.xlane.f32.xlu0 %v408
      %v430 = vpop.xlane.xlu0 %429
      %431 = vadd.xlane.f32.xlu0 %v413
      %v432 = vpop.xlane.xlu0 %431
      %433 = vadd.xlane.f32.xlu0 %v416
      %v434 = vpop.xlane.xlu0 %433
      %v435 = vmul.f32 %v389, %v389
      %v436 = vmul.f32 %v392, %v392
      %v437 = vmul.f32 %v397, %v397
      %v438 = vmul.f32 %v400, %v400
      %v439 = vmul.f32 %v405, %v405
      %v440 = vmul.f32 %v408, %v408
      %v441 = vmul.f32 %v413, %v413
      %v442 = vmul.f32 %v416, %v416
      %443 = vadd.xlane.f32.xlu0 %v435
      %v444 = vpop.xlane.xlu0 %443
      %445 = vadd.xlane.f32.xlu0 %v436
      %v446 = vpop.xlane.xlu0 %445
      %447 = vadd.xlane.f32.xlu0 %v437
      %v448 = vpop.xlane.xlu0 %447
      %449 = vadd.xlane.f32.xlu0 %v438
      %v450 = vpop.xlane.xlu0 %449
      %451 = vadd.xlane.f32.xlu0 %v439
      %v452 = vpop.xlane.xlu0 %451
      %453 = vadd.xlane.f32.xlu0 %v440
      %v454 = vpop.xlane.xlu0 %453
      %455 = vadd.xlane.f32.xlu0 %v441
      %v456 = vpop.xlane.xlu0 %455
      %457 = vadd.xlane.f32.xlu0 %v442
      %v458 = vpop.xlane.xlu0 %457
      %v459 = vmul.f32 %v420, 0.0625
      %v460 = vmul.f32 %v422, 0.0625
      %v461 = vmul.f32 %v424, 0.0625
      %v462 = vmul.f32 %v426, 0.0625
      %v463 = vmul.f32 %v428, 0.0625
      %v464 = vmul.f32 %v430, 0.0625
      %v465 = vmul.f32 %v432, 0.0625
      %v466 = vmul.f32 %v434, 0.0625
      %v467 = vmul.f32 %v444, 0.0625
      %v468 = vmul.f32 %v446, 0.0625
      %v469 = vmul.f32 %v448, 0.0625
      %v470 = vmul.f32 %v450, 0.0625
      %v471 = vmul.f32 %v452, 0.0625
      %v472 = vmul.f32 %v454, 0.0625
      %v473 = vmul.f32 %v456, 0.0625
      %v474 = vmul.f32 %v458, 0.0625
      %v475 = vmul.f32 %v459, %v459
      %v476 = vmul.f32 %v460, %v460
      %v477 = vmul.f32 %v461, %v461
      %v478 = vmul.f32 %v462, %v462
      %v479 = vmul.f32 %v463, %v463
      %v480 = vmul.f32 %v464, %v464
      %v481 = vmul.f32 %v465, %v465
      %v482 = vmul.f32 %v466, %v466
      %v483 = vsub.f32 %v467, %v475
      %v484 = vsub.f32 %v468, %v476
      %v485 = vsub.f32 %v469, %v477
      %v486 = vsub.f32 %v470, %v478
      %v487 = vsub.f32 %v471, %v479
      %v488 = vsub.f32 %v472, %v480
      %v489 = vsub.f32 %v473, %v481
      %v490 = vsub.f32 %v474, %v482
      %v491 = vsub.f32 %v389, %v459
      %v492 = vsub.f32 %v392, %v460
      %v493 = vsub.f32 %v397, %v461
      %v494 = vsub.f32 %v400, %v462
      %v495 = vsub.f32 %v405, %v463
      %v496 = vsub.f32 %v408, %v464
      %v497 = vsub.f32 %v413, %v465
      %v498 = vsub.f32 %v416, %v466
      %v499 = vadd.f32 %v483, 0.001
      %v500 = vadd.f32 %v484, 0.001
      %v501 = vadd.f32 %v485, 0.001
      %v502 = vadd.f32 %v486, 0.001
      %v503 = vadd.f32 %v487, 0.001
      %v504 = vadd.f32 %v488, 0.001
      %v505 = vadd.f32 %v489, 0.001
      %v506 = vadd.f32 %v490, 0.001
      %v507 = vrsqrt.pop %v499
      %v508 = vrsqrt.pop %v500
      %v509 = vrsqrt.pop %v501
      %v510 = vrsqrt.pop %v502
      %v511 = vrsqrt.pop %v503
      %v512 = vrsqrt.pop %v504
      %v513 = vrsqrt.pop %v505
      %v514 = vrsqrt.pop %v506
      %v515 = vmul.f32 %v491, %v507
      %v516 = vmul.f32 %v492, %v508
      %v517 = vmul.f32 %v493, %v509
      %v518 = vmul.f32 %v494, %v510
      %v519 = vmul.f32 %v495, %v511
      %v520 = vmul.f32 %v496, %v512
      %v521 = vmul.f32 %v497, %v513
      %v522 = vmul.f32 %v498, %v514
      %v523 = vld [vmem:[%s2] sm:$0x1]
      %v525 = vlaneseq
      %v526 = vshrl.u32 %v525, 7
      %v527 = vsub.s32 0, %v526
      %v528 = vrot.slane %v523, %v527
      %v530 = vmul.f32 %v515, %v528
      %v531 = vmul.f32 %v516, %v528
      %v532 = vmul.f32 %v517, %v528
      %v533 = vmul.f32 %v518, %v528
      %v534 = vmul.f32 %v519, %v528
      %v535 = vmul.f32 %v520, %v528
      %v536 = vmul.f32 %v521, %v528
      %v537 = vmul.f32 %v522, %v528
      %v538 = vld [vmem:[%s3] sm:$0x1]
      %v540 = vlaneseq
      %v541 = vshrl.u32 %v540, 7
      %v542 = vsub.s32 0, %v541
      %v543 = vrot.slane %v538, %v542
      %v545 = vadd.f32 %v530, %v543
      %v546 = vadd.f32 %v531, %v543
      %v547 = vadd.f32 %v532, %v543
      %v548 = vadd.f32 %v533, %v543
      %v549 = vadd.f32 %v534, %v543
      %v550 = vadd.f32 %v535, %v543
      %v551 = vadd.f32 %v536, %v543
      %v552 = vadd.f32 %v537, %v543
      %v553 = vxor.u32 %v545, 2147483648
      %v554 = vxor.u32 %v546, 2147483648
      %v555 = vxor.u32 %v547, 2147483648
      %v556 = vxor.u32 %v548, 2147483648
      %v557 = vxor.u32 %v549, 2147483648
      %v558 = vxor.u32 %v550, 2147483648
      %v559 = vxor.u32 %v551, 2147483648
      %v560 = vxor.u32 %v552, 2147483648
      %v561 = vmul.f32 %v553, 1.442695
      %v562 = vpow.pop %v561
      %v563 = vmul.f32 %v554, 1.442695
      %v564 = vpow.pop %v563
      %v565 = vmul.f32 %v555, 1.442695
      %v566 = vpow.pop %v565
      %v567 = vmul.f32 %v556, 1.442695
      %v568 = vpow.pop %v567
      %v569 = vmul.f32 %v557, 1.442695
      %v570 = vpow.pop %v569
      %v571 = vmul.f32 %v558, 1.442695
      %v572 = vpow.pop %v571
      %v573 = vmul.f32 %v559, 1.442695
      %v574 = vpow.pop %v573
      %v575 = vmul.f32 %v560, 1.442695
      %v576 = vpow.pop %v575
      %v577 = vadd.f32 %v562, 1.0
      %v578 = vadd.f32 %v564, 1.0
      %v579 = vadd.f32 %v566, 1.0
      %v580 = vadd.f32 %v568, 1.0
      %v581 = vadd.f32 %v570, 1.0
      %v582 = vadd.f32 %v572, 1.0
      %v583 = vadd.f32 %v574, 1.0
      %v584 = vadd.f32 %v576, 1.0
      %v585 = vrcp.pop %v577
      %v586 = vmul.f32 1.0, %v585
      %v587 = vrcp.pop %v578
      %v588 = vmul.f32 1.0, %v587
      %v589 = vrcp.pop %v579
      %v590 = vmul.f32 1.0, %v589
      %v591 = vrcp.pop %v580
      %v592 = vmul.f32 1.0, %v591
      %v593 = vrcp.pop %v581
      %v594 = vmul.f32 1.0, %v593
      %v595 = vrcp.pop %v582
      %v596 = vmul.f32 1.0, %v595
      %v597 = vrcp.pop %v583
      %v598 = vmul.f32 1.0, %v597
      %v599 = vrcp.pop %v584
      %v600 = vmul.f32 1.0, %v599
      %v601 = vmul.f32 %v545, %v586
      %v602 = vmul.f32 %v546, %v588
      %v603 = vmul.f32 %v547, %v590
      %v604 = vmul.f32 %v548, %v592
      %v605 = vmul.f32 %v549, %v594
      %v606 = vmul.f32 %v550, %v596
      %v607 = vmul.f32 %v551, %v598
      %v608 = vmul.f32 %v552, %v600
      %v609 = vpack.c.bf16 %v602, %v601
      %v610 = vpack.c.bf16 %v604, %v603
      %v611 = vpack.c.bf16 %v606, %v605
      %v612 = vpack.c.bf16 %v608, %v607
      %v617 = vunpack.c.l.b16 %v609
      %v618 = vunpack.c.h.b16 %v609
      %v619 = vunpack.c.l.b16 %v610
      %v620 = vunpack.c.h.b16 %v610
      %v621 = vunpack.c.l.b16 %v611
      %v622 = vunpack.c.h.b16 %v611
      %v623 = vunpack.c.l.b16 %v612
      %v624 = vunpack.c.h.b16 %v612
      %v625 = vpack.c.b16 %v617, %v617
      %v626 = vpack.c.b16 %v618, %v618
      %v627 = vpack.c.b16 %v619, %v619
      %v628 = vpack.c.b16 %v620, %v620
      %v629 = vpack.c.b16 %v621, %v621
      %v630 = vpack.c.b16 %v622, %v622
      %v631 = vpack.c.b16 %v623, %v623
      %v632 = vpack.c.b16 %v624, %v624
      %641 = vst [vmem:[%s255] sm:$0xf] %v625
      %642 = vst [vmem:[%s255 + $0x4] sm:$0xf] %v626
      %643 = vst [vmem:[%s255 + $0x8] sm:$0xf] %v627
      %644 = vst [vmem:[%s255 + $0xc] sm:$0xf] %v628
      %645 = vst [vmem:[%s255 + $0x10] sm:$0xf] %v629
      %646 = vst [vmem:[%s255 + $0x14] sm:$0xf] %v630
      %647 = vst [vmem:[%s255 + $0x18] sm:$0xf] %v631
      %648 = vst [vmem:[%s255 + $0x1c] sm:$0xf] %v632
      %s649 = smul.u32 8, %s20
      %p650 = scmp.lt.s32.totalorder %s19, 3
      %s651 = scalar_select %p650, %s19, 3
      %p652 = scmp.lt.s32.totalorder %s649, 7
      %s653 = scalar_select %p652, %s649, 7
      %s654 = smul.addr %s651, 8
      %s655 = sadd.s32 %s653, %s654
      %s656 = smul.addr %s655, 4
      %s657 = scalar_lea.vmem %s4, %s656
      // Predicated region
      $region37: #{cnn_decoder_forward.6} parent=35 // pred_check
        %p658 = pneg %p143
      $region38: #{cnn_decoder_forward.6} parent=35 // pred_check_branch
        %660 = sbr.rel (%p658) target = $region40
      $region39: #{cnn_decoder_forward.6} parent=35 // pred_region
        %s661 = smul.u32 8, %s20
      $region40: #{cnn_decoder_forward.6} parent=35 // pred_fallthru
        _
    $region36: #{cnn_decoder_forward.6} parent=5 // pred_fallthru
      _
    %p662 = scmp.le.s32.totalorder 2, %s10
    // Predicated region
    $region41: #{cnn_decoder_forward.6} parent=5 // pred_check
      %p663 = pneg %p662
    $region42: #{cnn_decoder_forward.6} parent=5 // pred_check_branch
      %665 = sbr.rel (%p663) target = $region44
    $region43: #{cnn_decoder_forward.6} parent=5 // pred_region
      %s666 = ssub.s32 %s10, 2
      // Predicated region
      $region45: #{cnn_decoder_forward.6} parent=43 // pred_check
        %p667 = pneg %p149
      $region46: #{cnn_decoder_forward.6} parent=43 // pred_check_branch
        %669 = sbr.rel (%p667) target = $region48
      $region47: #{cnn_decoder_forward.6} parent=43 // pred_region
        %s670 = smul.u32 8, %s22
        %p671 = scmp.lt.s32.totalorder %s21, 3
        %s672 = scalar_select %p671, %s21, 3
        %p673 = scmp.lt.s32.totalorder %s670, 7
        %s674 = scalar_select %p673, %s670, 7
        %s675 = smul.addr %s672, 8
        %s676 = sadd.s32 %s674, %s675
        %s677 = smul.addr %s676, 4
        %s678 = scalar_lea.vmem %s4, %s677
      $region48: #{cnn_decoder_forward.6} parent=43 // pred_fallthru
        _
    $region44: #{cnn_decoder_forward.6} parent=5 // pred_fallthru
      _
  $region6: #{cnn_decoder_forward.6} parent=0 // loop_footer
    %s14 = sadd.s32 1, %s10
  $region7: #{cnn_decoder_forward.6} parent=0 // loop_footer_branch
    %9 = sbr.rel target = $region3
  $region8: #{cnn_decoder_forward.6} parent=0 // loop_exit
    _

// kernel: cnn_decoder_forward.7
$region0: #{cnn_decoder_forward.7}
  #allocation0 [shape = 'u32[]', space=smem, size = 0x4, offset = 0x4, fixed_abs, tag = 'smem constant byte address 0x4 - core index']
  #allocation1 [shape = 'u32[144,128]{1,0:T(1,128)}', space=vmem, size = 0x12000, scoped, tag = 'internal scratch']
  %s0 = inlined_call_operand.vmem [shape: bf16[4,256,64], index: 0, kind: input, shape index: {}]
  %s1 = inlined_call_operand.vmem [shape: bf16[4,64,128], index: 1, kind: input, shape index: {}]
  %s2 = inlined_call_operand.vmem [shape: f32[1,128], index: 2, kind: input, shape index: {}]
  %s3 = inlined_call_operand.vmem [shape: f32[1,128], index: 3, kind: input, shape index: {}]
  %s4 = inlined_call_operand.vmem [shape: bf16[4,256,128], index: 4, kind: output, shape index: {}]
  %s5 = sld [smem:[#allocation0]]
  $region49: #{cnn_decoder_forward.7} parent=0
    _
  %s7 = ssub.s32 1, %s5
  %s8 = scalar_select 0, %s7, %s5
  loop: start=0, step=1, limit=6
  $region2: #{cnn_decoder_forward.7} parent=0 // loop_pre_header
    _
  $region3: #{cnn_decoder_forward.7} parent=0 // loop_header
    %s10 = sphi 0, %s14
    %p11 = scmp.ge.s32.totalorder %s10, 6
    %s17 = sphi 0, %s29
    %s18 = sphi 0, %s25
    %s19 = sphi 0, %s17
    %s20 = sphi 0, %s18
    %s21 = sphi 0, %s19
    %s22 = sphi 0, %s20
    %s34 = sphi 0, %s36
    %s37 = sphi 0, %s34
    %s38 = sphi 0, %s37
    %s54 = sphi 0, %s38
    %s60 = sphi 0, %s62
    %s63 = sphi 0, %s60
    %s64 = sphi 0, %s63
    %s80 = sphi 0, %s64
    %s84 = sphi 0, %s84
    %s86 = sphi 0, %s84
    %s87 = sphi 0, %s86
    %s101 = sphi 0, %s87
    %s105 = sphi 0, %s105
    %s107 = sphi 0, %s105
    %s108 = sphi 0, %s107
    %s122 = sphi 0, %s108
    %s130 = sphi 0, %s132
    %s133 = sphi 0, %s130
    %s134 = sphi 0, %s133
    %s150 = sphi 0, %s134
  $region4: #{cnn_decoder_forward.7} parent=0 // loop_header_branch
    %13 = sbr.rel (%p11) target = $region8
  $region5: #{cnn_decoder_forward.7} parent=0 // loop_body
    %s15 = ssub.s32 %s10, 1
    %s16 = ssub.s32 %s10, 2
    %s23 = sadd.s32 1, %s18
    %p24 = scmp.ge.s32.totalorder %s23, 1
    %s25 = scalar_select %p24, 0, %s23
    %s26 = sadd.s32 1, %s17
    %s27 = scalar_select %p24, %s26, %s17
    %p28 = scmp.ge.s32.totalorder %s27, 4
    %s29 = scalar_select %p28, 0, %s27
    %s30 = ssub.s32 %s17, %s29
    %s31 = ssub.s32 %s18, %s25
    %s32 = sor.u32 %s30, %s31
    %p33 = scmp.eq.s32.totalorder %s32, 0
    %s35 = sadd.s32 %s34, 1
    %s36 = scalar_select %p33, %s34, %s35
    %p39 = pneg %p33
    %p40 = scmp.eq.s32.totalorder %s10, 3
    %p41 = por %p39, %p40
    %p42 = scmp.ne.s32.totalorder %s34, %s37
    %p43 = scmp.eq.s32.totalorder %s10, 0
    %p44 = por %p42, %p43
    %p45 = scmp.ne.s32.totalorder %s34, %s37
    %p46 = scmp.eq.s32.totalorder %s15, 3
    %p47 = por %p45, %p46
    %p48 = scmp.ne.s32.totalorder %s37, %s38
    %p49 = scmp.eq.s32.totalorder %s15, 0
    %p50 = por %p48, %p49
    %p51 = scmp.ne.s32.totalorder %s37, %s38
    %p52 = scmp.eq.s32.totalorder %s16, 3
    %p53 = por %p51, %p52
    %p55 = scmp.ne.s32.totalorder %s38, %s54
    %p56 = scmp.eq.s32.totalorder %s16, 0
    %p57 = por %p55, %p56
    %s58 = ssub.s32 %s17, %s29
    %p59 = scmp.eq.s32.totalorder %s58, 0
    %s61 = sadd.s32 %s60, 1
    %s62 = scalar_select %p59, %s60, %s61
    %p65 = pneg %p59
    %p66 = scmp.eq.s32.totalorder %s10, 3
    %p67 = por %p65, %p66
    %p68 = scmp.ne.s32.totalorder %s60, %s63
    %p69 = scmp.eq.s32.totalorder %s10, 0
    %p70 = por %p68, %p69
    %p71 = scmp.ne.s32.totalorder %s60, %s63
    %p72 = scmp.eq.s32.totalorder %s15, 3
    %p73 = por %p71, %p72
    %p74 = scmp.ne.s32.totalorder %s63, %s64
    %p75 = scmp.eq.s32.totalorder %s15, 0
    %p76 = por %p74, %p75
    %p77 = scmp.ne.s32.totalorder %s63, %s64
    %p78 = scmp.eq.s32.totalorder %s16, 3
    %p79 = por %p77, %p78
    %p81 = scmp.ne.s32.totalorder %s64, %s80
    %p82 = scmp.eq.s32.totalorder %s16, 0
    %p83 = por %p81, %p82
    %s85 = sadd.s32 %s84, 1
    %p88 = scmp.eq.s32.totalorder %s10, 3
    %p89 = scmp.ne.s32.totalorder %s84, %s86
    %p90 = scmp.eq.s32.totalorder %s10, 0
    %p91 = por %p89, %p90
    %p92 = scmp.ne.s32.totalorder %s84, %s86
    %p93 = scmp.eq.s32.totalorder %s15, 3
    %p94 = por %p92, %p93
    %p95 = scmp.ne.s32.totalorder %s86, %s87
    %p96 = scmp.eq.s32.totalorder %s15, 0
    %p97 = por %p95, %p96
    %p98 = scmp.ne.s32.totalorder %s86, %s87
    %p99 = scmp.eq.s32.totalorder %s16, 3
    %p100 = por %p98, %p99
    %p102 = scmp.ne.s32.totalorder %s87, %s101
    %p103 = scmp.eq.s32.totalorder %s16, 0
    %p104 = por %p102, %p103
    %s106 = sadd.s32 %s105, 1
    %p109 = scmp.eq.s32.totalorder %s10, 3
    %p110 = scmp.ne.s32.totalorder %s105, %s107
    %p111 = scmp.eq.s32.totalorder %s10, 0
    %p112 = por %p110, %p111
    %p113 = scmp.ne.s32.totalorder %s105, %s107
    %p114 = scmp.eq.s32.totalorder %s15, 3
    %p115 = por %p113, %p114
    %p116 = scmp.ne.s32.totalorder %s107, %s108
    %p117 = scmp.eq.s32.totalorder %s15, 0
    %p118 = por %p116, %p117
    %p119 = scmp.ne.s32.totalorder %s107, %s108
    %p120 = scmp.eq.s32.totalorder %s16, 3
    %p121 = por %p119, %p120
    %p123 = scmp.ne.s32.totalorder %s108, %s122
    %p124 = scmp.eq.s32.totalorder %s16, 0
    %p125 = por %p123, %p124
    %s126 = ssub.s32 %s17, %s29
    %s127 = ssub.s32 %s18, %s25
    %s128 = sor.u32 %s126, %s127
    %p129 = scmp.eq.s32.totalorder %s128, 0
    %s131 = sadd.s32 %s130, 1
    %s132 = scalar_select %p129, %s130, %s131
    %p135 = pneg %p129
    %p136 = scmp.eq.s32.totalorder %s10, 3
    %p137 = por %p135, %p136
    %p138 = scmp.ne.s32.totalorder %s130, %s133
    %p139 = scmp.eq.s32.totalorder %s10, 0
    %p140 = por %p138, %p139
    %p141 = scmp.ne.s32.totalorder %s130, %s133
    %p142 = scmp.eq.s32.totalorder %s15, 3
    %p143 = por %p141, %p142
    %p144 = scmp.ne.s32.totalorder %s133, %s134
    %p145 = scmp.eq.s32.totalorder %s15, 0
    %p146 = por %p144, %p145
    %p147 = scmp.ne.s32.totalorder %s133, %s134
    %p148 = scmp.eq.s32.totalorder %s16, 3
    %p149 = por %p147, %p148
    %p151 = scmp.ne.s32.totalorder %s134, %s150
    %p152 = scmp.eq.s32.totalorder %s16, 0
    %p153 = por %p151, %p152
    %p154 = scmp.le.s32.totalorder 1, %s10
    %p155 = scmp.lt.s32.totalorder %s10, 5
    %p156 = pnand %p154, %p155
    %p157 = pneg %p156
    // Predicated region
    $region9: #{cnn_decoder_forward.7} parent=5 // pred_check
      _
    $region10: #{cnn_decoder_forward.7} parent=5 // pred_check_branch
      %159 = sbr.rel (%p156) target = $region12
    $region11: #{cnn_decoder_forward.7} parent=5 // pred_region
      %s160 = ssub.s32 %s10, 1
      // Predicated region
      $region13: #{cnn_decoder_forward.7} parent=11 // pred_check
        %p161 = pneg %p97
      $region14: #{cnn_decoder_forward.7} parent=11 // pred_check_branch
        %163 = sbr.rel (%p161) target = $region16
      $region15: #{cnn_decoder_forward.7} parent=11 // pred_region
        _
      $region16: #{cnn_decoder_forward.7} parent=11 // pred_fallthru
        _
      // Predicated region
      $region17: #{cnn_decoder_forward.7} parent=11 // pred_check
        %p164 = pneg %p118
      $region18: #{cnn_decoder_forward.7} parent=11 // pred_check_branch
        %166 = sbr.rel (%p164) target = $region20
      $region19: #{cnn_decoder_forward.7} parent=11 // pred_region
        _
      $region20: #{cnn_decoder_forward.7} parent=11 // pred_fallthru
        _
    $region12: #{cnn_decoder_forward.7} parent=5 // pred_fallthru
      _
    %p167 = scmp.lt.s32.totalorder %s10, 4
    // Predicated region
    $region21: #{cnn_decoder_forward.7} parent=5 // pred_check
      %p168 = pneg %p167
    $region22: #{cnn_decoder_forward.7} parent=5 // pred_check_branch
      %170 = sbr.rel (%p168) target = $region24
    $region23: #{cnn_decoder_forward.7} parent=5 // pred_region
      // Predicated region
      $region25: #{cnn_decoder_forward.7} parent=23 // pred_check
        %p171 = pneg %p44
      $region26: #{cnn_decoder_forward.7} parent=23 // pred_check_branch
        %173 = sbr.rel (%p171) target = $region28
      $region27: #{cnn_decoder_forward.7} parent=23 // pred_region
        %s174 = smul.u32 32, %s18
        %p175 = scmp.lt.s32.totalorder %s17, 3
        %s176 = scalar_select %p175, %s17, 3
        %p177 = scmp.lt.s32.totalorder %s174, 31
        %s178 = scalar_select %p177, %s174, 31
        %s179 = smul.addr %s176, 32
        %s180 = sadd.s32 %s178, %s179
        %s181 = smul.addr %s180, 4
        %s182 = scalar_lea.vmem %s0, %s181
        %s183 = smul.u32 32, %s18
      $region28: #{cnn_decoder_forward.7} parent=23 // pred_fallthru
        _
      // Predicated region
      $region29: #{cnn_decoder_forward.7} parent=23 // pred_check
        %p184 = pneg %p70
      $region30: #{cnn_decoder_forward.7} parent=23 // pred_check_branch
        %186 = sbr.rel (%p184) target = $region32
      $region31: #{cnn_decoder_forward.7} parent=23 // pred_region
        %p187 = scmp.lt.s32.totalorder %s17, 3
        %s188 = scalar_select %p187, %s17, 3
        %s189 = smul.addr %s188, 8
        %s190 = smul.addr %s189, 4
        %s191 = scalar_lea.vmem %s1, %s190
      $region32: #{cnn_decoder_forward.7} parent=23 // pred_fallthru
        _
    $region24: #{cnn_decoder_forward.7} parent=5 // pred_fallthru
      _
    %p192 = scmp.le.s32.totalorder 1, %s10
    %p193 = scmp.lt.s32.totalorder %s10, 5
    %p194 = pnand %p192, %p193
    %p195 = pneg %p194
    // Predicated region
    $region33: #{cnn_decoder_forward.7} parent=5 // pred_check
      _
    $region34: #{cnn_decoder_forward.7} parent=5 // pred_check_branch
      %197 = sbr.rel (%p194) target = $region36
    $region35: #{cnn_decoder_forward.7} parent=5 // pred_region
      %s198 = ssub.s32 %s10, 1
      %s199 = smul.u32 32, %s20
      %p200 = scmp.lt.s32.totalorder %s19, 3
      %s201 = scalar_select %p200, %s19, 3
      %p202 = scmp.lt.s32.totalorder %s199, 31
      %s203 = scalar_select %p202, %s199, 31
      %s204 = smul.addr %s201, 32
      %s205 = sadd.s32 %s203, %s204
      %s206 = smul.addr %s205, 4
      %s207 = scalar_lea.vmem %s0, %s206
      %p208 = pneg %p50
      %p209 = pneg %p47
      %p210 = scmp.lt.s32.totalorder %s19, 3
      %s211 = scalar_select %p210, %s19, 3
      %s212 = smul.addr %s211, 8
      %s213 = smul.addr %s212, 4
      %s214 = scalar_lea.vmem %s1, %s213
      %p215 = pneg %p76
      %p216 = pneg %p73
      %p217 = pneg %p97
      %p218 = pneg %p94
      %p219 = pneg %p118
      %p220 = pneg %p115
      %p221 = pneg %p146
      %p222 = pneg %p143
      %s223 = smul.u32 32, %s20
      %p224 = scmp.lt.s32.totalorder %s19, 3
      %s225 = scalar_select %p224, %s19, 3
      %p226 = scmp.lt.s32.totalorder %s223, 31
      %s227 = scalar_select %p226, %s223, 31
      %s228 = smul.addr %s225, 32
      %s229 = sadd.s32 %s227, %s228
      %s230 = smul.addr %s229, 4
      %s231 = scalar_lea.vmem %s4, %s230
      %s232 = smul.u32 32, %s20
      %p233 = scmp.lt.s32.totalorder %s19, 3
      %s234 = scalar_select %p233, %s19, 3
      %p235 = scmp.lt.s32.totalorder %s232, 31
      %s236 = scalar_select %p235, %s232, 31
      %s237 = smul.addr %s234, 32
      %s238 = sadd.s32 %s236, %s237
      %s239 = smul.addr %s238, 4
      %s240 = scalar_lea.vmem %s0, %s239
      %s241 = smul.u32 32, %s20
      %p242 = scmp.lt.s32.totalorder %s19, 3
      %s243 = scalar_select %p242, %s19, 3
      %s244 = smul.addr %s243, 8
      %s245 = smul.addr %s244, 4
      %s246 = scalar_lea.vmem %s1, %s245
      %s247 = smul.u32 32, %s20
      %p248 = scmp.lt.s32.totalorder %s19, 3
      %s249 = scalar_select %p248, %s19, 3
      %p250 = scmp.lt.s32.totalorder %s247, 31
      %s251 = scalar_select %p250, %s247, 31
      %s252 = smul.addr %s249, 32
      %s253 = sadd.s32 %s251, %s252
      %s254 = smul.addr %s253, 4
      %s255 = scalar_lea.vmem %s4, %s254
      %s256 = smul.u32 32, %s20
      %v258 = vld [vmem:[%s240] sm:$0xf]
      %v259 = vld [vmem:[%s240 + $0x4] sm:$0xf]
      %v260 = vld [vmem:[%s240 + $0x8] sm:$0xf]
      %v261 = vld [vmem:[%s240 + $0xc] sm:$0xf]
      %v262 = vld [vmem:[%s240 + $0x10] sm:$0xf]
      %v263 = vld [vmem:[%s240 + $0x14] sm:$0xf]
      %v264 = vld [vmem:[%s240 + $0x18] sm:$0xf]
      %v265 = vld [vmem:[%s240 + $0x1c] sm:$0xf]
      %v266 = vld [vmem:[%s240 + $0x20] sm:$0xf]
      %v267 = vld [vmem:[%s240 + $0x24] sm:$0xf]
      %v268 = vld [vmem:[%s240 + $0x28] sm:$0xf]
      %v269 = vld [vmem:[%s240 + $0x2c] sm:$0xf]
      %v270 = vld [vmem:[%s240 + $0x30] sm:$0xf]
      %v271 = vld [vmem:[%s240 + $0x34] sm:$0xf]
      %v272 = vld [vmem:[%s240 + $0x38] sm:$0xf]
      %v273 = vld [vmem:[%s240 + $0x3c] sm:$0xf]
      %v274 = vld [vmem:[%s240 + $0x40] sm:$0xf]
      %v275 = vld [vmem:[%s240 + $0x44] sm:$0xf]
      %v276 = vld [vmem:[%s240 + $0x48] sm:$0xf]
      %v277 = vld [vmem:[%s240 + $0x4c] sm:$0xf]
      %v278 = vld [vmem:[%s240 + $0x50] sm:$0xf]
      %v279 = vld [vmem:[%s240 + $0x54] sm:$0xf]
      %v280 = vld [vmem:[%s240 + $0x58] sm:$0xf]
      %v281 = vld [vmem:[%s240 + $0x5c] sm:$0xf]
      %v282 = vld [vmem:[%s240 + $0x60] sm:$0xf]
      %v283 = vld [vmem:[%s240 + $0x64] sm:$0xf]
      %v284 = vld [vmem:[%s240 + $0x68] sm:$0xf]
      %v285 = vld [vmem:[%s240 + $0x6c] sm:$0xf]
      %v286 = vld [vmem:[%s240 + $0x70] sm:$0xf]
      %v287 = vld [vmem:[%s240 + $0x74] sm:$0xf]
      %v288 = vld [vmem:[%s240 + $0x78] sm:$0xf]
      %v289 = vld [vmem:[%s240 + $0x7c] sm:$0xf]
      %v290 = vld [vmem:[%s246] sm:$0xf]
      %v291 = vld [vmem:[%s246 + $0x4] sm:$0xf]
      %v292 = vld [vmem:[%s246 + $0x8] sm:$0xf]
      %v293 = vld [vmem:[%s246 + $0xc] sm:$0xf]
      %v294 = vld [vmem:[%s246 + $0x10] sm:$0xf]
      %v295 = vld [vmem:[%s246 + $0x14] sm:$0xf]
      %v296 = vld [vmem:[%s246 + $0x18] sm:$0xf]
      %v297 = vld [vmem:[%s246 + $0x1c] sm:$0xf]
      %v330 = vunpack.c.l.b16 %v258
      %v331 = vunpack.c.l.b16 %v259
      %v332 = vunpack.c.l.b16 %v260
      %v333 = vunpack.c.l.b16 %v261
      %v334 = vunpack.c.l.b16 %v262
      %v335 = vunpack.c.l.b16 %v263
      %v336 = vunpack.c.l.b16 %v264
      %v337 = vunpack.c.l.b16 %v265
      %v338 = vunpack.c.l.b16 %v266
      %v339 = vunpack.c.l.b16 %v267
      %v340 = vunpack.c.l.b16 %v268
      %v341 = vunpack.c.l.b16 %v269
      %v342 = vunpack.c.l.b16 %v270
      %v343 = vunpack.c.l.b16 %v271
      %v344 = vunpack.c.l.b16 %v272
      %v345 = vunpack.c.l.b16 %v273
      %v346 = vunpack.c.l.b16 %v274
      %v347 = vunpack.c.l.b16 %v275
      %v348 = vunpack.c.l.b16 %v276
      %v349 = vunpack.c.l.b16 %v277
      %v350 = vunpack.c.l.b16 %v278
      %v351 = vunpack.c.l.b16 %v279
      %v352 = vunpack.c.l.b16 %v280
      %v353 = vunpack.c.l.b16 %v281
      %v354 = vunpack.c.l.b16 %v282
      %v355 = vunpack.c.l.b16 %v283
      %v356 = vunpack.c.l.b16 %v284
      %v357 = vunpack.c.l.b16 %v285
      %v358 = vunpack.c.l.b16 %v286
      %v359 = vunpack.c.l.b16 %v287
      %v360 = vunpack.c.l.b16 %v288
      %v361 = vunpack.c.l.b16 %v289
      %v362 = vpack.c.b16 %v331, %v330
      %v363 = vpack.c.b16 %v333, %v332
      %v364 = vpack.c.b16 %v335, %v334
      %v365 = vpack.c.b16 %v337, %v336
      %v366 = vpack.c.b16 %v339, %v338
      %v367 = vpack.c.b16 %v341, %v340
      %v368 = vpack.c.b16 %v343, %v342
      %v369 = vpack.c.b16 %v345, %v344
      %v370 = vpack.c.b16 %v347, %v346
      %v371 = vpack.c.b16 %v349, %v348
      %v372 = vpack.c.b16 %v351, %v350
      %v373 = vpack.c.b16 %v353, %v352
      %v374 = vpack.c.b16 %v355, %v354
      %v375 = vpack.c.b16 %v357, %v356
      %v376 = vpack.c.b16 %v359, %v358
      %v377 = vpack.c.b16 %v361, %v360
      %v386 = vunpack.c.l.b16 %v290
      %v387 = vunpack.c.l.b16 %v291
      %v388 = vunpack.c.l.b16 %v292
      %v389 = vunpack.c.l.b16 %v293
      %v390 = vunpack.c.l.b16 %v294
      %v391 = vunpack.c.l.b16 %v295
      %v392 = vunpack.c.l.b16 %v296
      %v393 = vunpack.c.l.b16 %v297
      %v394 = vpack.c.b16 %v387, %v386
      %v395 = vpack.c.b16 %v389, %v388
      %v396 = vpack.c.b16 %v391, %v390
      %v397 = vpack.c.b16 %v393, %v392
      %vm402 = vcmask 523264
      %v404 = vsel %vm402, %v362, 0
      %v407 = vsel %vm402, %v363, 0
      %v410 = vsel %vm402, %v364, 0
      %v413 = vsel %vm402, %v365, 0
      %v416 = vsel %vm402, %v366, 0
      %v419 = vsel %vm402, %v367, 0
      %v422 = vsel %vm402, %v368, 0
      %v425 = vsel %vm402, %v369, 0
      %v428 = vsel %vm402, %v370, 0
      %v431 = vsel %vm402, %v371, 0
      %v434 = vsel %vm402, %v372, 0
      %v437 = vsel %vm402, %v373, 0
      %v440 = vsel %vm402, %v374, 0
      %v443 = vsel %vm402, %v375, 0
      %v446 = vsel %vm402, %v376, 0
      %v449 = vsel %vm402, %v377, 0
      %451 = vmatprep.subr.bf16.mxu0 0
      %452 = vmatpush1.bf16.msra.mxu0 %v394
      %453 = vmatprep.subr.bf16.mxu0 0
      %454 = vmatpush1.bf16.msra.mxu0 %v395
      %455 = vmatprep.subr.bf16.mxu0 0
      %456 = vmatpush1.bf16.msra.mxu0 %v396
      %457 = vmatprep.subr.bf16.mxu0 0
      %458 = vmatpush1.bf16.msra.mxu0 %v397
      %459 = vmatprep.subr.bf16.mxu0 0
      %460 = vmatpush1.bf16.msra.mxu0 0
      %461 = vmatprep.subr.bf16.mxu0 0
      %462 = vmatpush1.bf16.msra.mxu0 0
      %463 = vmatprep.subr.bf16.mxu0 0
      %464 = vmatpush1.bf16.msra.mxu0 0
      %465 = vmatprep.subr.bf16.mxu0 0
      %466 = vmatpush1.bf16.msra.mxu0 0
      %467 = vmatprep.subr.bf16.mxu0 0
      %468 = vmatpush1.bf16.msra.mxu0 0
      %469 = vmatprep.subr.bf16.mxu0 0
      %470 = vmatpush1.bf16.msra.mxu0 0
      %471 = vmatprep.subr.bf16.mxu0 0
      %472 = vmatpush1.bf16.msra.mxu0 0
      %473 = vmatprep.subr.bf16.mxu0 0
      %474 = vmatpush1.bf16.msra.mxu0 0
      %475 = vmatprep.subr.bf16.mxu0 0
      %476 = vmatpush1.bf16.msra.mxu0 0
      %477 = vmatprep.subr.bf16.mxu0 0
      %478 = vmatpush1.bf16.msra.mxu0 0
      %479 = vmatprep.subr.bf16.mxu0 0
      %480 = vmatpush1.bf16.msra.mxu0 0
      %481 = vmatprep.subr.bf16.mxu0 0
      %482 = vmatpush1.bf16.msra.mxu0 0
      %483 = vmatprep.mubr.bf16.mxu0 0
      %484 = vmatmul.mubr.bf16.gmra.mrb[0].mxu0 %v404
      %v485 = vpop.f32.mrb[0].mxu0
      %v486 = vadd.f32 0.0, %v485
      %v487 = vpop.f32.mrb[0].mxu0
      %v488 = vpop.f32.mrb[0].mxu0
      %v489 = vadd.f32 0.0, %v488
      %v490 = vpop.f32.mrb[0].mxu0
      %491 = vmatprep.mubr.bf16.mxu0 0
      %492 = vmatmul.mubr.bf16.gmra.mrb[0].mxu0 %v407
      %v493 = vpop.f32.mrb[0].mxu0
      %v494 = vadd.f32 0.0, %v493
      %v495 = vpop.f32.mrb[0].mxu0
      %v496 = vpop.f32.mrb[0].mxu0
      %v497 = vadd.f32 0.0, %v496
      %v498 = vpop.f32.mrb[0].mxu0
      %499 = vmatprep.mubr.bf16.mxu0 0
      %500 = vmatmul.mubr.bf16.gmra.mrb[0].mxu0 %v410
      %v501 = vpop.f32.mrb[0].mxu0
      %v502 = vadd.f32 0.0, %v501
      %v503 = vpop.f32.mrb[0].mxu0
      %v504 = vpop.f32.mrb[0].mxu0
      %v505 = vadd.f32 0.0, %v504
      %v506 = vpop.f32.mrb[0].mxu0
      %507 = vmatprep.mubr.bf16.mxu0 0
      %508 = vmatmul.mubr.bf16.gmra.mrb[0].mxu0 %v413
      %v509 = vpop.f32.mrb[0].mxu0
      %v510 = vadd.f32 0.0, %v509
      %v511 = vpop.f32.mrb[0].mxu0
      %v512 = vpop.f32.mrb[0].mxu0
      %v513 = vadd.f32 0.0, %v512
      %v514 = vpop.f32.mrb[0].mxu0
      %515 = vmatprep.mubr.bf16.mxu0 0
      %516 = vmatmul.mubr.bf16.gmra.mrb[0].mxu0 %v416
      %v517 = vpop.f32.mrb[0].mxu0
      %v518 = vadd.f32 0.0, %v517
      %v519 = vpop.f32.mrb[0].mxu0
      %v520 = vpop.f32.mrb[0].mxu0
      %v521 = vadd.f32 0.0, %v520
      %v522 = vpop.f32.mrb[0].mxu0
      %523 = vmatprep.mubr.bf16.mxu0 0
      %524 = vmatmul.mubr.bf16.gmra.mrb[0].mxu0 %v419
      %v525 = vpop.f32.mrb[0].mxu0
      %v526 = vadd.f32 0.0, %v525
      %v527 = vpop.f32.mrb[0].mxu0
      %v528 = vpop.f32.mrb[0].mxu0
      %v529 = vadd.f32 0.0, %v528
      %v530 = vpop.f32.mrb[0].mxu0
      %531 = vmatprep.mubr.bf16.mxu0 0
      %532 = vmatmul.mubr.bf16.gmra.mrb[0].mxu0 %v422
      %v533 = vpop.f32.mrb[0].mxu0
      %v534 = vadd.f32 0.0, %v533
      %v535 = vpop.f32.mrb[0].mxu0
      %v536 = vpop.f32.mrb[0].mxu0
      %v537 = vadd.f32 0.0, %v536
      %v538 = vpop.f32.mrb[0].mxu0
      %539 = vmatprep.mubr.bf16.mxu0 0
      %540 = vmatmul.mubr.bf16.gmra.mrb[0].mxu0 %v425
      %v541 = vpop.f32.mrb[0].mxu0
      %v542 = vadd.f32 0.0, %v541
      %v543 = vpop.f32.mrb[0].mxu0
      %v544 = vpop.f32.mrb[0].mxu0
      %v545 = vadd.f32 0.0, %v544
      %v546 = vpop.f32.mrb[0].mxu0
      %547 = vmatprep.mubr.bf16.mxu0 0
      %548 = vmatmul.mubr.bf16.gmra.mrb[0].mxu0 %v428
      %v549 = vpop.f32.mrb[0].mxu0
      %v550 = vadd.f32 0.0, %v549
      %v551 = vpop.f32.mrb[0].mxu0
      %v552 = vpop.f32.mrb[0].mxu0
      %v553 = vadd.f32 0.0, %v552
      %v554 = vpop.f32.mrb[0].mxu0
      %555 = vmatprep.mubr.bf16.mxu0 0
      %556 = vmatmul.mubr.bf16.gmra.mrb[0].mxu0 %v431
      %v557 = vpop.f32.mrb[0].mxu0
      %v558 = vadd.f32 0.0, %v557
      %v559 = vpop.f32.mrb[0].mxu0
      %v560 = vpop.f32.mrb[0].mxu0
      %v561 = vadd.f32 0.0, %v560
      %v562 = vpop.f32.mrb[0].mxu0
      %563 = vmatprep.mubr.bf16.mxu0 0
      %564 = vmatmul.mubr.bf16.gmra.mrb[0].mxu0 %v434
      %v565 = vpop.f32.mrb[0].mxu0
      %v566 = vadd.f32 0.0, %v565
      %v567 = vpop.f32.mrb[0].mxu0
      %v568 = vpop.f32.mrb[0].mxu0
      %v569 = vadd.f32 0.0, %v568
      %v570 = vpop.f32.mrb[0].mxu0
      %571 = vmatprep.mubr.bf16.mxu0 0
      %572 = vmatmul.mubr.bf16.gmra.mrb[0].mxu0 %v437
      %v573 = vpop.f32.mrb[0].mxu0
      %v574 = vadd.f32 0.0, %v573
      %v575 = vpop.f32.mrb[0].mxu0
      %v576 = vpop.f32.mrb[0].mxu0
      %v577 = vadd.f32 0.0, %v576
      %v578 = vpop.f32.mrb[0].mxu0
      %579 = vmatprep.mubr.bf16.mxu0 0
      %580 = vmatmul.mubr.bf16.gmra.mrb[0].mxu0 %v440
      %v581 = vpop.f32.mrb[0].mxu0
      %v582 = vadd.f32 0.0, %v581
      %v583 = vpop.f32.mrb[0].mxu0
      %v584 = vpop.f32.mrb[0].mxu0
      %v585 = vadd.f32 0.0, %v584
      %v586 = vpop.f32.mrb[0].mxu0
      %587 = vmatprep.mubr.bf16.mxu0 0
      %588 = vmatmul.mubr.bf16.gmra.mrb[0].mxu0 %v443
      %v589 = vpop.f32.mrb[0].mxu0
      %v590 = vadd.f32 0.0, %v589
      %v591 = vpop.f32.mrb[0].mxu0
      %v592 = vpop.f32.mrb[0].mxu0
      %v593 = vadd.f32 0.0, %v592
      %v594 = vpop.f32.mrb[0].mxu0
      %595 = vmatprep.mubr.bf16.mxu0 0
      %596 = vmatmul.mubr.bf16.gmra.mrb[0].mxu0 %v446
      %v597 = vpop.f32.mrb[0].mxu0
      %v598 = vadd.f32 0.0, %v597
      %v599 = vpop.f32.mrb[0].mxu0
      %v600 = vpop.f32.mrb[0].mxu0
      %v601 = vadd.f32 0.0, %v600
      %v602 = vpop.f32.mrb[0].mxu0
      %603 = vmatprep.mubr.bf16.mxu0 0
      %604 = vmatmul.mubr.bf16.gmra.mrb[0].mxu0 %v449
      %v605 = vpop.f32.mrb[0].mxu0
      %v606 = vadd.f32 0.0, %v605
      %v607 = vpop.f32.mrb[0].mxu0
      %v608 = vpop.f32.mrb[0].mxu0
      %v609 = vadd.f32 0.0, %v608
      %v610 = vpop.f32.mrb[0].mxu0
      %611 = vdwg.mxu0
      %612 = vadd.xlane.f32.xlu0 %v486
      %v613 = vpop.xlane.xlu0 %612
      %614 = vadd.xlane.f32.xlu0 %v489
      %v615 = vpop.xlane.xlu0 %614
      %616 = vadd.xlane.f32.xlu0 %v494
      %v617 = vpop.xlane.xlu0 %616
      %618 = vadd.xlane.f32.xlu0 %v497
      %v619 = vpop.xlane.xlu0 %618
      %620 = vadd.xlane.f32.xlu0 %v502
      %v621 = vpop.xlane.xlu0 %620
      %622 = vadd.xlane.f32.xlu0 %v505
      %v623 = vpop.xlane.xlu0 %622
      %624 = vadd.xlane.f32.xlu0 %v510
      %v625 = vpop.xlane.xlu0 %624
      %626 = vadd.xlane.f32.xlu0 %v513
      %v627 = vpop.xlane.xlu0 %626
      %628 = vadd.xlane.f32.xlu0 %v518
      %v629 = vpop.xlane.xlu0 %628
      %630 = vadd.xlane.f32.xlu0 %v521
      %v631 = vpop.xlane.xlu0 %630
      %632 = vadd.xlane.f32.xlu0 %v526
      %v633 = vpop.xlane.xlu0 %632
      %634 = vadd.xlane.f32.xlu0 %v529
      %v635 = vpop.xlane.xlu0 %634
      %636 = vadd.xlane.f32.xlu0 %v534
      %v637 = vpop.xlane.xlu0 %636
      %638 = vadd.xlane.f32.xlu0 %v537
      %v639 = vpop.xlane.xlu0 %638
      %640 = vadd.xlane.f32.xlu0 %v542
      %v641 = vpop.xlane.xlu0 %640
      %642 = vadd.xlane.f32.xlu0 %v545
      %v643 = vpop.xlane.xlu0 %642
      %644 = vadd.xlane.f32.xlu0 %v550
      %v645 = vpop.xlane.xlu0 %644
      %646 = vadd.xlane.f32.xlu0 %v553
      %v647 = vpop.xlane.xlu0 %646
      %648 = vadd.xlane.f32.xlu0 %v558
      %v649 = vpop.xlane.xlu0 %648
      %650 = vadd.xlane.f32.xlu0 %v561
      %v651 = vpop.xlane.xlu0 %650
      %652 = vadd.xlane.f32.xlu0 %v566
      %v653 = vpop.xlane.xlu0 %652
      %654 = vadd.xlane.f32.xlu0 %v569
      %v655 = vpop.xlane.xlu0 %654
      %656 = vadd.xlane.f32.xlu0 %v574
      %v657 = vpop.xlane.xlu0 %656
      %658 = vadd.xlane.f32.xlu0 %v577
      %v659 = vpop.xlane.xlu0 %658
      %660 = vadd.xlane.f32.xlu0 %v582
      %v661 = vpop.xlane.xlu0 %660
      %662 = vadd.xlane.f32.xlu0 %v585
      %v663 = vpop.xlane.xlu0 %662
      %664 = vadd.xlane.f32.xlu0 %v590
      %v665 = vpop.xlane.xlu0 %664
      %666 = vadd.xlane.f32.xlu0 %v593
      %v667 = vpop.xlane.xlu0 %666
      %668 = vadd.xlane.f32.xlu0 %v598
      %v669 = vpop.xlane.xlu0 %668
      %670 = vadd.xlane.f32.xlu0 %v601
      %v671 = vpop.xlane.xlu0 %670
      %672 = vadd.xlane.f32.xlu0 %v606
      %v673 = vpop.xlane.xlu0 %672
      %674 = vadd.xlane.f32.xlu0 %v609
      %v675 = vpop.xlane.xlu0 %674
      %v676 = vmul.f32 %v486, %v486
      %v677 = vmul.f32 %v489, %v489
      %v678 = vmul.f32 %v494, %v494
      %v679 = vmul.f32 %v497, %v497
      %v680 = vmul.f32 %v502, %v502
      %v681 = vmul.f32 %v505, %v505
      %v682 = vmul.f32 %v510, %v510
      %v683 = vmul.f32 %v513, %v513
      %v684 = vmul.f32 %v518, %v518
      %v685 = vmul.f32 %v521, %v521
      %v686 = vmul.f32 %v526, %v526
      %v687 = vmul.f32 %v529, %v529
      %v688 = vmul.f32 %v534, %v534
      %v689 = vmul.f32 %v537, %v537
      %v690 = vmul.f32 %v542, %v542
      %v691 = vmul.f32 %v545, %v545
      %v692 = vmul.f32 %v550, %v550
      %v693 = vmul.f32 %v553, %v553
      %v694 = vmul.f32 %v558, %v558
      %v695 = vmul.f32 %v561, %v561
      %v696 = vmul.f32 %v566, %v566
      %v697 = vmul.f32 %v569, %v569
      %v698 = vmul.f32 %v574, %v574
      %v699 = vmul.f32 %v577, %v577
      %v700 = vmul.f32 %v582, %v582
      %v701 = vmul.f32 %v585, %v585
      %v702 = vmul.f32 %v590, %v590
      %v703 = vmul.f32 %v593, %v593
      %v704 = vmul.f32 %v598, %v598
      %v705 = vmul.f32 %v601, %v601
      %v706 = vmul.f32 %v606, %v606
      %v707 = vmul.f32 %v609, %v609
      %708 = vadd.xlane.f32.xlu0 %v676
      %v709 = vpop.xlane.xlu0 %708
      %710 = vadd.xlane.f32.xlu0 %v677
      %v711 = vpop.xlane.xlu0 %710
      %712 = vadd.xlane.f32.xlu0 %v678
      %v713 = vpop.xlane.xlu0 %712
      %714 = vadd.xlane.f32.xlu0 %v679
      %v715 = vpop.xlane.xlu0 %714
      %716 = vadd.xlane.f32.xlu0 %v680
      %v717 = vpop.xlane.xlu0 %716
      %718 = vadd.xlane.f32.xlu0 %v681
      %v719 = vpop.xlane.xlu0 %718
      %720 = vadd.xlane.f32.xlu0 %v682
      %v721 = vpop.xlane.xlu0 %720
      %722 = vadd.xlane.f32.xlu0 %v683
      %v723 = vpop.xlane.xlu0 %722
      %724 = vadd.xlane.f32.xlu0 %v684
      %v725 = vpop.xlane.xlu0 %724
      %726 = vadd.xlane.f32.xlu0 %v685
      %v727 = vpop.xlane.xlu0 %726
      %728 = vadd.xlane.f32.xlu0 %v686
      %v729 = vpop.xlane.xlu0 %728
      %730 = vadd.xlane.f32.xlu0 %v687
      %v731 = vpop.xlane.xlu0 %730
      %732 = vadd.xlane.f32.xlu0 %v688
      %v733 = vpop.xlane.xlu0 %732
      %734 = vadd.xlane.f32.xlu0 %v689
      %v735 = vpop.xlane.xlu0 %734
      %736 = vadd.xlane.f32.xlu0 %v690
      %v737 = vpop.xlane.xlu0 %736
      %738 = vadd.xlane.f32.xlu0 %v691
      %v739 = vpop.xlane.xlu0 %738
      %740 = vadd.xlane.f32.xlu0 %v692
      %v741 = vpop.xlane.xlu0 %740
      %742 = vadd.xlane.f32.xlu0 %v693
      %v743 = vpop.xlane.xlu0 %742
      %744 = vadd.xlane.f32.xlu0 %v694
      %v745 = vpop.xlane.xlu0 %744
      %746 = vadd.xlane.f32.xlu0 %v695
      %v747 = vpop.xlane.xlu0 %746
      %748 = vadd.xlane.f32.xlu0 %v696
      %v749 = vpop.xlane.xlu0 %748
      %750 = vadd.xlane.f32.xlu0 %v697
      %v751 = vpop.xlane.xlu0 %750
      %752 = vadd.xlane.f32.xlu0 %v698
      %v753 = vpop.xlane.xlu0 %752
      %754 = vadd.xlane.f32.xlu0 %v699
      %v755 = vpop.xlane.xlu0 %754
      %756 = vadd.xlane.f32.xlu0 %v700
      %v757 = vpop.xlane.xlu0 %756
      %758 = vadd.xlane.f32.xlu0 %v701
      %v759 = vpop.xlane.xlu0 %758
      %760 = vadd.xlane.f32.xlu0 %v702
      %v761 = vpop.xlane.xlu0 %760
      %762 = vadd.xlane.f32.xlu0 %v703
      %v763 = vpop.xlane.xlu0 %762
      %764 = vadd.xlane.f32.xlu0 %v704
      %v765 = vpop.xlane.xlu0 %764
      %766 = vadd.xlane.f32.xlu0 %v705
      %v767 = vpop.xlane.xlu0 %766
      %768 = vadd.xlane.f32.xlu0 %v706
      %v769 = vpop.xlane.xlu0 %768
      %770 = vadd.xlane.f32.xlu0 %v707
      %v771 = vpop.xlane.xlu0 %770
      %v772 = vmul.f32 %v613, 0.125
      %v773 = vmul.f32 %v615, 0.125
      %v774 = vmul.f32 %v617, 0.125
      %v775 = vmul.f32 %v619, 0.125
      %v776 = vmul.f32 %v621, 0.125
      %v777 = vmul.f32 %v623, 0.125
      %v778 = vmul.f32 %v625, 0.125
      %v779 = vmul.f32 %v627, 0.125
      %v780 = vmul.f32 %v629, 0.125
      %v781 = vmul.f32 %v631, 0.125
      %v782 = vmul.f32 %v633, 0.125
      %v783 = vmul.f32 %v635, 0.125
      %v784 = vmul.f32 %v637, 0.125
      %v785 = vmul.f32 %v639, 0.125
      %v786 = vmul.f32 %v641, 0.125
      %v787 = vmul.f32 %v643, 0.125
      %v788 = vmul.f32 %v645, 0.125
      %v789 = vmul.f32 %v647, 0.125
      %v790 = vmul.f32 %v649, 0.125
      %v791 = vmul.f32 %v651, 0.125
      %v792 = vmul.f32 %v653, 0.125
      %v793 = vmul.f32 %v655, 0.125
      %v794 = vmul.f32 %v657, 0.125
      %v795 = vmul.f32 %v659, 0.125
      %v796 = vmul.f32 %v661, 0.125
      %v797 = vmul.f32 %v663, 0.125
      %v798 = vmul.f32 %v665, 0.125
      %v799 = vmul.f32 %v667, 0.125
      %v800 = vmul.f32 %v669, 0.125
      %v801 = vmul.f32 %v671, 0.125
      %v802 = vmul.f32 %v673, 0.125
      %v803 = vmul.f32 %v675, 0.125
      %v804 = vmul.f32 %v709, 0.125
      %v805 = vmul.f32 %v711, 0.125
      %v806 = vmul.f32 %v713, 0.125
      %v807 = vmul.f32 %v715, 0.125
      %v808 = vmul.f32 %v717, 0.125
      %v809 = vmul.f32 %v719, 0.125
      %v810 = vmul.f32 %v721, 0.125
      %v811 = vmul.f32 %v723, 0.125
      %v812 = vmul.f32 %v725, 0.125
      %v813 = vmul.f32 %v727, 0.125
      %v814 = vmul.f32 %v729, 0.125
      %v815 = vmul.f32 %v731, 0.125
      %v816 = vmul.f32 %v733, 0.125
      %v817 = vmul.f32 %v735, 0.125
      %v818 = vmul.f32 %v737, 0.125
      %v819 = vmul.f32 %v739, 0.125
      %v820 = vmul.f32 %v741, 0.125
      %v821 = vmul.f32 %v743, 0.125
      %v822 = vmul.f32 %v745, 0.125
      %v823 = vmul.f32 %v747, 0.125
      %v824 = vmul.f32 %v749, 0.125
      %v825 = vmul.f32 %v751, 0.125
      %v826 = vmul.f32 %v753, 0.125
      %v827 = vmul.f32 %v755, 0.125
      %v828 = vmul.f32 %v757, 0.125
      %v829 = vmul.f32 %v759, 0.125
      %v830 = vmul.f32 %v761, 0.125
      %v831 = vmul.f32 %v763, 0.125
      %v832 = vmul.f32 %v765, 0.125
      %v833 = vmul.f32 %v767, 0.125
      %v834 = vmul.f32 %v769, 0.125
      %v835 = vmul.f32 %v771, 0.125
      %v836 = vmul.f32 %v772, %v772
      %v837 = vmul.f32 %v773, %v773
      %v838 = vmul.f32 %v774, %v774
      %v839 = vmul.f32 %v775, %v775
      %v840 = vmul.f32 %v776, %v776
      %v841 = vmul.f32 %v777, %v777
      %v842 = vmul.f32 %v778, %v778
      %v843 = vmul.f32 %v779, %v779
      %v844 = vmul.f32 %v780, %v780
      %v845 = vmul.f32 %v781, %v781
      %v846 = vmul.f32 %v782, %v782
      %v847 = vmul.f32 %v783, %v783
      %v848 = vmul.f32 %v784, %v784
      %v849 = vmul.f32 %v785, %v785
      %v850 = vmul.f32 %v786, %v786
      %v851 = vmul.f32 %v787, %v787
      %v852 = vmul.f32 %v788, %v788
      %v853 = vmul.f32 %v789, %v789
      %v854 = vmul.f32 %v790, %v790
      %v855 = vmul.f32 %v791, %v791
      %v856 = vmul.f32 %v792, %v792
      %v857 = vmul.f32 %v793, %v793
      %v858 = vmul.f32 %v794, %v794
      %v859 = vmul.f32 %v795, %v795
      %v860 = vmul.f32 %v796, %v796
      %v861 = vmul.f32 %v797, %v797
      %v862 = vmul.f32 %v798, %v798
      %v863 = vmul.f32 %v799, %v799
      %v864 = vmul.f32 %v800, %v800
      %v865 = vmul.f32 %v801, %v801
      %v866 = vmul.f32 %v802, %v802
      %v867 = vmul.f32 %v803, %v803
      %v868 = vsub.f32 %v804, %v836
      %v869 = vsub.f32 %v805, %v837
      %v870 = vsub.f32 %v806, %v838
      %v871 = vsub.f32 %v807, %v839
      %v872 = vsub.f32 %v808, %v840
      %v873 = vsub.f32 %v809, %v841
      %v874 = vsub.f32 %v810, %v842
      %v875 = vsub.f32 %v811, %v843
      %v876 = vsub.f32 %v812, %v844
      %v877 = vsub.f32 %v813, %v845
      %v878 = vsub.f32 %v814, %v846
      %v879 = vsub.f32 %v815, %v847
      %v880 = vsub.f32 %v816, %v848
      %v881 = vsub.f32 %v817, %v849
      %v882 = vsub.f32 %v818, %v850
      %v883 = vsub.f32 %v819, %v851
      %v884 = vsub.f32 %v820, %v852
      %v885 = vsub.f32 %v821, %v853
      %v886 = vsub.f32 %v822, %v854
      %v887 = vsub.f32 %v823, %v855
      %v888 = vsub.f32 %v824, %v856
      %v889 = vsub.f32 %v825, %v857
      %v890 = vsub.f32 %v826, %v858
      %v891 = vsub.f32 %v827, %v859
      %v892 = vsub.f32 %v828, %v860
      %v893 = vsub.f32 %v829, %v861
      %v894 = vsub.f32 %v830, %v862
      %v895 = vsub.f32 %v831, %v863
      %v896 = vsub.f32 %v832, %v864
      %v897 = vsub.f32 %v833, %v865
      %v898 = vsub.f32 %v834, %v866
      %v899 = vsub.f32 %v835, %v867
      %v900 = vsub.f32 %v486, %v772
      %v901 = vsub.f32 %v489, %v773
      %v902 = vsub.f32 %v494, %v774
      %v903 = vsub.f32 %v497, %v775
      %v904 = vsub.f32 %v502, %v776
      %v905 = vsub.f32 %v505, %v777
      %v906 = vsub.f32 %v510, %v778
      %v907 = vsub.f32 %v513, %v779
      %v908 = vsub.f32 %v518, %v780
      %v909 = vsub.f32 %v521, %v781
      %v910 = vsub.f32 %v526, %v782
      %v911 = vsub.f32 %v529, %v783
      %v912 = vsub.f32 %v534, %v784
      %v913 = vsub.f32 %v537, %v785
      %v914 = vsub.f32 %v542, %v786
      %v915 = vsub.f32 %v545, %v787
      %v916 = vsub.f32 %v550, %v788
      %v917 = vsub.f32 %v553, %v789
      %v918 = vsub.f32 %v558, %v790
      %v919 = vsub.f32 %v561, %v791
      %v920 = vsub.f32 %v566, %v792
      %v921 = vsub.f32 %v569, %v793
      %v922 = vsub.f32 %v574, %v794
      %v923 = vsub.f32 %v577, %v795
      %v924 = vsub.f32 %v582, %v796
      %v925 = vsub.f32 %v585, %v797
      %v926 = vsub.f32 %v590, %v798
      %v927 = vsub.f32 %v593, %v799
      %v928 = vsub.f32 %v598, %v800
      %v929 = vsub.f32 %v601, %v801
      %v930 = vsub.f32 %v606, %v802
      %v931 = vsub.f32 %v609, %v803
      %v932 = vadd.f32 %v868, 0.001
      %v933 = vadd.f32 %v869, 0.001
      %v934 = vadd.f32 %v870, 0.001
      %v935 = vadd.f32 %v871, 0.001
      %v936 = vadd.f32 %v872, 0.001
      %v937 = vadd.f32 %v873, 0.001
      %v938 = vadd.f32 %v874, 0.001
      %v939 = vadd.f32 %v875, 0.001
      %v940 = vadd.f32 %v876, 0.001
      %v941 = vadd.f32 %v877, 0.001
      %v942 = vadd.f32 %v878, 0.001
      %v943 = vadd.f32 %v879, 0.001
      %v944 = vadd.f32 %v880, 0.001
      %v945 = vadd.f32 %v881, 0.001
      %v946 = vadd.f32 %v882, 0.001
      %v947 = vadd.f32 %v883, 0.001
      %v948 = vadd.f32 %v884, 0.001
      %v949 = vadd.f32 %v885, 0.001
      %v950 = vadd.f32 %v886, 0.001
      %v951 = vadd.f32 %v887, 0.001
      %v952 = vadd.f32 %v888, 0.001
      %v953 = vadd.f32 %v889, 0.001
      %v954 = vadd.f32 %v890, 0.001
      %v955 = vadd.f32 %v891, 0.001
      %v956 = vadd.f32 %v892, 0.001
      %v957 = vadd.f32 %v893, 0.001
      %v958 = vadd.f32 %v894, 0.001
      %v959 = vadd.f32 %v895, 0.001
      %v960 = vadd.f32 %v896, 0.001
      %v961 = vadd.f32 %v897, 0.001
      %v962 = vadd.f32 %v898, 0.001
      %v963 = vadd.f32 %v899, 0.001
      %v964 = vrsqrt.pop %v932
      %v965 = vrsqrt.pop %v933
      %v966 = vrsqrt.pop %v934
      %v967 = vrsqrt.pop %v935
      %v968 = vrsqrt.pop %v936
      %v969 = vrsqrt.pop %v937
      %v970 = vrsqrt.pop %v938
      %v971 = vrsqrt.pop %v939
      %v972 = vrsqrt.pop %v940
      %v973 = vrsqrt.pop %v941
      %v974 = vrsqrt.pop %v942
      %v975 = vrsqrt.pop %v943
      %v976 = vrsqrt.pop %v944
      %v977 = vrsqrt.pop %v945
      %v978 = vrsqrt.pop %v946
      %v979 = vrsqrt.pop %v947
      %v980 = vrsqrt.pop %v948
      %v981 = vrsqrt.pop %v949
      %v982 = vrsqrt.pop %v950
      %v983 = vrsqrt.pop %v951
      %v984 = vrsqrt.pop %v952
      %v985 = vrsqrt.pop %v953
      %v986 = vrsqrt.pop %v954
      %v987 = vrsqrt.pop %v955
      %v988 = vrsqrt.pop %v956
      %v989 = vrsqrt.pop %v957
      %v990 = vrsqrt.pop %v958
      %v991 = vrsqrt.pop %v959
      %v992 = vrsqrt.pop %v960
      %v993 = vrsqrt.pop %v961
      %v994 = vrsqrt.pop %v962
      %v995 = vrsqrt.pop %v963
      %v996 = vmul.f32 %v900, %v964
      %v997 = vmul.f32 %v901, %v965
      %v998 = vmul.f32 %v902, %v966
      %v999 = vmul.f32 %v903, %v967
      %v1000 = vmul.f32 %v904, %v968
      %v1001 = vmul.f32 %v905, %v969
      %v1002 = vmul.f32 %v906, %v970
      %v1003 = vmul.f32 %v907, %v971
      %v1004 = vmul.f32 %v908, %v972
      %v1005 = vmul.f32 %v909, %v973
      %v1006 = vmul.f32 %v910, %v974
      %v1007 = vmul.f32 %v911, %v975
      %v1008 = vmul.f32 %v912, %v976
      %v1009 = vmul.f32 %v913, %v977
      %v1010 = vmul.f32 %v914, %v978
      %v1011 = vmul.f32 %v915, %v979
      %v1012 = vmul.f32 %v916, %v980
      %v1013 = vmul.f32 %v917, %v981
      %v1014 = vmul.f32 %v918, %v982
      %v1015 = vmul.f32 %v919, %v983
      %v1016 = vmul.f32 %v920, %v984
      %v1017 = vmul.f32 %v921, %v985
      %v1018 = vmul.f32 %v922, %v986
      %v1019 = vmul.f32 %v923, %v987
      %v1020 = vmul.f32 %v924, %v988
      %v1021 = vmul.f32 %v925, %v989
      %v1022 = vmul.f32 %v926, %v990
      %v1023 = vmul.f32 %v927, %v991
      %v1024 = vmul.f32 %v928, %v992
      %v1025 = vmul.f32 %v929, %v993
      %v1026 = vmul.f32 %v930, %v994
      %v1027 = vmul.f32 %v931, %v995
      %v1028 = vld [vmem:[%s2] sm:$0x1]
      %v1030 = vlaneseq
      %v1031 = vshrl.u32 %v1030, 7
      %v1032 = vsub.s32 0, %v1031
      %v1033 = vrot.slane %v1028, %v1032
      %v1035 = vmul.f32 %v996, %v1033
      %v1036 = vmul.f32 %v997, %v1033
      %v1037 = vmul.f32 %v998, %v1033
      %v1038 = vmul.f32 %v999, %v1033
      %v1039 = vmul.f32 %v1000, %v1033
      %v1040 = vmul.f32 %v1001, %v1033
      %v1041 = vmul.f32 %v1002, %v1033
      %v1042 = vmul.f32 %v1003, %v1033
      %v1043 = vmul.f32 %v1004, %v1033
      %v1044 = vmul.f32 %v1005, %v1033
      %v1045 = vmul.f32 %v1006, %v1033
      %v1046 = vmul.f32 %v1007, %v1033
      %v1047 = vmul.f32 %v1008, %v1033
      %v1048 = vmul.f32 %v1009, %v1033
      %v1049 = vmul.f32 %v1010, %v1033
      %v1050 = vmul.f32 %v1011, %v1033
      %v1051 = vmul.f32 %v1012, %v1033
      %v1052 = vmul.f32 %v1013, %v1033
      %v1053 = vmul.f32 %v1014, %v1033
      %v1054 = vmul.f32 %v1015, %v1033
      %v1055 = vmul.f32 %v1016, %v1033
      %v1056 = vmul.f32 %v1017, %v1033
      %v1057 = vmul.f32 %v1018, %v1033
      %v1058 = vmul.f32 %v1019, %v1033
      %v1059 = vmul.f32 %v1020, %v1033
      %v1060 = vmul.f32 %v1021, %v1033
      %v1061 = vmul.f32 %v1022, %v1033
      %v1062 = vmul.f32 %v1023, %v1033
      %v1063 = vmul.f32 %v1024, %v1033
      %v1064 = vmul.f32 %v1025, %v1033
      %v1065 = vmul.f32 %v1026, %v1033
      %v1066 = vmul.f32 %v1027, %v1033
      %v1067 = vld [vmem:[%s3] sm:$0x1]
      %v1069 = vlaneseq
      %v1070 = vshrl.u32 %v1069, 7
      %v1071 = vsub.s32 0, %v1070
      %v1072 = vrot.slane %v1067, %v1071
      %v1074 = vadd.f32 %v1035, %v1072
      %v1075 = vadd.f32 %v1036, %v1072
      %v1076 = vadd.f32 %v1037, %v1072
      %v1077 = vadd.f32 %v1038, %v1072
      %v1078 = vadd.f32 %v1039, %v1072
      %v1079 = vadd.f32 %v1040, %v1072
      %v1080 = vadd.f32 %v1041, %v1072
      %v1081 = vadd.f32 %v1042, %v1072
      %v1082 = vadd.f32 %v1043, %v1072
      %v1083 = vadd.f32 %v1044, %v1072
      %v1084 = vadd.f32 %v1045, %v1072
      %v1085 = vadd.f32 %v1046, %v1072
      %v1086 = vadd.f32 %v1047, %v1072
      %v1087 = vadd.f32 %v1048, %v1072
      %v1088 = vadd.f32 %v1049, %v1072
      %v1089 = vadd.f32 %v1050, %v1072
      %v1090 = vadd.f32 %v1051, %v1072
      %v1091 = vadd.f32 %v1052, %v1072
      %v1092 = vadd.f32 %v1053, %v1072
      %v1093 = vadd.f32 %v1054, %v1072
      %v1094 = vadd.f32 %v1055, %v1072
      %v1095 = vadd.f32 %v1056, %v1072
      %v1096 = vadd.f32 %v1057, %v1072
      %v1097 = vadd.f32 %v1058, %v1072
      %v1098 = vadd.f32 %v1059, %v1072
      %v1099 = vadd.f32 %v1060, %v1072
      %v1100 = vadd.f32 %v1061, %v1072
      %v1101 = vadd.f32 %v1062, %v1072
      %v1102 = vadd.f32 %v1063, %v1072
      %v1103 = vadd.f32 %v1064, %v1072
      %v1104 = vadd.f32 %v1065, %v1072
      %v1105 = vadd.f32 %v1066, %v1072
      %v1106 = vxor.u32 %v1074, 2147483648
      %v1107 = vxor.u32 %v1075, 2147483648
      %v1108 = vxor.u32 %v1076, 2147483648
      %v1109 = vxor.u32 %v1077, 2147483648
      %v1110 = vxor.u32 %v1078, 2147483648
      %v1111 = vxor.u32 %v1079, 2147483648
      %v1112 = vxor.u32 %v1080, 2147483648
      %v1113 = vxor.u32 %v1081, 2147483648
      %v1114 = vxor.u32 %v1082, 2147483648
      %v1115 = vxor.u32 %v1083, 2147483648
      %v1116 = vxor.u32 %v1084, 2147483648
      %v1117 = vxor.u32 %v1085, 2147483648
      %v1118 = vxor.u32 %v1086, 2147483648
      %v1119 = vxor.u32 %v1087, 2147483648
      %v1120 = vxor.u32 %v1088, 2147483648
      %v1121 = vxor.u32 %v1089, 2147483648
      %v1122 = vxor.u32 %v1090, 2147483648
      %v1123 = vxor.u32 %v1091, 2147483648
      %v1124 = vxor.u32 %v1092, 2147483648
      %v1125 = vxor.u32 %v1093, 2147483648
      %v1126 = vxor.u32 %v1094, 2147483648
      %v1127 = vxor.u32 %v1095, 2147483648
      %v1128 = vxor.u32 %v1096, 2147483648
      %v1129 = vxor.u32 %v1097, 2147483648
      %v1130 = vxor.u32 %v1098, 2147483648
      %v1131 = vxor.u32 %v1099, 2147483648
      %v1132 = vxor.u32 %v1100, 2147483648
      %v1133 = vxor.u32 %v1101, 2147483648
      %v1134 = vxor.u32 %v1102, 2147483648
      %v1135 = vxor.u32 %v1103, 2147483648
      %v1136 = vxor.u32 %v1104, 2147483648
      %v1137 = vxor.u32 %v1105, 2147483648
      %v1138 = vmul.f32 %v1106, 1.442695
      %v1139 = vpow.pop %v1138
      %v1140 = vmul.f32 %v1107, 1.442695
      %v1141 = vpow.pop %v1140
      %v1142 = vmul.f32 %v1108, 1.442695
      %v1143 = vpow.pop %v1142
      %v1144 = vmul.f32 %v1109, 1.442695
      %v1145 = vpow.pop %v1144
      %v1146 = vmul.f32 %v1110, 1.442695
      %v1147 = vpow.pop %v1146
      %v1148 = vmul.f32 %v1111, 1.442695
      %v1149 = vpow.pop %v1148
      %v1150 = vmul.f32 %v1112, 1.442695
      %v1151 = vpow.pop %v1150
      %v1152 = vmul.f32 %v1113, 1.442695
      %v1153 = vpow.pop %v1152
      %v1154 = vmul.f32 %v1114, 1.442695
      %v1155 = vpow.pop %v1154
      %v1156 = vmul.f32 %v1115, 1.442695
      %v1157 = vpow.pop %v1156
      %v1158 = vmul.f32 %v1116, 1.442695
      %v1159 = vpow.pop %v1158
      %v1160 = vmul.f32 %v1117, 1.442695
      %v1161 = vpow.pop %v1160
      %v1162 = vmul.f32 %v1118, 1.442695
      %v1163 = vpow.pop %v1162
      %v1164 = vmul.f32 %v1119, 1.442695
      %v1165 = vpow.pop %v1164
      %v1166 = vmul.f32 %v1120, 1.442695
      %v1167 = vpow.pop %v1166
      %v1168 = vmul.f32 %v1121, 1.442695
      %v1169 = vpow.pop %v1168
      %v1170 = vmul.f32 %v1122, 1.442695
      %v1171 = vpow.pop %v1170
      %v1172 = vmul.f32 %v1123, 1.442695
      %v1173 = vpow.pop %v1172
      %v1174 = vmul.f32 %v1124, 1.442695
      %v1175 = vpow.pop %v1174
      %v1176 = vmul.f32 %v1125, 1.442695
      %v1177 = vpow.pop %v1176
      %v1178 = vmul.f32 %v1126, 1.442695
      %v1179 = vpow.pop %v1178
      %v1180 = vmul.f32 %v1127, 1.442695
      %v1181 = vpow.pop %v1180
      %v1182 = vmul.f32 %v1128, 1.442695
      %v1183 = vpow.pop %v1182
      %v1184 = vmul.f32 %v1129, 1.442695
      %v1185 = vpow.pop %v1184
      %v1186 = vmul.f32 %v1130, 1.442695
      %v1187 = vpow.pop %v1186
      %v1188 = vmul.f32 %v1131, 1.442695
      %v1189 = vpow.pop %v1188
      %v1190 = vmul.f32 %v1132, 1.442695
      %v1191 = vpow.pop %v1190
      %v1192 = vmul.f32 %v1133, 1.442695
      %v1193 = vpow.pop %v1192
      %v1194 = vmul.f32 %v1134, 1.442695
      %v1195 = vpow.pop %v1194
      %v1196 = vmul.f32 %v1135, 1.442695
      %v1197 = vpow.pop %v1196
      %v1198 = vmul.f32 %v1136, 1.442695
      %v1199 = vpow.pop %v1198
      %v1200 = vmul.f32 %v1137, 1.442695
      %v1201 = vpow.pop %v1200
      %v1202 = vadd.f32 %v1139, 1.0
      %v1203 = vadd.f32 %v1141, 1.0
      %v1204 = vadd.f32 %v1143, 1.0
      %v1205 = vadd.f32 %v1145, 1.0
      %v1206 = vadd.f32 %v1147, 1.0
      %v1207 = vadd.f32 %v1149, 1.0
      %v1208 = vadd.f32 %v1151, 1.0
      %v1209 = vadd.f32 %v1153, 1.0
      %v1210 = vadd.f32 %v1155, 1.0
      %v1211 = vadd.f32 %v1157, 1.0
      %v1212 = vadd.f32 %v1159, 1.0
      %v1213 = vadd.f32 %v1161, 1.0
      %v1214 = vadd.f32 %v1163, 1.0
      %v1215 = vadd.f32 %v1165, 1.0
      %v1216 = vadd.f32 %v1167, 1.0
      %v1217 = vadd.f32 %v1169, 1.0
      %v1218 = vadd.f32 %v1171, 1.0
      %v1219 = vadd.f32 %v1173, 1.0
      %v1220 = vadd.f32 %v1175, 1.0
      %v1221 = vadd.f32 %v1177, 1.0
      %v1222 = vadd.f32 %v1179, 1.0
      %v1223 = vadd.f32 %v1181, 1.0
      %v1224 = vadd.f32 %v1183, 1.0
      %v1225 = vadd.f32 %v1185, 1.0
      %v1226 = vadd.f32 %v1187, 1.0
      %v1227 = vadd.f32 %v1189, 1.0
      %v1228 = vadd.f32 %v1191, 1.0
      %v1229 = vadd.f32 %v1193, 1.0
      %v1230 = vadd.f32 %v1195, 1.0
      %v1231 = vadd.f32 %v1197, 1.0
      %v1232 = vadd.f32 %v1199, 1.0
      %v1233 = vadd.f32 %v1201, 1.0
      %v1234 = vrcp.pop %v1202
      %v1235 = vmul.f32 1.0, %v1234
      %v1236 = vrcp.pop %v1203
      %v1237 = vmul.f32 1.0, %v1236
      %v1238 = vrcp.pop %v1204
      %v1239 = vmul.f32 1.0, %v1238
      %v1240 = vrcp.pop %v1205
      %v1241 = vmul.f32 1.0, %v1240
      %v1242 = vrcp.pop %v1206
      %v1243 = vmul.f32 1.0, %v1242
      %v1244 = vrcp.pop %v1207
      %v1245 = vmul.f32 1.0, %v1244
      %v1246 = vrcp.pop %v1208
      %v1247 = vmul.f32 1.0, %v1246
      %v1248 = vrcp.pop %v1209
      %v1249 = vmul.f32 1.0, %v1248
      %v1250 = vrcp.pop %v1210
      %v1251 = vmul.f32 1.0, %v1250
      %v1252 = vrcp.pop %v1211
      %v1253 = vmul.f32 1.0, %v1252
      %v1254 = vrcp.pop %v1212
      %v1255 = vmul.f32 1.0, %v1254
      %v1256 = vrcp.pop %v1213
      %v1257 = vmul.f32 1.0, %v1256
      %v1258 = vrcp.pop %v1214
      %v1259 = vmul.f32 1.0, %v1258
      %v1260 = vrcp.pop %v1215
      %v1261 = vmul.f32 1.0, %v1260
      %v1262 = vrcp.pop %v1216
      %v1263 = vmul.f32 1.0, %v1262
      %v1264 = vrcp.pop %v1217
      %v1265 = vmul.f32 1.0, %v1264
      %v1266 = vrcp.pop %v1218
      %v1267 = vmul.f32 1.0, %v1266
      %v1268 = vrcp.pop %v1219
      %v1269 = vmul.f32 1.0, %v1268
      %v1270 = vrcp.pop %v1220
      %v1271 = vmul.f32 1.0, %v1270
      %v1272 = vrcp.pop %v1221
      %v1273 = vmul.f32 1.0, %v1272
      %v1274 = vrcp.pop %v1222
      %v1275 = vmul.f32 1.0, %v1274
      %v1276 = vrcp.pop %v1223
      %v1277 = vmul.f32 1.0, %v1276
      %v1278 = vrcp.pop %v1224
      %v1279 = vmul.f32 1.0, %v1278
      %v1280 = vrcp.pop %v1225
      %v1281 = vmul.f32 1.0, %v1280
      %v1282 = vrcp.pop %v1226
      %v1283 = vmul.f32 1.0, %v1282
      %v1284 = vrcp.pop %v1227
      %v1285 = vmul.f32 1.0, %v1284
      %v1286 = vrcp.pop %v1228
      %v1287 = vmul.f32 1.0, %v1286
      %v1288 = vrcp.pop %v1229
      %v1289 = vmul.f32 1.0, %v1288
      %v1290 = vrcp.pop %v1230
      %v1291 = vmul.f32 1.0, %v1290
      %v1292 = vrcp.pop %v1231
      %v1293 = vmul.f32 1.0, %v1292
      %v1294 = vrcp.pop %v1232
      %v1295 = vmul.f32 1.0, %v1294
      %v1296 = vrcp.pop %v1233
      %v1297 = vmul.f32 1.0, %v1296
      %v1298 = vmul.f32 %v1074, %v1235
      %v1299 = vmul.f32 %v1075, %v1237
      %v1300 = vmul.f32 %v1076, %v1239
      %v1301 = vmul.f32 %v1077, %v1241
      %v1302 = vmul.f32 %v1078, %v1243
      %v1303 = vmul.f32 %v1079, %v1245
      %v1304 = vmul.f32 %v1080, %v1247
      %v1305 = vmul.f32 %v1081, %v1249
      %v1306 = vmul.f32 %v1082, %v1251
      %v1307 = vmul.f32 %v1083, %v1253
      %v1308 = vmul.f32 %v1084, %v1255
      %v1309 = vmul.f32 %v1085, %v1257
      %v1310 = vmul.f32 %v1086, %v1259
      %v1311 = vmul.f32 %v1087, %v1261
      %v1312 = vmul.f32 %v1088, %v1263
      %v1313 = vmul.f32 %v1089, %v1265
      %v1314 = vmul.f32 %v1090, %v1267
      %v1315 = vmul.f32 %v1091, %v1269
      %v1316 = vmul.f32 %v1092, %v1271
      %v1317 = vmul.f32 %v1093, %v1273
      %v1318 = vmul.f32 %v1094, %v1275
      %v1319 = vmul.f32 %v1095, %v1277
      %v1320 = vmul.f32 %v1096, %v1279
      %v1321 = vmul.f32 %v1097, %v1281
      %v1322 = vmul.f32 %v1098, %v1283
      %v1323 = vmul.f32 %v1099, %v1285
      %v1324 = vmul.f32 %v1100, %v1287
      %v1325 = vmul.f32 %v1101, %v1289
      %v1326 = vmul.f32 %v1102, %v1291
      %v1327 = vmul.f32 %v1103, %v1293
      %v1328 = vmul.f32 %v1104, %v1295
      %v1329 = vmul.f32 %v1105, %v1297
      %v1330 = vpack.c.bf16 %v1299, %v1298
      %v1331 = vpack.c.bf16 %v1301, %v1300
      %v1332 = vpack.c.bf16 %v1303, %v1302
      %v1333 = vpack.c.bf16 %v1305, %v1304
      %v1334 = vpack.c.bf16 %v1307, %v1306
      %v1335 = vpack.c.bf16 %v1309, %v1308
      %v1336 = vpack.c.bf16 %v1311, %v1310
      %v1337 = vpack.c.bf16 %v1313, %v1312
      %v1338 = vpack.c.bf16 %v1315, %v1314
      %v1339 = vpack.c.bf16 %v1317, %v1316
      %v1340 = vpack.c.bf16 %v1319, %v1318
      %v1341 = vpack.c.bf16 %v1321, %v1320
      %v1342 = vpack.c.bf16 %v1323, %v1322
      %v1343 = vpack.c.bf16 %v1325, %v1324
      %v1344 = vpack.c.bf16 %v1327, %v1326
      %v1345 = vpack.c.bf16 %v1329, %v1328
      %v1362 = vunpack.c.l.b16 %v1330
      %v1363 = vunpack.c.h.b16 %v1330
      %v1364 = vunpack.c.l.b16 %v1331
      %v1365 = vunpack.c.h.b16 %v1331
      %v1366 = vunpack.c.l.b16 %v1332
      %v1367 = vunpack.c.h.b16 %v1332
      %v1368 = vunpack.c.l.b16 %v1333
      %v1369 = vunpack.c.h.b16 %v1333
      %v1370 = vunpack.c.l.b16 %v1334
      %v1371 = vunpack.c.h.b16 %v1334
      %v1372 = vunpack.c.l.b16 %v1335
      %v1373 = vunpack.c.h.b16 %v1335
      %v1374 = vunpack.c.l.b16 %v1336
      %v1375 = vunpack.c.h.b16 %v1336
      %v1376 = vunpack.c.l.b16 %v1337
      %v1377 = vunpack.c.h.b16 %v1337
      %v1378 = vunpack.c.l.b16 %v1338
      %v1379 = vunpack.c.h.b16 %v1338
      %v1380 = vunpack.c.l.b16 %v1339
      %v1381 = vunpack.c.h.b16 %v1339
      %v1382 = vunpack.c.l.b16 %v1340
      %v1383 = vunpack.c.h.b16 %v1340
      %v1384 = vunpack.c.l.b16 %v1341
      %v1385 = vunpack.c.h.b16 %v1341
      %v1386 = vunpack.c.l.b16 %v1342
      %v1387 = vunpack.c.h.b16 %v1342
      %v1388 = vunpack.c.l.b16 %v1343
      %v1389 = vunpack.c.h.b16 %v1343
      %v1390 = vunpack.c.l.b16 %v1344
      %v1391 = vunpack.c.h.b16 %v1344
      %v1392 = vunpack.c.l.b16 %v1345
      %v1393 = vunpack.c.h.b16 %v1345
      %v1394 = vpack.c.b16 %v1362, %v1362
      %v1395 = vpack.c.b16 %v1363, %v1363
      %v1396 = vpack.c.b16 %v1364, %v1364
      %v1397 = vpack.c.b16 %v1365, %v1365
      %v1398 = vpack.c.b16 %v1366, %v1366
      %v1399 = vpack.c.b16 %v1367, %v1367
      %v1400 = vpack.c.b16 %v1368, %v1368
      %v1401 = vpack.c.b16 %v1369, %v1369
      %v1402 = vpack.c.b16 %v1370, %v1370
      %v1403 = vpack.c.b16 %v1371, %v1371
      %v1404 = vpack.c.b16 %v1372, %v1372
      %v1405 = vpack.c.b16 %v1373, %v1373
      %v1406 = vpack.c.b16 %v1374, %v1374
      %v1407 = vpack.c.b16 %v1375, %v1375
      %v1408 = vpack.c.b16 %v1376, %v1376
      %v1409 = vpack.c.b16 %v1377, %v1377
      %v1410 = vpack.c.b16 %v1378, %v1378
      %v1411 = vpack.c.b16 %v1379, %v1379
      %v1412 = vpack.c.b16 %v1380, %v1380
      %v1413 = vpack.c.b16 %v1381, %v1381
      %v1414 = vpack.c.b16 %v1382, %v1382
      %v1415 = vpack.c.b16 %v1383, %v1383
      %v1416 = vpack.c.b16 %v1384, %v1384
      %v1417 = vpack.c.b16 %v1385, %v1385
      %v1418 = vpack.c.b16 %v1386, %v1386
      %v1419 = vpack.c.b16 %v1387, %v1387
      %v1420 = vpack.c.b16 %v1388, %v1388
      %v1421 = vpack.c.b16 %v1389, %v1389
      %v1422 = vpack.c.b16 %v1390, %v1390
      %v1423 = vpack.c.b16 %v1391, %v1391
      %v1424 = vpack.c.b16 %v1392, %v1392
      %v1425 = vpack.c.b16 %v1393, %v1393
      %1458 = vst [vmem:[%s255] sm:$0xf] %v1394
      %1459 = vst [vmem:[%s255 + $0x4] sm:$0xf] %v1395
      %1460 = vst [vmem:[%s255 + $0x8] sm:$0xf] %v1396
      %1461 = vst [vmem:[%s255 + $0xc] sm:$0xf] %v1397
      %1462 = vst [vmem:[%s255 + $0x10] sm:$0xf] %v1398
      %1463 = vst [vmem:[%s255 + $0x14] sm:$0xf] %v1399
      %1464 = vst [vmem:[%s255 + $0x18] sm:$0xf] %v1400
      %1465 = vst [vmem:[%s255 + $0x1c] sm:$0xf] %v1401
      %1466 = vst [vmem:[%s255 + $0x20] sm:$0xf] %v1402
      %1467 = vst [vmem:[%s255 + $0x24] sm:$0xf] %v1403
      %1468 = vst [vmem:[%s255 + $0x28] sm:$0xf] %v1404
      %1469 = vst [vmem:[%s255 + $0x2c] sm:$0xf] %v1405
      %1470 = vst [vmem:[%s255 + $0x30] sm:$0xf] %v1406
      %1471 = vst [vmem:[%s255 + $0x34] sm:$0xf] %v1407
      %1472 = vst [vmem:[%s255 + $0x38] sm:$0xf] %v1408
      %1473 = vst [vmem:[%s255 + $0x3c] sm:$0xf] %v1409
      %1474 = vst [vmem:[%s255 + $0x40] sm:$0xf] %v1410
      %1475 = vst [vmem:[%s255 + $0x44] sm:$0xf] %v1411
      %1476 = vst [vmem:[%s255 + $0x48] sm:$0xf] %v1412
      %1477 = vst [vmem:[%s255 + $0x4c] sm:$0xf] %v1413
      %1478 = vst [vmem:[%s255 + $0x50] sm:$0xf] %v1414
      %1479 = vst [vmem:[%s255 + $0x54] sm:$0xf] %v1415
      %1480 = vst [vmem:[%s255 + $0x58] sm:$0xf] %v1416
      %1481 = vst [vmem:[%s255 + $0x5c] sm:$0xf] %v1417
      %1482 = vst [vmem:[%s255 + $0x60] sm:$0xf] %v1418
      %1483 = vst [vmem:[%s255 + $0x64] sm:$0xf] %v1419
      %1484 = vst [vmem:[%s255 + $0x68] sm:$0xf] %v1420
      %1485 = vst [vmem:[%s255 + $0x6c] sm:$0xf] %v1421
      %1486 = vst [vmem:[%s255 + $0x70] sm:$0xf] %v1422
      %1487 = vst [vmem:[%s255 + $0x74] sm:$0xf] %v1423
      %1488 = vst [vmem:[%s255 + $0x78] sm:$0xf] %v1424
      %1489 = vst [vmem:[%s255 + $0x7c] sm:$0xf] %v1425
      %s1490 = smul.u32 32, %s20
      %p1491 = scmp.lt.s32.totalorder %s19, 3
      %s1492 = scalar_select %p1491, %s19, 3
      %p1493 = scmp.lt.s32.totalorder %s1490, 31
      %s1494 = scalar_select %p1493, %s1490, 31
      %s1495 = smul.addr %s1492, 32
      %s1496 = sadd.s32 %s1494, %s1495
      %s1497 = smul.addr %s1496, 4
      %s1498 = scalar_lea.vmem %s4, %s1497
      // Predicated region
      $region37: #{cnn_decoder_forward.7} parent=35 // pred_check
        %p1499 = pneg %p143
      $region38: #{cnn_decoder_forward.7} parent=35 // pred_check_branch
        %1501 = sbr.rel (%p1499) target = $region40
      $region39: #{cnn_decoder_forward.7} parent=35 // pred_region
        %s1502 = smul.u32 32, %s20
      $region40: #{cnn_decoder_forward.7} parent=35 // pred_fallthru
        _
    $region36: #{cnn_decoder_forward.7} parent=5 // pred_fallthru
      _
    %p1503 = scmp.le.s32.totalorder 2, %s10
    // Predicated region
    $region41: #{cnn_decoder_forward.7} parent=5 // pred_check
      %p1504 = pneg %p1503
    $region42: #{cnn_decoder_forward.7} parent=5 // pred_check_branch
      %1506 = sbr.rel (%p1504) target = $region44
    $region43: #{cnn_decoder_forward.7} parent=5 // pred_region
      %s1507 = ssub.s32 %s10, 2
      // Predicated region
      $region45: #{cnn_decoder_forward.7} parent=43 // pred_check
        %p1508 = pneg %p149
      $region46: #{cnn_decoder_forward.7} parent=43 // pred_check_branch
        %1510 = sbr.rel (%p1508) target = $region48
      $region47: #{cnn_decoder_forward.7} parent=43 // pred_region
        %s1511 = smul.u32 32, %s22
        %p1512 = scmp.lt.s32.totalorder %s21, 3
        %s1513 = scalar_select %p1512, %s21, 3
        %p1514 = scmp.lt.s32.totalorder %s1511, 31
        %s1515 = scalar_select %p1514, %s1511, 31
        %s1516 = smul.addr %s1513, 32
        %s1517 = sadd.s32 %s1515, %s1516
        %s1518 = smul.addr %s1517, 4
        %s1519 = scalar_lea.vmem %s4, %s1518
      $region48: #{cnn_decoder_forward.7} parent=43 // pred_fallthru
        _
    $region44: #{cnn_decoder_forward.7} parent=5 // pred_fallthru
      _
  $region6: #{cnn_decoder_forward.7} parent=0 // loop_footer
    %s14 = sadd.s32 1, %s10
  $region7: #{cnn_decoder_forward.7} parent=0 // loop_footer_branch
    %9 = sbr.rel target = $region3
  $region8: #{cnn_decoder_forward.7} parent=0 // loop_exit
    _

// kernel: cnn_decoder_forward.8
$region0: #{cnn_decoder_forward.8}
  #allocation0 [shape = 'u32[]', space=smem, size = 0x4, offset = 0x4, fixed_abs, tag = 'smem constant byte address 0x4 - core index']
  #allocation1 [shape = 'u32[144,128]{1,0:T(1,128)}', space=vmem, size = 0x12000, scoped, tag = 'internal scratch']
  %s0 = inlined_call_operand.vmem [shape: bf16[4,1024,32], index: 0, kind: input, shape index: {}]
  %s1 = inlined_call_operand.vmem [shape: bf16[4,32,128], index: 1, kind: input, shape index: {}]
  %s2 = inlined_call_operand.vmem [shape: f32[1,128], index: 2, kind: input, shape index: {}]
  %s3 = inlined_call_operand.vmem [shape: f32[1,128], index: 3, kind: input, shape index: {}]
  %s4 = inlined_call_operand.vmem [shape: bf16[4,1024,128], index: 4, kind: output, shape index: {}]
  %s5 = sld [smem:[#allocation0]]
  $region49: #{cnn_decoder_forward.8} parent=0
    _
  %s7 = ssub.s32 1, %s5
  %s8 = scalar_select 0, %s7, %s5
  loop: start=0, step=1, limit=18
  $region2: #{cnn_decoder_forward.8} parent=0 // loop_pre_header
    _
  $region3: #{cnn_decoder_forward.8} parent=0 // loop_header
    %s10 = sphi 0, %s14
    %p11 = scmp.ge.s32.totalorder %s10, 18
    %s17 = sphi 0, %s29
    %s18 = sphi 0, %s25
    %s19 = sphi 0, %s17
    %s20 = sphi 0, %s18
    %s21 = sphi 0, %s19
    %s22 = sphi 0, %s20
    %s34 = sphi 0, %s36
    %s37 = sphi 0, %s34
    %s38 = sphi 0, %s37
    %s54 = sphi 0, %s38
    %s60 = sphi 0, %s62
    %s63 = sphi 0, %s60
    %s64 = sphi 0, %s63
    %s80 = sphi 0, %s64
    %s84 = sphi 0, %s84
    %s86 = sphi 0, %s84
    %s87 = sphi 0, %s86
    %s101 = sphi 0, %s87
    %s105 = sphi 0, %s105
    %s107 = sphi 0, %s105
    %s108 = sphi 0, %s107
    %s122 = sphi 0, %s108
    %s130 = sphi 0, %s132
    %s133 = sphi 0, %s130
    %s134 = sphi 0, %s133
    %s150 = sphi 0, %s134
  $region4: #{cnn_decoder_forward.8} parent=0 // loop_header_branch
    %13 = sbr.rel (%p11) target = $region8
  $region5: #{cnn_decoder_forward.8} parent=0 // loop_body
    %s15 = ssub.s32 %s10, 1
    %s16 = ssub.s32 %s10, 2
    %s23 = sadd.s32 1, %s18
    %p24 = scmp.ge.s32.totalorder %s23, 4
    %s25 = scalar_select %p24, 0, %s23
    %s26 = sadd.s32 1, %s17
    %s27 = scalar_select %p24, %s26, %s17
    %p28 = scmp.ge.s32.totalorder %s27, 4
    %s29 = scalar_select %p28, 0, %s27
    %s30 = ssub.s32 %s17, %s29
    %s31 = ssub.s32 %s18, %s25
    %s32 = sor.u32 %s30, %s31
    %p33 = scmp.eq.s32.totalorder %s32, 0
    %s35 = sadd.s32 %s34, 1
    %s36 = scalar_select %p33, %s34, %s35
    %p39 = pneg %p33
    %p40 = scmp.eq.s32.totalorder %s10, 15
    %p41 = por %p39, %p40
    %p42 = scmp.ne.s32.totalorder %s34, %s37
    %p43 = scmp.eq.s32.totalorder %s10, 0
    %p44 = por %p42, %p43
    %p45 = scmp.ne.s32.totalorder %s34, %s37
    %p46 = scmp.eq.s32.totalorder %s15, 15
    %p47 = por %p45, %p46
    %p48 = scmp.ne.s32.totalorder %s37, %s38
    %p49 = scmp.eq.s32.totalorder %s15, 0
    %p50 = por %p48, %p49
    %p51 = scmp.ne.s32.totalorder %s37, %s38
    %p52 = scmp.eq.s32.totalorder %s16, 15
    %p53 = por %p51, %p52
    %p55 = scmp.ne.s32.totalorder %s38, %s54
    %p56 = scmp.eq.s32.totalorder %s16, 0
    %p57 = por %p55, %p56
    %s58 = ssub.s32 %s17, %s29
    %p59 = scmp.eq.s32.totalorder %s58, 0
    %s61 = sadd.s32 %s60, 1
    %s62 = scalar_select %p59, %s60, %s61
    %p65 = pneg %p59
    %p66 = scmp.eq.s32.totalorder %s10, 15
    %p67 = por %p65, %p66
    %p68 = scmp.ne.s32.totalorder %s60, %s63
    %p69 = scmp.eq.s32.totalorder %s10, 0
    %p70 = por %p68, %p69
    %p71 = scmp.ne.s32.totalorder %s60, %s63
    %p72 = scmp.eq.s32.totalorder %s15, 15
    %p73 = por %p71, %p72
    %p74 = scmp.ne.s32.totalorder %s63, %s64
    %p75 = scmp.eq.s32.totalorder %s15, 0
    %p76 = por %p74, %p75
    %p77 = scmp.ne.s32.totalorder %s63, %s64
    %p78 = scmp.eq.s32.totalorder %s16, 15
    %p79 = por %p77, %p78
    %p81 = scmp.ne.s32.totalorder %s64, %s80
    %p82 = scmp.eq.s32.totalorder %s16, 0
    %p83 = por %p81, %p82
    %s85 = sadd.s32 %s84, 1
    %p88 = scmp.eq.s32.totalorder %s10, 15
    %p89 = scmp.ne.s32.totalorder %s84, %s86
    %p90 = scmp.eq.s32.totalorder %s10, 0
    %p91 = por %p89, %p90
    %p92 = scmp.ne.s32.totalorder %s84, %s86
    %p93 = scmp.eq.s32.totalorder %s15, 15
    %p94 = por %p92, %p93
    %p95 = scmp.ne.s32.totalorder %s86, %s87
    %p96 = scmp.eq.s32.totalorder %s15, 0
    %p97 = por %p95, %p96
    %p98 = scmp.ne.s32.totalorder %s86, %s87
    %p99 = scmp.eq.s32.totalorder %s16, 15
    %p100 = por %p98, %p99
    %p102 = scmp.ne.s32.totalorder %s87, %s101
    %p103 = scmp.eq.s32.totalorder %s16, 0
    %p104 = por %p102, %p103
    %s106 = sadd.s32 %s105, 1
    %p109 = scmp.eq.s32.totalorder %s10, 15
    %p110 = scmp.ne.s32.totalorder %s105, %s107
    %p111 = scmp.eq.s32.totalorder %s10, 0
    %p112 = por %p110, %p111
    %p113 = scmp.ne.s32.totalorder %s105, %s107
    %p114 = scmp.eq.s32.totalorder %s15, 15
    %p115 = por %p113, %p114
    %p116 = scmp.ne.s32.totalorder %s107, %s108
    %p117 = scmp.eq.s32.totalorder %s15, 0
    %p118 = por %p116, %p117
    %p119 = scmp.ne.s32.totalorder %s107, %s108
    %p120 = scmp.eq.s32.totalorder %s16, 15
    %p121 = por %p119, %p120
    %p123 = scmp.ne.s32.totalorder %s108, %s122
    %p124 = scmp.eq.s32.totalorder %s16, 0
    %p125 = por %p123, %p124
    %s126 = ssub.s32 %s17, %s29
    %s127 = ssub.s32 %s18, %s25
    %s128 = sor.u32 %s126, %s127
    %p129 = scmp.eq.s32.totalorder %s128, 0
    %s131 = sadd.s32 %s130, 1
    %s132 = scalar_select %p129, %s130, %s131
    %p135 = pneg %p129
    %p136 = scmp.eq.s32.totalorder %s10, 15
    %p137 = por %p135, %p136
    %p138 = scmp.ne.s32.totalorder %s130, %s133
    %p139 = scmp.eq.s32.totalorder %s10, 0
    %p140 = por %p138, %p139
    %p141 = scmp.ne.s32.totalorder %s130, %s133
    %p142 = scmp.eq.s32.totalorder %s15, 15
    %p143 = por %p141, %p142
    %p144 = scmp.ne.s32.totalorder %s133, %s134
    %p145 = scmp.eq.s32.totalorder %s15, 0
    %p146 = por %p144, %p145
    %p147 = scmp.ne.s32.totalorder %s133, %s134
    %p148 = scmp.eq.s32.totalorder %s16, 15
    %p149 = por %p147, %p148
    %p151 = scmp.ne.s32.totalorder %s134, %s150
    %p152 = scmp.eq.s32.totalorder %s16, 0
    %p153 = por %p151, %p152
    %p154 = scmp.le.s32.totalorder 1, %s10
    %p155 = scmp.lt.s32.totalorder %s10, 17
    %p156 = pnand %p154, %p155
    %p157 = pneg %p156
    // Predicated region
    $region9: #{cnn_decoder_forward.8} parent=5 // pred_check
      _
    $region10: #{cnn_decoder_forward.8} parent=5 // pred_check_branch
      %159 = sbr.rel (%p156) target = $region12
    $region11: #{cnn_decoder_forward.8} parent=5 // pred_region
      %s160 = ssub.s32 %s10, 1
      // Predicated region
      $region13: #{cnn_decoder_forward.8} parent=11 // pred_check
        %p161 = pneg %p97
      $region14: #{cnn_decoder_forward.8} parent=11 // pred_check_branch
        %163 = sbr.rel (%p161) target = $region16
      $region15: #{cnn_decoder_forward.8} parent=11 // pred_region
        _
      $region16: #{cnn_decoder_forward.8} parent=11 // pred_fallthru
        _
      // Predicated region
      $region17: #{cnn_decoder_forward.8} parent=11 // pred_check
        %p164 = pneg %p118
      $region18: #{cnn_decoder_forward.8} parent=11 // pred_check_branch
        %166 = sbr.rel (%p164) target = $region20
      $region19: #{cnn_decoder_forward.8} parent=11 // pred_region
        _
      $region20: #{cnn_decoder_forward.8} parent=11 // pred_fallthru
        _
    $region12: #{cnn_decoder_forward.8} parent=5 // pred_fallthru
      _
    %p167 = scmp.lt.s32.totalorder %s10, 16
    // Predicated region
    $region21: #{cnn_decoder_forward.8} parent=5 // pred_check
      %p168 = pneg %p167
    $region22: #{cnn_decoder_forward.8} parent=5 // pred_check_branch
      %170 = sbr.rel (%p168) target = $region24
    $region23: #{cnn_decoder_forward.8} parent=5 // pred_region
      // Predicated region
      $region25: #{cnn_decoder_forward.8} parent=23 // pred_check
        %p171 = pneg %p44
      $region26: #{cnn_decoder_forward.8} parent=23 // pred_check_branch
        %173 = sbr.rel (%p171) target = $region28
      $region27: #{cnn_decoder_forward.8} parent=23 // pred_region
        %s174 = smul.u32 32, %s18
        %p175 = scmp.lt.s32.totalorder %s17, 3
        %s176 = scalar_select %p175, %s17, 3
        %p177 = scmp.lt.s32.totalorder %s174, 127
        %s178 = scalar_select %p177, %s174, 127
        %s179 = smul.addr %s176, 128
        %s180 = sadd.s32 %s178, %s179
        %s181 = smul.addr %s180, 4
        %s182 = scalar_lea.vmem %s0, %s181
        %s183 = smul.u32 32, %s18
      $region28: #{cnn_decoder_forward.8} parent=23 // pred_fallthru
        _
      // Predicated region
      $region29: #{cnn_decoder_forward.8} parent=23 // pred_check
        %p184 = pneg %p70
      $region30: #{cnn_decoder_forward.8} parent=23 // pred_check_branch
        %186 = sbr.rel (%p184) target = $region32
      $region31: #{cnn_decoder_forward.8} parent=23 // pred_region
        %p187 = scmp.lt.s32.totalorder %s17, 3
        %s188 = scalar_select %p187, %s17, 3
        %s189 = smul.addr %s188, 4
        %s190 = smul.addr %s189, 4
        %s191 = scalar_lea.vmem %s1, %s190
      $region32: #{cnn_decoder_forward.8} parent=23 // pred_fallthru
        _
    $region24: #{cnn_decoder_forward.8} parent=5 // pred_fallthru
      _
    %p192 = scmp.le.s32.totalorder 1, %s10
    %p193 = scmp.lt.s32.totalorder %s10, 17
    %p194 = pnand %p192, %p193
    %p195 = pneg %p194
    // Predicated region
    $region33: #{cnn_decoder_forward.8} parent=5 // pred_check
      _
    $region34: #{cnn_decoder_forward.8} parent=5 // pred_check_branch
      %197 = sbr.rel (%p194) target = $region36
    $region35: #{cnn_decoder_forward.8} parent=5 // pred_region
      %s198 = ssub.s32 %s10, 1
      %s199 = smul.u32 32, %s20
      %p200 = scmp.lt.s32.totalorder %s19, 3
      %s201 = scalar_select %p200, %s19, 3
      %p202 = scmp.lt.s32.totalorder %s199, 127
      %s203 = scalar_select %p202, %s199, 127
      %s204 = smul.addr %s201, 128
      %s205 = sadd.s32 %s203, %s204
      %s206 = smul.addr %s205, 4
      %s207 = scalar_lea.vmem %s0, %s206
      %p208 = pneg %p50
      %p209 = pneg %p47
      %p210 = scmp.lt.s32.totalorder %s19, 3
      %s211 = scalar_select %p210, %s19, 3
      %s212 = smul.addr %s211, 4
      %s213 = smul.addr %s212, 4
      %s214 = scalar_lea.vmem %s1, %s213
      %p215 = pneg %p76
      %p216 = pneg %p73
      %p217 = pneg %p97
      %p218 = pneg %p94
      %p219 = pneg %p118
      %p220 = pneg %p115
      %p221 = pneg %p146
      %p222 = pneg %p143
      %s223 = smul.u32 32, %s20
      %p224 = scmp.lt.s32.totalorder %s19, 3
      %s225 = scalar_select %p224, %s19, 3
      %p226 = scmp.lt.s32.totalorder %s223, 127
      %s227 = scalar_select %p226, %s223, 127
      %s228 = smul.addr %s225, 128
      %s229 = sadd.s32 %s227, %s228
      %s230 = smul.addr %s229, 4
      %s231 = scalar_lea.vmem %s4, %s230
      %s232 = smul.u32 32, %s20
      %p233 = scmp.lt.s32.totalorder %s19, 3
      %s234 = scalar_select %p233, %s19, 3
      %p235 = scmp.lt.s32.totalorder %s232, 127
      %s236 = scalar_select %p235, %s232, 127
      %s237 = smul.addr %s234, 128
      %s238 = sadd.s32 %s236, %s237
      %s239 = smul.addr %s238, 4
      %s240 = scalar_lea.vmem %s0, %s239
      %s241 = smul.u32 32, %s20
      %p242 = scmp.lt.s32.totalorder %s19, 3
      %s243 = scalar_select %p242, %s19, 3
      %s244 = smul.addr %s243, 4
      %s245 = smul.addr %s244, 4
      %s246 = scalar_lea.vmem %s1, %s245
      %s247 = smul.u32 32, %s20
      %p248 = scmp.lt.s32.totalorder %s19, 3
      %s249 = scalar_select %p248, %s19, 3
      %p250 = scmp.lt.s32.totalorder %s247, 127
      %s251 = scalar_select %p250, %s247, 127
      %s252 = smul.addr %s249, 128
      %s253 = sadd.s32 %s251, %s252
      %s254 = smul.addr %s253, 4
      %s255 = scalar_lea.vmem %s4, %s254
      %s256 = smul.u32 32, %s20
      %v258 = vld [vmem:[%s240] sm:$0xf]
      %v259 = vld [vmem:[%s240 + $0x4] sm:$0xf]
      %v260 = vld [vmem:[%s240 + $0x8] sm:$0xf]
      %v261 = vld [vmem:[%s240 + $0xc] sm:$0xf]
      %v262 = vld [vmem:[%s240 + $0x10] sm:$0xf]
      %v263 = vld [vmem:[%s240 + $0x14] sm:$0xf]
      %v264 = vld [vmem:[%s240 + $0x18] sm:$0xf]
      %v265 = vld [vmem:[%s240 + $0x1c] sm:$0xf]
      %v266 = vld [vmem:[%s240 + $0x20] sm:$0xf]
      %v267 = vld [vmem:[%s240 + $0x24] sm:$0xf]
      %v268 = vld [vmem:[%s240 + $0x28] sm:$0xf]
      %v269 = vld [vmem:[%s240 + $0x2c] sm:$0xf]
      %v270 = vld [vmem:[%s240 + $0x30] sm:$0xf]
      %v271 = vld [vmem:[%s240 + $0x34] sm:$0xf]
      %v272 = vld [vmem:[%s240 + $0x38] sm:$0xf]
      %v273 = vld [vmem:[%s240 + $0x3c] sm:$0xf]
      %v274 = vld [vmem:[%s240 + $0x40] sm:$0xf]
      %v275 = vld [vmem:[%s240 + $0x44] sm:$0xf]
      %v276 = vld [vmem:[%s240 + $0x48] sm:$0xf]
      %v277 = vld [vmem:[%s240 + $0x4c] sm:$0xf]
      %v278 = vld [vmem:[%s240 + $0x50] sm:$0xf]
      %v279 = vld [vmem:[%s240 + $0x54] sm:$0xf]
      %v280 = vld [vmem:[%s240 + $0x58] sm:$0xf]
      %v281 = vld [vmem:[%s240 + $0x5c] sm:$0xf]
      %v282 = vld [vmem:[%s240 + $0x60] sm:$0xf]
      %v283 = vld [vmem:[%s240 + $0x64] sm:$0xf]
      %v284 = vld [vmem:[%s240 + $0x68] sm:$0xf]
      %v285 = vld [vmem:[%s240 + $0x6c] sm:$0xf]
      %v286 = vld [vmem:[%s240 + $0x70] sm:$0xf]
      %v287 = vld [vmem:[%s240 + $0x74] sm:$0xf]
      %v288 = vld [vmem:[%s240 + $0x78] sm:$0xf]
      %v289 = vld [vmem:[%s240 + $0x7c] sm:$0xf]
      %v290 = vld [vmem:[%s246] sm:$0xf]
      %v291 = vld [vmem:[%s246 + $0x4] sm:$0xf]
      %v292 = vld [vmem:[%s246 + $0x8] sm:$0xf]
      %v293 = vld [vmem:[%s246 + $0xc] sm:$0xf]
      %v326 = vunpack.c.l.b16 %v258
      %v327 = vunpack.c.l.b16 %v259
      %v328 = vunpack.c.l.b16 %v260
      %v329 = vunpack.c.l.b16 %v261
      %v330 = vunpack.c.l.b16 %v262
      %v331 = vunpack.c.l.b16 %v263
      %v332 = vunpack.c.l.b16 %v264
      %v333 = vunpack.c.l.b16 %v265
      %v334 = vunpack.c.l.b16 %v266
      %v335 = vunpack.c.l.b16 %v267
      %v336 = vunpack.c.l.b16 %v268
      %v337 = vunpack.c.l.b16 %v269
      %v338 = vunpack.c.l.b16 %v270
      %v339 = vunpack.c.l.b16 %v271
      %v340 = vunpack.c.l.b16 %v272
      %v341 = vunpack.c.l.b16 %v273
      %v342 = vunpack.c.l.b16 %v274
      %v343 = vunpack.c.l.b16 %v275
      %v344 = vunpack.c.l.b16 %v276
      %v345 = vunpack.c.l.b16 %v277
      %v346 = vunpack.c.l.b16 %v278
      %v347 = vunpack.c.l.b16 %v279
      %v348 = vunpack.c.l.b16 %v280
      %v349 = vunpack.c.l.b16 %v281
      %v350 = vunpack.c.l.b16 %v282
      %v351 = vunpack.c.l.b16 %v283
      %v352 = vunpack.c.l.b16 %v284
      %v353 = vunpack.c.l.b16 %v285
      %v354 = vunpack.c.l.b16 %v286
      %v355 = vunpack.c.l.b16 %v287
      %v356 = vunpack.c.l.b16 %v288
      %v357 = vunpack.c.l.b16 %v289
      %v358 = vpack.c.b16 %v327, %v326
      %v359 = vpack.c.b16 %v329, %v328
      %v360 = vpack.c.b16 %v331, %v330
      %v361 = vpack.c.b16 %v333, %v332
      %v362 = vpack.c.b16 %v335, %v334
      %v363 = vpack.c.b16 %v337, %v336
      %v364 = vpack.c.b16 %v339, %v338
      %v365 = vpack.c.b16 %v341, %v340
      %v366 = vpack.c.b16 %v343, %v342
      %v367 = vpack.c.b16 %v345, %v344
      %v368 = vpack.c.b16 %v347, %v346
      %v369 = vpack.c.b16 %v349, %v348
      %v370 = vpack.c.b16 %v351, %v350
      %v371 = vpack.c.b16 %v353, %v352
      %v372 = vpack.c.b16 %v355, %v354
      %v373 = vpack.c.b16 %v357, %v356
      %v378 = vunpack.c.l.b16 %v290
      %v379 = vunpack.c.l.b16 %v291
      %v380 = vunpack.c.l.b16 %v292
      %v381 = vunpack.c.l.b16 %v293
      %v382 = vpack.c.b16 %v379, %v378
      %v383 = vpack.c.b16 %v381, %v380
      %vm386 = vcmask 261120
      %v388 = vsel %vm386, %v358, 0
      %v391 = vsel %vm386, %v359, 0
      %v394 = vsel %vm386, %v360, 0
      %v397 = vsel %vm386, %v361, 0
      %v400 = vsel %vm386, %v362, 0
      %v403 = vsel %vm386, %v363, 0
      %v406 = vsel %vm386, %v364, 0
      %v409 = vsel %vm386, %v365, 0
      %v412 = vsel %vm386, %v366, 0
      %v415 = vsel %vm386, %v367, 0
      %v418 = vsel %vm386, %v368, 0
      %v421 = vsel %vm386, %v369, 0
      %v424 = vsel %vm386, %v370, 0
      %v427 = vsel %vm386, %v371, 0
      %v430 = vsel %vm386, %v372, 0
      %v433 = vsel %vm386, %v373, 0
      %435 = vmatprep.subr.bf16.mxu0 0
      %436 = vmatpush1.bf16.msra.mxu0 %v382
      %437 = vmatprep.subr.bf16.mxu0 0
      %438 = vmatpush1.bf16.msra.mxu0 %v383
      %439 = vmatprep.subr.bf16.mxu0 0
      %440 = vmatpush1.bf16.msra.mxu0 0
      %441 = vmatprep.subr.bf16.mxu0 0
      %442 = vmatpush1.bf16.msra.mxu0 0
      %443 = vmatprep.subr.bf16.mxu0 0
      %444 = vmatpush1.bf16.msra.mxu0 0
      %445 = vmatprep.subr.bf16.mxu0 0
      %446 = vmatpush1.bf16.msra.mxu0 0
      %447 = vmatprep.subr.bf16.mxu0 0
      %448 = vmatpush1.bf16.msra.mxu0 0
      %449 = vmatprep.subr.bf16.mxu0 0
      %450 = vmatpush1.bf16.msra.mxu0 0
      %451 = vmatprep.subr.bf16.mxu0 0
      %452 = vmatpush1.bf16.msra.mxu0 0
      %453 = vmatprep.subr.bf16.mxu0 0
      %454 = vmatpush1.bf16.msra.mxu0 0
      %455 = vmatprep.subr.bf16.mxu0 0
      %456 = vmatpush1.bf16.msra.mxu0 0
      %457 = vmatprep.subr.bf16.mxu0 0
      %458 = vmatpush1.bf16.msra.mxu0 0
      %459 = vmatprep.subr.bf16.mxu0 0
      %460 = vmatpush1.bf16.msra.mxu0 0
      %461 = vmatprep.subr.bf16.mxu0 0
      %462 = vmatpush1.bf16.msra.mxu0 0
      %463 = vmatprep.subr.bf16.mxu0 0
      %464 = vmatpush1.bf16.msra.mxu0 0
      %465 = vmatprep.subr.bf16.mxu0 0
      %466 = vmatpush1.bf16.msra.mxu0 0
      %467 = vmatprep.mubr.bf16.mxu0 0
      %468 = vmatmul.mubr.bf16.gmra.mrb[0].mxu0 %v388
      %v469 = vpop.f32.mrb[0].mxu0
      %v470 = vadd.f32 0.0, %v469
      %v471 = vpop.f32.mrb[0].mxu0
      %v472 = vpop.f32.mrb[0].mxu0
      %v473 = vadd.f32 0.0, %v472
      %v474 = vpop.f32.mrb[0].mxu0
      %475 = vmatprep.mubr.bf16.mxu0 0
      %476 = vmatmul.mubr.bf16.gmra.mrb[0].mxu0 %v391
      %v477 = vpop.f32.mrb[0].mxu0
      %v478 = vadd.f32 0.0, %v477
      %v479 = vpop.f32.mrb[0].mxu0
      %v480 = vpop.f32.mrb[0].mxu0
      %v481 = vadd.f32 0.0, %v480
      %v482 = vpop.f32.mrb[0].mxu0
      %483 = vmatprep.mubr.bf16.mxu0 0
      %484 = vmatmul.mubr.bf16.gmra.mrb[0].mxu0 %v394
      %v485 = vpop.f32.mrb[0].mxu0
      %v486 = vadd.f32 0.0, %v485
      %v487 = vpop.f32.mrb[0].mxu0
      %v488 = vpop.f32.mrb[0].mxu0
      %v489 = vadd.f32 0.0, %v488
      %v490 = vpop.f32.mrb[0].mxu0
      %491 = vmatprep.mubr.bf16.mxu0 0
      %492 = vmatmul.mubr.bf16.gmra.mrb[0].mxu0 %v397
      %v493 = vpop.f32.mrb[0].mxu0
      %v494 = vadd.f32 0.0, %v493
      %v495 = vpop.f32.mrb[0].mxu0
      %v496 = vpop.f32.mrb[0].mxu0
      %v497 = vadd.f32 0.0, %v496
      %v498 = vpop.f32.mrb[0].mxu0
      %499 = vmatprep.mubr.bf16.mxu0 0
      %500 = vmatmul.mubr.bf16.gmra.mrb[0].mxu0 %v400
      %v501 = vpop.f32.mrb[0].mxu0
      %v502 = vadd.f32 0.0, %v501
      %v503 = vpop.f32.mrb[0].mxu0
      %v504 = vpop.f32.mrb[0].mxu0
      %v505 = vadd.f32 0.0, %v504
      %v506 = vpop.f32.mrb[0].mxu0
      %507 = vmatprep.mubr.bf16.mxu0 0
      %508 = vmatmul.mubr.bf16.gmra.mrb[0].mxu0 %v403
      %v509 = vpop.f32.mrb[0].mxu0
      %v510 = vadd.f32 0.0, %v509
      %v511 = vpop.f32.mrb[0].mxu0
      %v512 = vpop.f32.mrb[0].mxu0
      %v513 = vadd.f32 0.0, %v512
      %v514 = vpop.f32.mrb[0].mxu0
      %515 = vmatprep.mubr.bf16.mxu0 0
      %516 = vmatmul.mubr.bf16.gmra.mrb[0].mxu0 %v406
      %v517 = vpop.f32.mrb[0].mxu0
      %v518 = vadd.f32 0.0, %v517
      %v519 = vpop.f32.mrb[0].mxu0
      %v520 = vpop.f32.mrb[0].mxu0
      %v521 = vadd.f32 0.0, %v520
      %v522 = vpop.f32.mrb[0].mxu0
      %523 = vmatprep.mubr.bf16.mxu0 0
      %524 = vmatmul.mubr.bf16.gmra.mrb[0].mxu0 %v409
      %v525 = vpop.f32.mrb[0].mxu0
      %v526 = vadd.f32 0.0, %v525
      %v527 = vpop.f32.mrb[0].mxu0
      %v528 = vpop.f32.mrb[0].mxu0
      %v529 = vadd.f32 0.0, %v528
      %v530 = vpop.f32.mrb[0].mxu0
      %531 = vmatprep.mubr.bf16.mxu0 0
      %532 = vmatmul.mubr.bf16.gmra.mrb[0].mxu0 %v412
      %v533 = vpop.f32.mrb[0].mxu0
      %v534 = vadd.f32 0.0, %v533
      %v535 = vpop.f32.mrb[0].mxu0
      %v536 = vpop.f32.mrb[0].mxu0
      %v537 = vadd.f32 0.0, %v536
      %v538 = vpop.f32.mrb[0].mxu0
      %539 = vmatprep.mubr.bf16.mxu0 0
      %540 = vmatmul.mubr.bf16.gmra.mrb[0].mxu0 %v415
      %v541 = vpop.f32.mrb[0].mxu0
      %v542 = vadd.f32 0.0, %v541
      %v543 = vpop.f32.mrb[0].mxu0
      %v544 = vpop.f32.mrb[0].mxu0
      %v545 = vadd.f32 0.0, %v544
      %v546 = vpop.f32.mrb[0].mxu0
      %547 = vmatprep.mubr.bf16.mxu0 0
      %548 = vmatmul.mubr.bf16.gmra.mrb[0].mxu0 %v418
      %v549 = vpop.f32.mrb[0].mxu0
      %v550 = vadd.f32 0.0, %v549
      %v551 = vpop.f32.mrb[0].mxu0
      %v552 = vpop.f32.mrb[0].mxu0
      %v553 = vadd.f32 0.0, %v552
      %v554 = vpop.f32.mrb[0].mxu0
      %555 = vmatprep.mubr.bf16.mxu0 0
      %556 = vmatmul.mubr.bf16.gmra.mrb[0].mxu0 %v421
      %v557 = vpop.f32.mrb[0].mxu0
      %v558 = vadd.f32 0.0, %v557
      %v559 = vpop.f32.mrb[0].mxu0
      %v560 = vpop.f32.mrb[0].mxu0
      %v561 = vadd.f32 0.0, %v560
      %v562 = vpop.f32.mrb[0].mxu0
      %563 = vmatprep.mubr.bf16.mxu0 0
      %564 = vmatmul.mubr.bf16.gmra.mrb[0].mxu0 %v424
      %v565 = vpop.f32.mrb[0].mxu0
      %v566 = vadd.f32 0.0, %v565
      %v567 = vpop.f32.mrb[0].mxu0
      %v568 = vpop.f32.mrb[0].mxu0
      %v569 = vadd.f32 0.0, %v568
      %v570 = vpop.f32.mrb[0].mxu0
      %571 = vmatprep.mubr.bf16.mxu0 0
      %572 = vmatmul.mubr.bf16.gmra.mrb[0].mxu0 %v427
      %v573 = vpop.f32.mrb[0].mxu0
      %v574 = vadd.f32 0.0, %v573
      %v575 = vpop.f32.mrb[0].mxu0
      %v576 = vpop.f32.mrb[0].mxu0
      %v577 = vadd.f32 0.0, %v576
      %v578 = vpop.f32.mrb[0].mxu0
      %579 = vmatprep.mubr.bf16.mxu0 0
      %580 = vmatmul.mubr.bf16.gmra.mrb[0].mxu0 %v430
      %v581 = vpop.f32.mrb[0].mxu0
      %v582 = vadd.f32 0.0, %v581
      %v583 = vpop.f32.mrb[0].mxu0
      %v584 = vpop.f32.mrb[0].mxu0
      %v585 = vadd.f32 0.0, %v584
      %v586 = vpop.f32.mrb[0].mxu0
      %587 = vmatprep.mubr.bf16.mxu0 0
      %588 = vmatmul.mubr.bf16.gmra.mrb[0].mxu0 %v433
      %v589 = vpop.f32.mrb[0].mxu0
      %v590 = vadd.f32 0.0, %v589
      %v591 = vpop.f32.mrb[0].mxu0
      %v592 = vpop.f32.mrb[0].mxu0
      %v593 = vadd.f32 0.0, %v592
      %v594 = vpop.f32.mrb[0].mxu0
      %595 = vdwg.mxu0
      %596 = vadd.xlane.f32.xlu0 %v470
      %v597 = vpop.xlane.xlu0 %596
      %598 = vadd.xlane.f32.xlu0 %v473
      %v599 = vpop.xlane.xlu0 %598
      %600 = vadd.xlane.f32.xlu0 %v478
      %v601 = vpop.xlane.xlu0 %600
      %602 = vadd.xlane.f32.xlu0 %v481
      %v603 = vpop.xlane.xlu0 %602
      %604 = vadd.xlane.f32.xlu0 %v486
      %v605 = vpop.xlane.xlu0 %604
      %606 = vadd.xlane.f32.xlu0 %v489
      %v607 = vpop.xlane.xlu0 %606
      %608 = vadd.xlane.f32.xlu0 %v494
      %v609 = vpop.xlane.xlu0 %608
      %610 = vadd.xlane.f32.xlu0 %v497
      %v611 = vpop.xlane.xlu0 %610
      %612 = vadd.xlane.f32.xlu0 %v502
      %v613 = vpop.xlane.xlu0 %612
      %614 = vadd.xlane.f32.xlu0 %v505
      %v615 = vpop.xlane.xlu0 %614
      %616 = vadd.xlane.f32.xlu0 %v510
      %v617 = vpop.xlane.xlu0 %616
      %618 = vadd.xlane.f32.xlu0 %v513
      %v619 = vpop.xlane.xlu0 %618
      %620 = vadd.xlane.f32.xlu0 %v518
      %v621 = vpop.xlane.xlu0 %620
      %622 = vadd.xlane.f32.xlu0 %v521
      %v623 = vpop.xlane.xlu0 %622
      %624 = vadd.xlane.f32.xlu0 %v526
      %v625 = vpop.xlane.xlu0 %624
      %626 = vadd.xlane.f32.xlu0 %v529
      %v627 = vpop.xlane.xlu0 %626
      %628 = vadd.xlane.f32.xlu0 %v534
      %v629 = vpop.xlane.xlu0 %628
      %630 = vadd.xlane.f32.xlu0 %v537
      %v631 = vpop.xlane.xlu0 %630
      %632 = vadd.xlane.f32.xlu0 %v542
      %v633 = vpop.xlane.xlu0 %632
      %634 = vadd.xlane.f32.xlu0 %v545
      %v635 = vpop.xlane.xlu0 %634
      %636 = vadd.xlane.f32.xlu0 %v550
      %v637 = vpop.xlane.xlu0 %636
      %638 = vadd.xlane.f32.xlu0 %v553
      %v639 = vpop.xlane.xlu0 %638
      %640 = vadd.xlane.f32.xlu0 %v558
      %v641 = vpop.xlane.xlu0 %640
      %642 = vadd.xlane.f32.xlu0 %v561
      %v643 = vpop.xlane.xlu0 %642
      %644 = vadd.xlane.f32.xlu0 %v566
      %v645 = vpop.xlane.xlu0 %644
      %646 = vadd.xlane.f32.xlu0 %v569
      %v647 = vpop.xlane.xlu0 %646
      %648 = vadd.xlane.f32.xlu0 %v574
      %v649 = vpop.xlane.xlu0 %648
      %650 = vadd.xlane.f32.xlu0 %v577
      %v651 = vpop.xlane.xlu0 %650
      %652 = vadd.xlane.f32.xlu0 %v582
      %v653 = vpop.xlane.xlu0 %652
      %654 = vadd.xlane.f32.xlu0 %v585
      %v655 = vpop.xlane.xlu0 %654
      %656 = vadd.xlane.f32.xlu0 %v590
      %v657 = vpop.xlane.xlu0 %656
      %658 = vadd.xlane.f32.xlu0 %v593
      %v659 = vpop.xlane.xlu0 %658
      %v660 = vmul.f32 %v470, %v470
      %v661 = vmul.f32 %v473, %v473
      %v662 = vmul.f32 %v478, %v478
      %v663 = vmul.f32 %v481, %v481
      %v664 = vmul.f32 %v486, %v486
      %v665 = vmul.f32 %v489, %v489
      %v666 = vmul.f32 %v494, %v494
      %v667 = vmul.f32 %v497, %v497
      %v668 = vmul.f32 %v502, %v502
      %v669 = vmul.f32 %v505, %v505
      %v670 = vmul.f32 %v510, %v510
      %v671 = vmul.f32 %v513, %v513
      %v672 = vmul.f32 %v518, %v518
      %v673 = vmul.f32 %v521, %v521
      %v674 = vmul.f32 %v526, %v526
      %v675 = vmul.f32 %v529, %v529
      %v676 = vmul.f32 %v534, %v534
      %v677 = vmul.f32 %v537, %v537
      %v678 = vmul.f32 %v542, %v542
      %v679 = vmul.f32 %v545, %v545
      %v680 = vmul.f32 %v550, %v550
      %v681 = vmul.f32 %v553, %v553
      %v682 = vmul.f32 %v558, %v558
      %v683 = vmul.f32 %v561, %v561
      %v684 = vmul.f32 %v566, %v566
      %v685 = vmul.f32 %v569, %v569
      %v686 = vmul.f32 %v574, %v574
      %v687 = vmul.f32 %v577, %v577
      %v688 = vmul.f32 %v582, %v582
      %v689 = vmul.f32 %v585, %v585
      %v690 = vmul.f32 %v590, %v590
      %v691 = vmul.f32 %v593, %v593
      %692 = vadd.xlane.f32.xlu0 %v660
      %v693 = vpop.xlane.xlu0 %692
      %694 = vadd.xlane.f32.xlu0 %v661
      %v695 = vpop.xlane.xlu0 %694
      %696 = vadd.xlane.f32.xlu0 %v662
      %v697 = vpop.xlane.xlu0 %696
      %698 = vadd.xlane.f32.xlu0 %v663
      %v699 = vpop.xlane.xlu0 %698
      %700 = vadd.xlane.f32.xlu0 %v664
      %v701 = vpop.xlane.xlu0 %700
      %702 = vadd.xlane.f32.xlu0 %v665
      %v703 = vpop.xlane.xlu0 %702
      %704 = vadd.xlane.f32.xlu0 %v666
      %v705 = vpop.xlane.xlu0 %704
      %706 = vadd.xlane.f32.xlu0 %v667
      %v707 = vpop.xlane.xlu0 %706
      %708 = vadd.xlane.f32.xlu0 %v668
      %v709 = vpop.xlane.xlu0 %708
      %710 = vadd.xlane.f32.xlu0 %v669
      %v711 = vpop.xlane.xlu0 %710
      %712 = vadd.xlane.f32.xlu0 %v670
      %v713 = vpop.xlane.xlu0 %712
      %714 = vadd.xlane.f32.xlu0 %v671
      %v715 = vpop.xlane.xlu0 %714
      %716 = vadd.xlane.f32.xlu0 %v672
      %v717 = vpop.xlane.xlu0 %716
      %718 = vadd.xlane.f32.xlu0 %v673
      %v719 = vpop.xlane.xlu0 %718
      %720 = vadd.xlane.f32.xlu0 %v674
      %v721 = vpop.xlane.xlu0 %720
      %722 = vadd.xlane.f32.xlu0 %v675
      %v723 = vpop.xlane.xlu0 %722
      %724 = vadd.xlane.f32.xlu0 %v676
      %v725 = vpop.xlane.xlu0 %724
      %726 = vadd.xlane.f32.xlu0 %v677
      %v727 = vpop.xlane.xlu0 %726
      %728 = vadd.xlane.f32.xlu0 %v678
      %v729 = vpop.xlane.xlu0 %728
      %730 = vadd.xlane.f32.xlu0 %v679
      %v731 = vpop.xlane.xlu0 %730
      %732 = vadd.xlane.f32.xlu0 %v680
      %v733 = vpop.xlane.xlu0 %732
      %734 = vadd.xlane.f32.xlu0 %v681
      %v735 = vpop.xlane.xlu0 %734
      %736 = vadd.xlane.f32.xlu0 %v682
      %v737 = vpop.xlane.xlu0 %736
      %738 = vadd.xlane.f32.xlu0 %v683
      %v739 = vpop.xlane.xlu0 %738
      %740 = vadd.xlane.f32.xlu0 %v684
      %v741 = vpop.xlane.xlu0 %740
      %742 = vadd.xlane.f32.xlu0 %v685
      %v743 = vpop.xlane.xlu0 %742
      %744 = vadd.xlane.f32.xlu0 %v686
      %v745 = vpop.xlane.xlu0 %744
      %746 = vadd.xlane.f32.xlu0 %v687
      %v747 = vpop.xlane.xlu0 %746
      %748 = vadd.xlane.f32.xlu0 %v688
      %v749 = vpop.xlane.xlu0 %748
      %750 = vadd.xlane.f32.xlu0 %v689
      %v751 = vpop.xlane.xlu0 %750
      %752 = vadd.xlane.f32.xlu0 %v690
      %v753 = vpop.xlane.xlu0 %752
      %754 = vadd.xlane.f32.xlu0 %v691
      %v755 = vpop.xlane.xlu0 %754
      %v756 = vmul.f32 %v597, 0.25
      %v757 = vmul.f32 %v599, 0.25
      %v758 = vmul.f32 %v601, 0.25
      %v759 = vmul.f32 %v603, 0.25
      %v760 = vmul.f32 %v605, 0.25
      %v761 = vmul.f32 %v607, 0.25
      %v762 = vmul.f32 %v609, 0.25
      %v763 = vmul.f32 %v611, 0.25
      %v764 = vmul.f32 %v613, 0.25
      %v765 = vmul.f32 %v615, 0.25
      %v766 = vmul.f32 %v617, 0.25
      %v767 = vmul.f32 %v619, 0.25
      %v768 = vmul.f32 %v621, 0.25
      %v769 = vmul.f32 %v623, 0.25
      %v770 = vmul.f32 %v625, 0.25
      %v771 = vmul.f32 %v627, 0.25
      %v772 = vmul.f32 %v629, 0.25
      %v773 = vmul.f32 %v631, 0.25
      %v774 = vmul.f32 %v633, 0.25
      %v775 = vmul.f32 %v635, 0.25
      %v776 = vmul.f32 %v637, 0.25
      %v777 = vmul.f32 %v639, 0.25
      %v778 = vmul.f32 %v641, 0.25
      %v779 = vmul.f32 %v643, 0.25
      %v780 = vmul.f32 %v645, 0.25
      %v781 = vmul.f32 %v647, 0.25
      %v782 = vmul.f32 %v649, 0.25
      %v783 = vmul.f32 %v651, 0.25
      %v784 = vmul.f32 %v653, 0.25
      %v785 = vmul.f32 %v655, 0.25
      %v786 = vmul.f32 %v657, 0.25
      %v787 = vmul.f32 %v659, 0.25
      %v788 = vmul.f32 %v693, 0.25
      %v789 = vmul.f32 %v695, 0.25
      %v790 = vmul.f32 %v697, 0.25
      %v791 = vmul.f32 %v699, 0.25
      %v792 = vmul.f32 %v701, 0.25
      %v793 = vmul.f32 %v703, 0.25
      %v794 = vmul.f32 %v705, 0.25
      %v795 = vmul.f32 %v707, 0.25
      %v796 = vmul.f32 %v709, 0.25
      %v797 = vmul.f32 %v711, 0.25
      %v798 = vmul.f32 %v713, 0.25
      %v799 = vmul.f32 %v715, 0.25
      %v800 = vmul.f32 %v717, 0.25
      %v801 = vmul.f32 %v719, 0.25
      %v802 = vmul.f32 %v721, 0.25
      %v803 = vmul.f32 %v723, 0.25
      %v804 = vmul.f32 %v725, 0.25
      %v805 = vmul.f32 %v727, 0.25
      %v806 = vmul.f32 %v729, 0.25
      %v807 = vmul.f32 %v731, 0.25
      %v808 = vmul.f32 %v733, 0.25
      %v809 = vmul.f32 %v735, 0.25
      %v810 = vmul.f32 %v737, 0.25
      %v811 = vmul.f32 %v739, 0.25
      %v812 = vmul.f32 %v741, 0.25
      %v813 = vmul.f32 %v743, 0.25
      %v814 = vmul.f32 %v745, 0.25
      %v815 = vmul.f32 %v747, 0.25
      %v816 = vmul.f32 %v749, 0.25
      %v817 = vmul.f32 %v751, 0.25
      %v818 = vmul.f32 %v753, 0.25
      %v819 = vmul.f32 %v755, 0.25
      %v820 = vmul.f32 %v756, %v756
      %v821 = vmul.f32 %v757, %v757
      %v822 = vmul.f32 %v758, %v758
      %v823 = vmul.f32 %v759, %v759
      %v824 = vmul.f32 %v760, %v760
      %v825 = vmul.f32 %v761, %v761
      %v826 = vmul.f32 %v762, %v762
      %v827 = vmul.f32 %v763, %v763
      %v828 = vmul.f32 %v764, %v764
      %v829 = vmul.f32 %v765, %v765
      %v830 = vmul.f32 %v766, %v766
      %v831 = vmul.f32 %v767, %v767
      %v832 = vmul.f32 %v768, %v768
      %v833 = vmul.f32 %v769, %v769
      %v834 = vmul.f32 %v770, %v770
      %v835 = vmul.f32 %v771, %v771
      %v836 = vmul.f32 %v772, %v772
      %v837 = vmul.f32 %v773, %v773
      %v838 = vmul.f32 %v774, %v774
      %v839 = vmul.f32 %v775, %v775
      %v840 = vmul.f32 %v776, %v776
      %v841 = vmul.f32 %v777, %v777
      %v842 = vmul.f32 %v778, %v778
      %v843 = vmul.f32 %v779, %v779
      %v844 = vmul.f32 %v780, %v780
      %v845 = vmul.f32 %v781, %v781
      %v846 = vmul.f32 %v782, %v782
      %v847 = vmul.f32 %v783, %v783
      %v848 = vmul.f32 %v784, %v784
      %v849 = vmul.f32 %v785, %v785
      %v850 = vmul.f32 %v786, %v786
      %v851 = vmul.f32 %v787, %v787
      %v852 = vsub.f32 %v788, %v820
      %v853 = vsub.f32 %v789, %v821
      %v854 = vsub.f32 %v790, %v822
      %v855 = vsub.f32 %v791, %v823
      %v856 = vsub.f32 %v792, %v824
      %v857 = vsub.f32 %v793, %v825
      %v858 = vsub.f32 %v794, %v826
      %v859 = vsub.f32 %v795, %v827
      %v860 = vsub.f32 %v796, %v828
      %v861 = vsub.f32 %v797, %v829
      %v862 = vsub.f32 %v798, %v830
      %v863 = vsub.f32 %v799, %v831
      %v864 = vsub.f32 %v800, %v832
      %v865 = vsub.f32 %v801, %v833
      %v866 = vsub.f32 %v802, %v834
      %v867 = vsub.f32 %v803, %v835
      %v868 = vsub.f32 %v804, %v836
      %v869 = vsub.f32 %v805, %v837
      %v870 = vsub.f32 %v806, %v838
      %v871 = vsub.f32 %v807, %v839
      %v872 = vsub.f32 %v808, %v840
      %v873 = vsub.f32 %v809, %v841
      %v874 = vsub.f32 %v810, %v842
      %v875 = vsub.f32 %v811, %v843
      %v876 = vsub.f32 %v812, %v844
      %v877 = vsub.f32 %v813, %v845
      %v878 = vsub.f32 %v814, %v846
      %v879 = vsub.f32 %v815, %v847
      %v880 = vsub.f32 %v816, %v848
      %v881 = vsub.f32 %v817, %v849
      %v882 = vsub.f32 %v818, %v850
      %v883 = vsub.f32 %v819, %v851
      %v884 = vsub.f32 %v470, %v756
      %v885 = vsub.f32 %v473, %v757
      %v886 = vsub.f32 %v478, %v758
      %v887 = vsub.f32 %v481, %v759
      %v888 = vsub.f32 %v486, %v760
      %v889 = vsub.f32 %v489, %v761
      %v890 = vsub.f32 %v494, %v762
      %v891 = vsub.f32 %v497, %v763
      %v892 = vsub.f32 %v502, %v764
      %v893 = vsub.f32 %v505, %v765
      %v894 = vsub.f32 %v510, %v766
      %v895 = vsub.f32 %v513, %v767
      %v896 = vsub.f32 %v518, %v768
      %v897 = vsub.f32 %v521, %v769
      %v898 = vsub.f32 %v526, %v770
      %v899 = vsub.f32 %v529, %v771
      %v900 = vsub.f32 %v534, %v772
      %v901 = vsub.f32 %v537, %v773
      %v902 = vsub.f32 %v542, %v774
      %v903 = vsub.f32 %v545, %v775
      %v904 = vsub.f32 %v550, %v776
      %v905 = vsub.f32 %v553, %v777
      %v906 = vsub.f32 %v558, %v778
      %v907 = vsub.f32 %v561, %v779
      %v908 = vsub.f32 %v566, %v780
      %v909 = vsub.f32 %v569, %v781
      %v910 = vsub.f32 %v574, %v782
      %v911 = vsub.f32 %v577, %v783
      %v912 = vsub.f32 %v582, %v784
      %v913 = vsub.f32 %v585, %v785
      %v914 = vsub.f32 %v590, %v786
      %v915 = vsub.f32 %v593, %v787
      %v916 = vadd.f32 %v852, 0.001
      %v917 = vadd.f32 %v853, 0.001
      %v918 = vadd.f32 %v854, 0.001
      %v919 = vadd.f32 %v855, 0.001
      %v920 = vadd.f32 %v856, 0.001
      %v921 = vadd.f32 %v857, 0.001
      %v922 = vadd.f32 %v858, 0.001
      %v923 = vadd.f32 %v859, 0.001
      %v924 = vadd.f32 %v860, 0.001
      %v925 = vadd.f32 %v861, 0.001
      %v926 = vadd.f32 %v862, 0.001
      %v927 = vadd.f32 %v863, 0.001
      %v928 = vadd.f32 %v864, 0.001
      %v929 = vadd.f32 %v865, 0.001
      %v930 = vadd.f32 %v866, 0.001
      %v931 = vadd.f32 %v867, 0.001
      %v932 = vadd.f32 %v868, 0.001
      %v933 = vadd.f32 %v869, 0.001
      %v934 = vadd.f32 %v870, 0.001
      %v935 = vadd.f32 %v871, 0.001
      %v936 = vadd.f32 %v872, 0.001
      %v937 = vadd.f32 %v873, 0.001
      %v938 = vadd.f32 %v874, 0.001
      %v939 = vadd.f32 %v875, 0.001
      %v940 = vadd.f32 %v876, 0.001
      %v941 = vadd.f32 %v877, 0.001
      %v942 = vadd.f32 %v878, 0.001
      %v943 = vadd.f32 %v879, 0.001
      %v944 = vadd.f32 %v880, 0.001
      %v945 = vadd.f32 %v881, 0.001
      %v946 = vadd.f32 %v882, 0.001
      %v947 = vadd.f32 %v883, 0.001
      %v948 = vrsqrt.pop %v916
      %v949 = vrsqrt.pop %v917
      %v950 = vrsqrt.pop %v918
      %v951 = vrsqrt.pop %v919
      %v952 = vrsqrt.pop %v920
      %v953 = vrsqrt.pop %v921
      %v954 = vrsqrt.pop %v922
      %v955 = vrsqrt.pop %v923
      %v956 = vrsqrt.pop %v924
      %v957 = vrsqrt.pop %v925
      %v958 = vrsqrt.pop %v926
      %v959 = vrsqrt.pop %v927
      %v960 = vrsqrt.pop %v928
      %v961 = vrsqrt.pop %v929
      %v962 = vrsqrt.pop %v930
      %v963 = vrsqrt.pop %v931
      %v964 = vrsqrt.pop %v932
      %v965 = vrsqrt.pop %v933
      %v966 = vrsqrt.pop %v934
      %v967 = vrsqrt.pop %v935
      %v968 = vrsqrt.pop %v936
      %v969 = vrsqrt.pop %v937
      %v970 = vrsqrt.pop %v938
      %v971 = vrsqrt.pop %v939
      %v972 = vrsqrt.pop %v940
      %v973 = vrsqrt.pop %v941
      %v974 = vrsqrt.pop %v942
      %v975 = vrsqrt.pop %v943
      %v976 = vrsqrt.pop %v944
      %v977 = vrsqrt.pop %v945
      %v978 = vrsqrt.pop %v946
      %v979 = vrsqrt.pop %v947
      %v980 = vmul.f32 %v884, %v948
      %v981 = vmul.f32 %v885, %v949
      %v982 = vmul.f32 %v886, %v950
      %v983 = vmul.f32 %v887, %v951
      %v984 = vmul.f32 %v888, %v952
      %v985 = vmul.f32 %v889, %v953
      %v986 = vmul.f32 %v890, %v954
      %v987 = vmul.f32 %v891, %v955
      %v988 = vmul.f32 %v892, %v956
      %v989 = vmul.f32 %v893, %v957
      %v990 = vmul.f32 %v894, %v958
      %v991 = vmul.f32 %v895, %v959
      %v992 = vmul.f32 %v896, %v960
      %v993 = vmul.f32 %v897, %v961
      %v994 = vmul.f32 %v898, %v962
      %v995 = vmul.f32 %v899, %v963
      %v996 = vmul.f32 %v900, %v964
      %v997 = vmul.f32 %v901, %v965
      %v998 = vmul.f32 %v902, %v966
      %v999 = vmul.f32 %v903, %v967
      %v1000 = vmul.f32 %v904, %v968
      %v1001 = vmul.f32 %v905, %v969
      %v1002 = vmul.f32 %v906, %v970
      %v1003 = vmul.f32 %v907, %v971
      %v1004 = vmul.f32 %v908, %v972
      %v1005 = vmul.f32 %v909, %v973
      %v1006 = vmul.f32 %v910, %v974
      %v1007 = vmul.f32 %v911, %v975
      %v1008 = vmul.f32 %v912, %v976
      %v1009 = vmul.f32 %v913, %v977
      %v1010 = vmul.f32 %v914, %v978
      %v1011 = vmul.f32 %v915, %v979
      %v1012 = vld [vmem:[%s2] sm:$0x1]
      %v1014 = vlaneseq
      %v1015 = vshrl.u32 %v1014, 7
      %v1016 = vsub.s32 0, %v1015
      %v1017 = vrot.slane %v1012, %v1016
      %v1019 = vmul.f32 %v980, %v1017
      %v1020 = vmul.f32 %v981, %v1017
      %v1021 = vmul.f32 %v982, %v1017
      %v1022 = vmul.f32 %v983, %v1017
      %v1023 = vmul.f32 %v984, %v1017
      %v1024 = vmul.f32 %v985, %v1017
      %v1025 = vmul.f32 %v986, %v1017
      %v1026 = vmul.f32 %v987, %v1017
      %v1027 = vmul.f32 %v988, %v1017
      %v1028 = vmul.f32 %v989, %v1017
      %v1029 = vmul.f32 %v990, %v1017
      %v1030 = vmul.f32 %v991, %v1017
      %v1031 = vmul.f32 %v992, %v1017
      %v1032 = vmul.f32 %v993, %v1017
      %v1033 = vmul.f32 %v994, %v1017
      %v1034 = vmul.f32 %v995, %v1017
      %v1035 = vmul.f32 %v996, %v1017
      %v1036 = vmul.f32 %v997, %v1017
      %v1037 = vmul.f32 %v998, %v1017
      %v1038 = vmul.f32 %v999, %v1017
      %v1039 = vmul.f32 %v1000, %v1017
      %v1040 = vmul.f32 %v1001, %v1017
      %v1041 = vmul.f32 %v1002, %v1017
      %v1042 = vmul.f32 %v1003, %v1017
      %v1043 = vmul.f32 %v1004, %v1017
      %v1044 = vmul.f32 %v1005, %v1017
      %v1045 = vmul.f32 %v1006, %v1017
      %v1046 = vmul.f32 %v1007, %v1017
      %v1047 = vmul.f32 %v1008, %v1017
      %v1048 = vmul.f32 %v1009, %v1017
      %v1049 = vmul.f32 %v1010, %v1017
      %v1050 = vmul.f32 %v1011, %v1017
      %v1051 = vld [vmem:[%s3] sm:$0x1]
      %v1053 = vlaneseq
      %v1054 = vshrl.u32 %v1053, 7
      %v1055 = vsub.s32 0, %v1054
      %v1056 = vrot.slane %v1051, %v1055
      %v1058 = vadd.f32 %v1019, %v1056
      %v1059 = vadd.f32 %v1020, %v1056
      %v1060 = vadd.f32 %v1021, %v1056
      %v1061 = vadd.f32 %v1022, %v1056
      %v1062 = vadd.f32 %v1023, %v1056
      %v1063 = vadd.f32 %v1024, %v1056
      %v1064 = vadd.f32 %v1025, %v1056
      %v1065 = vadd.f32 %v1026, %v1056
      %v1066 = vadd.f32 %v1027, %v1056
      %v1067 = vadd.f32 %v1028, %v1056
      %v1068 = vadd.f32 %v1029, %v1056
      %v1069 = vadd.f32 %v1030, %v1056
      %v1070 = vadd.f32 %v1031, %v1056
      %v1071 = vadd.f32 %v1032, %v1056
      %v1072 = vadd.f32 %v1033, %v1056
      %v1073 = vadd.f32 %v1034, %v1056
      %v1074 = vadd.f32 %v1035, %v1056
      %v1075 = vadd.f32 %v1036, %v1056
      %v1076 = vadd.f32 %v1037, %v1056
      %v1077 = vadd.f32 %v1038, %v1056
      %v1078 = vadd.f32 %v1039, %v1056
      %v1079 = vadd.f32 %v1040, %v1056
      %v1080 = vadd.f32 %v1041, %v1056
      %v1081 = vadd.f32 %v1042, %v1056
      %v1082 = vadd.f32 %v1043, %v1056
      %v1083 = vadd.f32 %v1044, %v1056
      %v1084 = vadd.f32 %v1045, %v1056
      %v1085 = vadd.f32 %v1046, %v1056
      %v1086 = vadd.f32 %v1047, %v1056
      %v1087 = vadd.f32 %v1048, %v1056
      %v1088 = vadd.f32 %v1049, %v1056
      %v1089 = vadd.f32 %v1050, %v1056
      %v1090 = vxor.u32 %v1058, 2147483648
      %v1091 = vxor.u32 %v1059, 2147483648
      %v1092 = vxor.u32 %v1060, 2147483648
      %v1093 = vxor.u32 %v1061, 2147483648
      %v1094 = vxor.u32 %v1062, 2147483648
      %v1095 = vxor.u32 %v1063, 2147483648
      %v1096 = vxor.u32 %v1064, 2147483648
      %v1097 = vxor.u32 %v1065, 2147483648
      %v1098 = vxor.u32 %v1066, 2147483648
      %v1099 = vxor.u32 %v1067, 2147483648
      %v1100 = vxor.u32 %v1068, 2147483648
      %v1101 = vxor.u32 %v1069, 2147483648
      %v1102 = vxor.u32 %v1070, 2147483648
      %v1103 = vxor.u32 %v1071, 2147483648
      %v1104 = vxor.u32 %v1072, 2147483648
      %v1105 = vxor.u32 %v1073, 2147483648
      %v1106 = vxor.u32 %v1074, 2147483648
      %v1107 = vxor.u32 %v1075, 2147483648
      %v1108 = vxor.u32 %v1076, 2147483648
      %v1109 = vxor.u32 %v1077, 2147483648
      %v1110 = vxor.u32 %v1078, 2147483648
      %v1111 = vxor.u32 %v1079, 2147483648
      %v1112 = vxor.u32 %v1080, 2147483648
      %v1113 = vxor.u32 %v1081, 2147483648
      %v1114 = vxor.u32 %v1082, 2147483648
      %v1115 = vxor.u32 %v1083, 2147483648
      %v1116 = vxor.u32 %v1084, 2147483648
      %v1117 = vxor.u32 %v1085, 2147483648
      %v1118 = vxor.u32 %v1086, 2147483648
      %v1119 = vxor.u32 %v1087, 2147483648
      %v1120 = vxor.u32 %v1088, 2147483648
      %v1121 = vxor.u32 %v1089, 2147483648
      %v1122 = vmul.f32 %v1090, 1.442695
      %v1123 = vpow.pop %v1122
      %v1124 = vmul.f32 %v1091, 1.442695
      %v1125 = vpow.pop %v1124
      %v1126 = vmul.f32 %v1092, 1.442695
      %v1127 = vpow.pop %v1126
      %v1128 = vmul.f32 %v1093, 1.442695
      %v1129 = vpow.pop %v1128
      %v1130 = vmul.f32 %v1094, 1.442695
      %v1131 = vpow.pop %v1130
      %v1132 = vmul.f32 %v1095, 1.442695
      %v1133 = vpow.pop %v1132
      %v1134 = vmul.f32 %v1096, 1.442695
      %v1135 = vpow.pop %v1134
      %v1136 = vmul.f32 %v1097, 1.442695
      %v1137 = vpow.pop %v1136
      %v1138 = vmul.f32 %v1098, 1.442695
      %v1139 = vpow.pop %v1138
      %v1140 = vmul.f32 %v1099, 1.442695
      %v1141 = vpow.pop %v1140
      %v1142 = vmul.f32 %v1100, 1.442695
      %v1143 = vpow.pop %v1142
      %v1144 = vmul.f32 %v1101, 1.442695
      %v1145 = vpow.pop %v1144
      %v1146 = vmul.f32 %v1102, 1.442695
      %v1147 = vpow.pop %v1146
      %v1148 = vmul.f32 %v1103, 1.442695
      %v1149 = vpow.pop %v1148
      %v1150 = vmul.f32 %v1104, 1.442695
      %v1151 = vpow.pop %v1150
      %v1152 = vmul.f32 %v1105, 1.442695
      %v1153 = vpow.pop %v1152
      %v1154 = vmul.f32 %v1106, 1.442695
      %v1155 = vpow.pop %v1154
      %v1156 = vmul.f32 %v1107, 1.442695
      %v1157 = vpow.pop %v1156
      %v1158 = vmul.f32 %v1108, 1.442695
      %v1159 = vpow.pop %v1158
      %v1160 = vmul.f32 %v1109, 1.442695
      %v1161 = vpow.pop %v1160
      %v1162 = vmul.f32 %v1110, 1.442695
      %v1163 = vpow.pop %v1162
      %v1164 = vmul.f32 %v1111, 1.442695
      %v1165 = vpow.pop %v1164
      %v1166 = vmul.f32 %v1112, 1.442695
      %v1167 = vpow.pop %v1166
      %v1168 = vmul.f32 %v1113, 1.442695
      %v1169 = vpow.pop %v1168
      %v1170 = vmul.f32 %v1114, 1.442695
      %v1171 = vpow.pop %v1170
      %v1172 = vmul.f32 %v1115, 1.442695
      %v1173 = vpow.pop %v1172
      %v1174 = vmul.f32 %v1116, 1.442695
      %v1175 = vpow.pop %v1174
      %v1176 = vmul.f32 %v1117, 1.442695
      %v1177 = vpow.pop %v1176
      %v1178 = vmul.f32 %v1118, 1.442695
      %v1179 = vpow.pop %v1178
      %v1180 = vmul.f32 %v1119, 1.442695
      %v1181 = vpow.pop %v1180
      %v1182 = vmul.f32 %v1120, 1.442695
      %v1183 = vpow.pop %v1182
      %v1184 = vmul.f32 %v1121, 1.442695
      %v1185 = vpow.pop %v1184
      %v1186 = vadd.f32 %v1123, 1.0
      %v1187 = vadd.f32 %v1125, 1.0
      %v1188 = vadd.f32 %v1127, 1.0
      %v1189 = vadd.f32 %v1129, 1.0
      %v1190 = vadd.f32 %v1131, 1.0
      %v1191 = vadd.f32 %v1133, 1.0
      %v1192 = vadd.f32 %v1135, 1.0
      %v1193 = vadd.f32 %v1137, 1.0
      %v1194 = vadd.f32 %v1139, 1.0
      %v1195 = vadd.f32 %v1141, 1.0
      %v1196 = vadd.f32 %v1143, 1.0
      %v1197 = vadd.f32 %v1145, 1.0
      %v1198 = vadd.f32 %v1147, 1.0
      %v1199 = vadd.f32 %v1149, 1.0
      %v1200 = vadd.f32 %v1151, 1.0
      %v1201 = vadd.f32 %v1153, 1.0
      %v1202 = vadd.f32 %v1155, 1.0
      %v1203 = vadd.f32 %v1157, 1.0
      %v1204 = vadd.f32 %v1159, 1.0
      %v1205 = vadd.f32 %v1161, 1.0
      %v1206 = vadd.f32 %v1163, 1.0
      %v1207 = vadd.f32 %v1165, 1.0
      %v1208 = vadd.f32 %v1167, 1.0
      %v1209 = vadd.f32 %v1169, 1.0
      %v1210 = vadd.f32 %v1171, 1.0
      %v1211 = vadd.f32 %v1173, 1.0
      %v1212 = vadd.f32 %v1175, 1.0
      %v1213 = vadd.f32 %v1177, 1.0
      %v1214 = vadd.f32 %v1179, 1.0
      %v1215 = vadd.f32 %v1181, 1.0
      %v1216 = vadd.f32 %v1183, 1.0
      %v1217 = vadd.f32 %v1185, 1.0
      %v1218 = vrcp.pop %v1186
      %v1219 = vmul.f32 1.0, %v1218
      %v1220 = vrcp.pop %v1187
      %v1221 = vmul.f32 1.0, %v1220
      %v1222 = vrcp.pop %v1188
      %v1223 = vmul.f32 1.0, %v1222
      %v1224 = vrcp.pop %v1189
      %v1225 = vmul.f32 1.0, %v1224
      %v1226 = vrcp.pop %v1190
      %v1227 = vmul.f32 1.0, %v1226
      %v1228 = vrcp.pop %v1191
      %v1229 = vmul.f32 1.0, %v1228
      %v1230 = vrcp.pop %v1192
      %v1231 = vmul.f32 1.0, %v1230
      %v1232 = vrcp.pop %v1193
      %v1233 = vmul.f32 1.0, %v1232
      %v1234 = vrcp.pop %v1194
      %v1235 = vmul.f32 1.0, %v1234
      %v1236 = vrcp.pop %v1195
      %v1237 = vmul.f32 1.0, %v1236
      %v1238 = vrcp.pop %v1196
      %v1239 = vmul.f32 1.0, %v1238
      %v1240 = vrcp.pop %v1197
      %v1241 = vmul.f32 1.0, %v1240
      %v1242 = vrcp.pop %v1198
      %v1243 = vmul.f32 1.0, %v1242
      %v1244 = vrcp.pop %v1199
      %v1245 = vmul.f32 1.0, %v1244
      %v1246 = vrcp.pop %v1200
      %v1247 = vmul.f32 1.0, %v1246
      %v1248 = vrcp.pop %v1201
      %v1249 = vmul.f32 1.0, %v1248
      %v1250 = vrcp.pop %v1202
      %v1251 = vmul.f32 1.0, %v1250
      %v1252 = vrcp.pop %v1203
      %v1253 = vmul.f32 1.0, %v1252
      %v1254 = vrcp.pop %v1204
      %v1255 = vmul.f32 1.0, %v1254
      %v1256 = vrcp.pop %v1205
      %v1257 = vmul.f32 1.0, %v1256
      %v1258 = vrcp.pop %v1206
      %v1259 = vmul.f32 1.0, %v1258
      %v1260 = vrcp.pop %v1207
      %v1261 = vmul.f32 1.0, %v1260
      %v1262 = vrcp.pop %v1208
      %v1263 = vmul.f32 1.0, %v1262
      %v1264 = vrcp.pop %v1209
      %v1265 = vmul.f32 1.0, %v1264
      %v1266 = vrcp.pop %v1210
      %v1267 = vmul.f32 1.0, %v1266
      %v1268 = vrcp.pop %v1211
      %v1269 = vmul.f32 1.0, %v1268
      %v1270 = vrcp.pop %v1212
      %v1271 = vmul.f32 1.0, %v1270
      %v1272 = vrcp.pop %v1213
      %v1273 = vmul.f32 1.0, %v1272
      %v1274 = vrcp.pop %v1214
      %v1275 = vmul.f32 1.0, %v1274
      %v1276 = vrcp.pop %v1215
      %v1277 = vmul.f32 1.0, %v1276
      %v1278 = vrcp.pop %v1216
      %v1279 = vmul.f32 1.0, %v1278
      %v1280 = vrcp.pop %v1217
      %v1281 = vmul.f32 1.0, %v1280
      %v1282 = vmul.f32 %v1058, %v1219
      %v1283 = vmul.f32 %v1059, %v1221
      %v1284 = vmul.f32 %v1060, %v1223
      %v1285 = vmul.f32 %v1061, %v1225
      %v1286 = vmul.f32 %v1062, %v1227
      %v1287 = vmul.f32 %v1063, %v1229
      %v1288 = vmul.f32 %v1064, %v1231
      %v1289 = vmul.f32 %v1065, %v1233
      %v1290 = vmul.f32 %v1066, %v1235
      %v1291 = vmul.f32 %v1067, %v1237
      %v1292 = vmul.f32 %v1068, %v1239
      %v1293 = vmul.f32 %v1069, %v1241
      %v1294 = vmul.f32 %v1070, %v1243
      %v1295 = vmul.f32 %v1071, %v1245
      %v1296 = vmul.f32 %v1072, %v1247
      %v1297 = vmul.f32 %v1073, %v1249
      %v1298 = vmul.f32 %v1074, %v1251
      %v1299 = vmul.f32 %v1075, %v1253
      %v1300 = vmul.f32 %v1076, %v1255
      %v1301 = vmul.f32 %v1077, %v1257
      %v1302 = vmul.f32 %v1078, %v1259
      %v1303 = vmul.f32 %v1079, %v1261
      %v1304 = vmul.f32 %v1080, %v1263
      %v1305 = vmul.f32 %v1081, %v1265
      %v1306 = vmul.f32 %v1082, %v1267
      %v1307 = vmul.f32 %v1083, %v1269
      %v1308 = vmul.f32 %v1084, %v1271
      %v1309 = vmul.f32 %v1085, %v1273
      %v1310 = vmul.f32 %v1086, %v1275
      %v1311 = vmul.f32 %v1087, %v1277
      %v1312 = vmul.f32 %v1088, %v1279
      %v1313 = vmul.f32 %v1089, %v1281
      %v1314 = vpack.c.bf16 %v1283, %v1282
      %v1315 = vpack.c.bf16 %v1285, %v1284
      %v1316 = vpack.c.bf16 %v1287, %v1286
      %v1317 = vpack.c.bf16 %v1289, %v1288
      %v1318 = vpack.c.bf16 %v1291, %v1290
      %v1319 = vpack.c.bf16 %v1293, %v1292
      %v1320 = vpack.c.bf16 %v1295, %v1294
      %v1321 = vpack.c.bf16 %v1297, %v1296
      %v1322 = vpack.c.bf16 %v1299, %v1298
      %v1323 = vpack.c.bf16 %v1301, %v1300
      %v1324 = vpack.c.bf16 %v1303, %v1302
      %v1325 = vpack.c.bf16 %v1305, %v1304
      %v1326 = vpack.c.bf16 %v1307, %v1306
      %v1327 = vpack.c.bf16 %v1309, %v1308
      %v1328 = vpack.c.bf16 %v1311, %v1310
      %v1329 = vpack.c.bf16 %v1313, %v1312
      %v1346 = vunpack.c.l.b16 %v1314
      %v1347 = vunpack.c.h.b16 %v1314
      %v1348 = vunpack.c.l.b16 %v1315
      %v1349 = vunpack.c.h.b16 %v1315
      %v1350 = vunpack.c.l.b16 %v1316
      %v1351 = vunpack.c.h.b16 %v1316
      %v1352 = vunpack.c.l.b16 %v1317
      %v1353 = vunpack.c.h.b16 %v1317
      %v1354 = vunpack.c.l.b16 %v1318
      %v1355 = vunpack.c.h.b16 %v1318
      %v1356 = vunpack.c.l.b16 %v1319
      %v1357 = vunpack.c.h.b16 %v1319
      %v1358 = vunpack.c.l.b16 %v1320
      %v1359 = vunpack.c.h.b16 %v1320
      %v1360 = vunpack.c.l.b16 %v1321
      %v1361 = vunpack.c.h.b16 %v1321
      %v1362 = vunpack.c.l.b16 %v1322
      %v1363 = vunpack.c.h.b16 %v1322
      %v1364 = vunpack.c.l.b16 %v1323
      %v1365 = vunpack.c.h.b16 %v1323
      %v1366 = vunpack.c.l.b16 %v1324
      %v1367 = vunpack.c.h.b16 %v1324
      %v1368 = vunpack.c.l.b16 %v1325
      %v1369 = vunpack.c.h.b16 %v1325
      %v1370 = vunpack.c.l.b16 %v1326
      %v1371 = vunpack.c.h.b16 %v1326
      %v1372 = vunpack.c.l.b16 %v1327
      %v1373 = vunpack.c.h.b16 %v1327
      %v1374 = vunpack.c.l.b16 %v1328
      %v1375 = vunpack.c.h.b16 %v1328
      %v1376 = vunpack.c.l.b16 %v1329
      %v1377 = vunpack.c.h.b16 %v1329
      %v1378 = vpack.c.b16 %v1346, %v1346
      %v1379 = vpack.c.b16 %v1347, %v1347
      %v1380 = vpack.c.b16 %v1348, %v1348
      %v1381 = vpack.c.b16 %v1349, %v1349
      %v1382 = vpack.c.b16 %v1350, %v1350
      %v1383 = vpack.c.b16 %v1351, %v1351
      %v1384 = vpack.c.b16 %v1352, %v1352
      %v1385 = vpack.c.b16 %v1353, %v1353
      %v1386 = vpack.c.b16 %v1354, %v1354
      %v1387 = vpack.c.b16 %v1355, %v1355
      %v1388 = vpack.c.b16 %v1356, %v1356
      %v1389 = vpack.c.b16 %v1357, %v1357
      %v1390 = vpack.c.b16 %v1358, %v1358
      %v1391 = vpack.c.b16 %v1359, %v1359
      %v1392 = vpack.c.b16 %v1360, %v1360
      %v1393 = vpack.c.b16 %v1361, %v1361
      %v1394 = vpack.c.b16 %v1362, %v1362
      %v1395 = vpack.c.b16 %v1363, %v1363
      %v1396 = vpack.c.b16 %v1364, %v1364
      %v1397 = vpack.c.b16 %v1365, %v1365
      %v1398 = vpack.c.b16 %v1366, %v1366
      %v1399 = vpack.c.b16 %v1367, %v1367
      %v1400 = vpack.c.b16 %v1368, %v1368
      %v1401 = vpack.c.b16 %v1369, %v1369
      %v1402 = vpack.c.b16 %v1370, %v1370
      %v1403 = vpack.c.b16 %v1371, %v1371
      %v1404 = vpack.c.b16 %v1372, %v1372
      %v1405 = vpack.c.b16 %v1373, %v1373
      %v1406 = vpack.c.b16 %v1374, %v1374
      %v1407 = vpack.c.b16 %v1375, %v1375
      %v1408 = vpack.c.b16 %v1376, %v1376
      %v1409 = vpack.c.b16 %v1377, %v1377
      %1442 = vst [vmem:[%s255] sm:$0xf] %v1378
      %1443 = vst [vmem:[%s255 + $0x4] sm:$0xf] %v1379
      %1444 = vst [vmem:[%s255 + $0x8] sm:$0xf] %v1380
      %1445 = vst [vmem:[%s255 + $0xc] sm:$0xf] %v1381
      %1446 = vst [vmem:[%s255 + $0x10] sm:$0xf] %v1382
      %1447 = vst [vmem:[%s255 + $0x14] sm:$0xf] %v1383
      %1448 = vst [vmem:[%s255 + $0x18] sm:$0xf] %v1384
      %1449 = vst [vmem:[%s255 + $0x1c] sm:$0xf] %v1385
      %1450 = vst [vmem:[%s255 + $0x20] sm:$0xf] %v1386
      %1451 = vst [vmem:[%s255 + $0x24] sm:$0xf] %v1387
      %1452 = vst [vmem:[%s255 + $0x28] sm:$0xf] %v1388
      %1453 = vst [vmem:[%s255 + $0x2c] sm:$0xf] %v1389
      %1454 = vst [vmem:[%s255 + $0x30] sm:$0xf] %v1390
      %1455 = vst [vmem:[%s255 + $0x34] sm:$0xf] %v1391
      %1456 = vst [vmem:[%s255 + $0x38] sm:$0xf] %v1392
      %1457 = vst [vmem:[%s255 + $0x3c] sm:$0xf] %v1393
      %1458 = vst [vmem:[%s255 + $0x40] sm:$0xf] %v1394
      %1459 = vst [vmem:[%s255 + $0x44] sm:$0xf] %v1395
      %1460 = vst [vmem:[%s255 + $0x48] sm:$0xf] %v1396
      %1461 = vst [vmem:[%s255 + $0x4c] sm:$0xf] %v1397
      %1462 = vst [vmem:[%s255 + $0x50] sm:$0xf] %v1398
      %1463 = vst [vmem:[%s255 + $0x54] sm:$0xf] %v1399
      %1464 = vst [vmem:[%s255 + $0x58] sm:$0xf] %v1400
      %1465 = vst [vmem:[%s255 + $0x5c] sm:$0xf] %v1401
      %1466 = vst [vmem:[%s255 + $0x60] sm:$0xf] %v1402
      %1467 = vst [vmem:[%s255 + $0x64] sm:$0xf] %v1403
      %1468 = vst [vmem:[%s255 + $0x68] sm:$0xf] %v1404
      %1469 = vst [vmem:[%s255 + $0x6c] sm:$0xf] %v1405
      %1470 = vst [vmem:[%s255 + $0x70] sm:$0xf] %v1406
      %1471 = vst [vmem:[%s255 + $0x74] sm:$0xf] %v1407
      %1472 = vst [vmem:[%s255 + $0x78] sm:$0xf] %v1408
      %1473 = vst [vmem:[%s255 + $0x7c] sm:$0xf] %v1409
      %s1474 = smul.u32 32, %s20
      %p1475 = scmp.lt.s32.totalorder %s19, 3
      %s1476 = scalar_select %p1475, %s19, 3
      %p1477 = scmp.lt.s32.totalorder %s1474, 127
      %s1478 = scalar_select %p1477, %s1474, 127
      %s1479 = smul.addr %s1476, 128
      %s1480 = sadd.s32 %s1478, %s1479
      %s1481 = smul.addr %s1480, 4
      %s1482 = scalar_lea.vmem %s4, %s1481
      // Predicated region
      $region37: #{cnn_decoder_forward.8} parent=35 // pred_check
        %p1483 = pneg %p143
      $region38: #{cnn_decoder_forward.8} parent=35 // pred_check_branch
        %1485 = sbr.rel (%p1483) target = $region40
      $region39: #{cnn_decoder_forward.8} parent=35 // pred_region
        %s1486 = smul.u32 32, %s20
      $region40: #{cnn_decoder_forward.8} parent=35 // pred_fallthru
        _
    $region36: #{cnn_decoder_forward.8} parent=5 // pred_fallthru
      _
    %p1487 = scmp.le.s32.totalorder 2, %s10
    // Predicated region
    $region41: #{cnn_decoder_forward.8} parent=5 // pred_check
      %p1488 = pneg %p1487
    $region42: #{cnn_decoder_forward.8} parent=5 // pred_check_branch
      %1490 = sbr.rel (%p1488) target = $region44
    $region43: #{cnn_decoder_forward.8} parent=5 // pred_region
      %s1491 = ssub.s32 %s10, 2
      // Predicated region
      $region45: #{cnn_decoder_forward.8} parent=43 // pred_check
        %p1492 = pneg %p149
      $region46: #{cnn_decoder_forward.8} parent=43 // pred_check_branch
        %1494 = sbr.rel (%p1492) target = $region48
      $region47: #{cnn_decoder_forward.8} parent=43 // pred_region
        %s1495 = smul.u32 32, %s22
        %p1496 = scmp.lt.s32.totalorder %s21, 3
        %s1497 = scalar_select %p1496, %s21, 3
        %p1498 = scmp.lt.s32.totalorder %s1495, 127
        %s1499 = scalar_select %p1498, %s1495, 127
        %s1500 = smul.addr %s1497, 128
        %s1501 = sadd.s32 %s1499, %s1500
        %s1502 = smul.addr %s1501, 4
        %s1503 = scalar_lea.vmem %s4, %s1502
      $region48: #{cnn_decoder_forward.8} parent=43 // pred_fallthru
        _
    $region44: #{cnn_decoder_forward.8} parent=5 // pred_fallthru
      _
  $region6: #{cnn_decoder_forward.8} parent=0 // loop_footer
    %s14 = sadd.s32 1, %s10
  $region7: #{cnn_decoder_forward.8} parent=0 // loop_footer_branch
    %9 = sbr.rel target = $region3
  $region8: #{cnn_decoder_forward.8} parent=0 // loop_exit
    _

// kernel: cnn_decoder_forward.9
$region0: #{cnn_decoder_forward.9}
  #allocation0 [shape = 'u32[]', space=smem, size = 0x4, offset = 0x4, fixed_abs, tag = 'smem constant byte address 0x4 - core index']
  #allocation1 [shape = 'u32[144,128]{1,0:T(1,128)}', space=vmem, size = 0x12000, scoped, tag = 'internal scratch']
  %s0 = inlined_call_operand.vmem [shape: bf16[4,4096,16], index: 0, kind: input, shape index: {}]
  %s1 = inlined_call_operand.vmem [shape: bf16[4,16,128], index: 1, kind: input, shape index: {}]
  %s2 = inlined_call_operand.vmem [shape: f32[1,128], index: 2, kind: input, shape index: {}]
  %s3 = inlined_call_operand.vmem [shape: f32[4,4096,128], index: 3, kind: output, shape index: {}]
  %s4 = sld [smem:[#allocation0]]
  $region45: #{cnn_decoder_forward.9} parent=0
    _
  %s6 = ssub.s32 1, %s4
  %s7 = scalar_select 0, %s6, %s4
  loop: start=0, step=1, limit=66
  $region2: #{cnn_decoder_forward.9} parent=0 // loop_pre_header
    _
  $region3: #{cnn_decoder_forward.9} parent=0 // loop_header
    %s9 = sphi 0, %s13
    %p10 = scmp.ge.s32.totalorder %s9, 66
    %s16 = sphi 0, %s28
    %s17 = sphi 0, %s24
    %s18 = sphi 0, %s16
    %s19 = sphi 0, %s17
    %s20 = sphi 0, %s18
    %s21 = sphi 0, %s19
    %s33 = sphi 0, %s35
    %s36 = sphi 0, %s33
    %s37 = sphi 0, %s36
    %s53 = sphi 0, %s37
    %s59 = sphi 0, %s61
    %s62 = sphi 0, %s59
    %s63 = sphi 0, %s62
    %s79 = sphi 0, %s63
    %s83 = sphi 0, %s83
    %s85 = sphi 0, %s83
    %s86 = sphi 0, %s85
    %s100 = sphi 0, %s86
    %s108 = sphi 0, %s110
    %s111 = sphi 0, %s108
    %s112 = sphi 0, %s111
    %s128 = sphi 0, %s112
  $region4: #{cnn_decoder_forward.9} parent=0 // loop_header_branch
    %12 = sbr.rel (%p10) target = $region8
  $region5: #{cnn_decoder_forward.9} parent=0 // loop_body
    %s14 = ssub.s32 %s9, 1
    %s15 = ssub.s32 %s9, 2
    %s22 = sadd.s32 1, %s17
    %p23 = scmp.ge.s32.totalorder %s22, 16
    %s24 = scalar_select %p23, 0, %s22
    %s25 = sadd.s32 1, %s16
    %s26 = scalar_select %p23, %s25, %s16
    %p27 = scmp.ge.s32.totalorder %s26, 4
    %s28 = scalar_select %p27, 0, %s26
    %s29 = ssub.s32 %s16, %s28
    %s30 = ssub.s32 %s17, %s24
    %s31 = sor.u32 %s29, %s30
    %p32 = scmp.eq.s32.totalorder %s31, 0
    %s34 = sadd.s32 %s33, 1
    %s35 = scalar_select %p32, %s33, %s34
    %p38 = pneg %p32
    %p39 = scmp.eq.s32.totalorder %s9, 63
    %p40 = por %p38, %p39
    %p41 = scmp.ne.s32.totalorder %s33, %s36
    %p42 = scmp.eq.s32.totalorder %s9, 0
    %p43 = por %p41, %p42
    %p44 = scmp.ne.s32.totalorder %s33, %s36
    %p45 = scmp.eq.s32.totalorder %s14, 63
    %p46 = por %p44, %p45
    %p47 = scmp.ne.s32.totalorder %s36, %s37
    %p48 = scmp.eq.s32.totalorder %s14, 0
    %p49 = por %p47, %p48
    %p50 = scmp.ne.s32.totalorder %s36, %s37
    %p51 = scmp.eq.s32.totalorder %s15, 63
    %p52 = por %p50, %p51
    %p54 = scmp.ne.s32.totalorder %s37, %s53
    %p55 = scmp.eq.s32.totalorder %s15, 0
    %p56 = por %p54, %p55
    %s57 = ssub.s32 %s16, %s28
    %p58 = scmp.eq.s32.totalorder %s57, 0
    %s60 = sadd.s32 %s59, 1
    %s61 = scalar_select %p58, %s59, %s60
    %p64 = pneg %p58
    %p65 = scmp.eq.s32.totalorder %s9, 63
    %p66 = por %p64, %p65
    %p67 = scmp.ne.s32.totalorder %s59, %s62
    %p68 = scmp.eq.s32.totalorder %s9, 0
    %p69 = por %p67, %p68
    %p70 = scmp.ne.s32.totalorder %s59, %s62
    %p71 = scmp.eq.s32.totalorder %s14, 63
    %p72 = por %p70, %p71
    %p73 = scmp.ne.s32.totalorder %s62, %s63
    %p74 = scmp.eq.s32.totalorder %s14, 0
    %p75 = por %p73, %p74
    %p76 = scmp.ne.s32.totalorder %s62, %s63
    %p77 = scmp.eq.s32.totalorder %s15, 63
    %p78 = por %p76, %p77
    %p80 = scmp.ne.s32.totalorder %s63, %s79
    %p81 = scmp.eq.s32.totalorder %s15, 0
    %p82 = por %p80, %p81
    %s84 = sadd.s32 %s83, 1
    %p87 = scmp.eq.s32.totalorder %s9, 63
    %p88 = scmp.ne.s32.totalorder %s83, %s85
    %p89 = scmp.eq.s32.totalorder %s9, 0
    %p90 = por %p88, %p89
    %p91 = scmp.ne.s32.totalorder %s83, %s85
    %p92 = scmp.eq.s32.totalorder %s14, 63
    %p93 = por %p91, %p92
    %p94 = scmp.ne.s32.totalorder %s85, %s86
    %p95 = scmp.eq.s32.totalorder %s14, 0
    %p96 = por %p94, %p95
    %p97 = scmp.ne.s32.totalorder %s85, %s86
    %p98 = scmp.eq.s32.totalorder %s15, 63
    %p99 = por %p97, %p98
    %p101 = scmp.ne.s32.totalorder %s86, %s100
    %p102 = scmp.eq.s32.totalorder %s15, 0
    %p103 = por %p101, %p102
    %s104 = ssub.s32 %s16, %s28
    %s105 = ssub.s32 %s17, %s24
    %s106 = sor.u32 %s104, %s105
    %p107 = scmp.eq.s32.totalorder %s106, 0
    %s109 = sadd.s32 %s108, 1
    %s110 = scalar_select %p107, %s108, %s109
    %p113 = pneg %p107
    %p114 = scmp.eq.s32.totalorder %s9, 63
    %p115 = por %p113, %p114
    %p116 = scmp.ne.s32.totalorder %s108, %s111
    %p117 = scmp.eq.s32.totalorder %s9, 0
    %p118 = por %p116, %p117
    %p119 = scmp.ne.s32.totalorder %s108, %s111
    %p120 = scmp.eq.s32.totalorder %s14, 63
    %p121 = por %p119, %p120
    %p122 = scmp.ne.s32.totalorder %s111, %s112
    %p123 = scmp.eq.s32.totalorder %s14, 0
    %p124 = por %p122, %p123
    %p125 = scmp.ne.s32.totalorder %s111, %s112
    %p126 = scmp.eq.s32.totalorder %s15, 63
    %p127 = por %p125, %p126
    %p129 = scmp.ne.s32.totalorder %s112, %s128
    %p130 = scmp.eq.s32.totalorder %s15, 0
    %p131 = por %p129, %p130
    %p132 = scmp.le.s32.totalorder 1, %s9
    %p133 = scmp.lt.s32.totalorder %s9, 65
    %p134 = pnand %p132, %p133
    %p135 = pneg %p134
    // Predicated region
    $region9: #{cnn_decoder_forward.9} parent=5 // pred_check
      _
    $region10: #{cnn_decoder_forward.9} parent=5 // pred_check_branch
      %137 = sbr.rel (%p134) target = $region12
    $region11: #{cnn_decoder_forward.9} parent=5 // pred_region
      %s138 = ssub.s32 %s9, 1
      // Predicated region
      $region13: #{cnn_decoder_forward.9} parent=11 // pred_check
        %p139 = pneg %p96
      $region14: #{cnn_decoder_forward.9} parent=11 // pred_check_branch
        %141 = sbr.rel (%p139) target = $region16
      $region15: #{cnn_decoder_forward.9} parent=11 // pred_region
        _
      $region16: #{cnn_decoder_forward.9} parent=11 // pred_fallthru
        _
    $region12: #{cnn_decoder_forward.9} parent=5 // pred_fallthru
      _
    %p142 = scmp.lt.s32.totalorder %s9, 64
    // Predicated region
    $region17: #{cnn_decoder_forward.9} parent=5 // pred_check
      %p143 = pneg %p142
    $region18: #{cnn_decoder_forward.9} parent=5 // pred_check_branch
      %145 = sbr.rel (%p143) target = $region20
    $region19: #{cnn_decoder_forward.9} parent=5 // pred_region
      // Predicated region
      $region21: #{cnn_decoder_forward.9} parent=19 // pred_check
        %p146 = pneg %p43
      $region22: #{cnn_decoder_forward.9} parent=19 // pred_check_branch
        %148 = sbr.rel (%p146) target = $region24
      $region23: #{cnn_decoder_forward.9} parent=19 // pred_region
        %s149 = smul.u32 32, %s17
        %p150 = scmp.lt.s32.totalorder %s16, 3
        %s151 = scalar_select %p150, %s16, 3
        %p152 = scmp.lt.s32.totalorder %s149, 511
        %s153 = scalar_select %p152, %s149, 511
        %s154 = smul.addr %s151, 512
        %s155 = sadd.s32 %s153, %s154
        %s156 = smul.addr %s155, 4
        %s157 = scalar_lea.vmem %s0, %s156
        %s158 = smul.u32 32, %s17
      $region24: #{cnn_decoder_forward.9} parent=19 // pred_fallthru
        _
      // Predicated region
      $region25: #{cnn_decoder_forward.9} parent=19 // pred_check
        %p159 = pneg %p69
      $region26: #{cnn_decoder_forward.9} parent=19 // pred_check_branch
        %161 = sbr.rel (%p159) target = $region28
      $region27: #{cnn_decoder_forward.9} parent=19 // pred_region
        %p162 = scmp.lt.s32.totalorder %s16, 3
        %s163 = scalar_select %p162, %s16, 3
        %s164 = smul.addr %s163, 2
        %s165 = smul.addr %s164, 4
        %s166 = scalar_lea.vmem %s1, %s165
      $region28: #{cnn_decoder_forward.9} parent=19 // pred_fallthru
        _
    $region20: #{cnn_decoder_forward.9} parent=5 // pred_fallthru
      _
    %p167 = scmp.le.s32.totalorder 1, %s9
    %p168 = scmp.lt.s32.totalorder %s9, 65
    %p169 = pnand %p167, %p168
    %p170 = pneg %p169
    // Predicated region
    $region29: #{cnn_decoder_forward.9} parent=5 // pred_check
      _
    $region30: #{cnn_decoder_forward.9} parent=5 // pred_check_branch
      %172 = sbr.rel (%p169) target = $region32
    $region31: #{cnn_decoder_forward.9} parent=5 // pred_region
      %s173 = ssub.s32 %s9, 1
      %s174 = smul.u32 32, %s19
      %p175 = scmp.lt.s32.totalorder %s18, 3
      %s176 = scalar_select %p175, %s18, 3
      %p177 = scmp.lt.s32.totalorder %s174, 511
      %s178 = scalar_select %p177, %s174, 511
      %s179 = smul.addr %s176, 512
      %s180 = sadd.s32 %s178, %s179
      %s181 = smul.addr %s180, 4
      %s182 = scalar_lea.vmem %s0, %s181
      %p183 = pneg %p49
      %p184 = pneg %p46
      %p185 = scmp.lt.s32.totalorder %s18, 3
      %s186 = scalar_select %p185, %s18, 3
      %s187 = smul.addr %s186, 2
      %s188 = smul.addr %s187, 4
      %s189 = scalar_lea.vmem %s1, %s188
      %p190 = pneg %p75
      %p191 = pneg %p72
      %p192 = pneg %p96
      %p193 = pneg %p93
      %p194 = pneg %p124
      %p195 = pneg %p121
      %s196 = smul.u32 32, %s19
      %p197 = scmp.lt.s32.totalorder %s18, 3
      %s198 = scalar_select %p197, %s18, 3
      %p199 = scmp.lt.s32.totalorder %s196, 511
      %s200 = scalar_select %p199, %s196, 511
      %s201 = smul.addr %s198, 512
      %s202 = sadd.s32 %s200, %s201
      %s203 = smul.addr %s202, 8
      %s204 = scalar_lea.vmem %s3, %s203
      %s205 = smul.u32 32, %s19
      %p206 = scmp.lt.s32.totalorder %s18, 3
      %s207 = scalar_select %p206, %s18, 3
      %p208 = scmp.lt.s32.totalorder %s205, 511
      %s209 = scalar_select %p208, %s205, 511
      %s210 = smul.addr %s207, 512
      %s211 = sadd.s32 %s209, %s210
      %s212 = smul.addr %s211, 4
      %s213 = scalar_lea.vmem %s0, %s212
      %s214 = smul.u32 32, %s19
      %p215 = scmp.lt.s32.totalorder %s18, 3
      %s216 = scalar_select %p215, %s18, 3
      %s217 = smul.addr %s216, 2
      %s218 = smul.addr %s217, 4
      %s219 = scalar_lea.vmem %s1, %s218
      %s220 = smul.u32 32, %s19
      %p221 = scmp.lt.s32.totalorder %s18, 3
      %s222 = scalar_select %p221, %s18, 3
      %p223 = scmp.lt.s32.totalorder %s220, 511
      %s224 = scalar_select %p223, %s220, 511
      %s225 = smul.addr %s222, 512
      %s226 = sadd.s32 %s224, %s225
      %s227 = smul.addr %s226, 8
      %s228 = scalar_lea.vmem %s3, %s227
      %s229 = smul.u32 32, %s19
      %v231 = vld [vmem:[%s213] sm:$0xf]
      %v232 = vld [vmem:[%s213 + $0x4] sm:$0xf]
      %v233 = vld [vmem:[%s213 + $0x8] sm:$0xf]
      %v234 = vld [vmem:[%s213 + $0xc] sm:$0xf]
      %v235 = vld [vmem:[%s213 + $0x10] sm:$0xf]
      %v236 = vld [vmem:[%s213 + $0x14] sm:$0xf]
      %v237 = vld [vmem:[%s213 + $0x18] sm:$0xf]
      %v238 = vld [vmem:[%s213 + $0x1c] sm:$0xf]
      %v239 = vld [vmem:[%s213 + $0x20] sm:$0xf]
      %v240 = vld [vmem:[%s213 + $0x24] sm:$0xf]
      %v241 = vld [vmem:[%s213 + $0x28] sm:$0xf]
      %v242 = vld [vmem:[%s213 + $0x2c] sm:$0xf]
      %v243 = vld [vmem:[%s213 + $0x30] sm:$0xf]
      %v244 = vld [vmem:[%s213 + $0x34] sm:$0xf]
      %v245 = vld [vmem:[%s213 + $0x38] sm:$0xf]
      %v246 = vld [vmem:[%s213 + $0x3c] sm:$0xf]
      %v247 = vld [vmem:[%s213 + $0x40] sm:$0xf]
      %v248 = vld [vmem:[%s213 + $0x44] sm:$0xf]
      %v249 = vld [vmem:[%s213 + $0x48] sm:$0xf]
      %v250 = vld [vmem:[%s213 + $0x4c] sm:$0xf]
      %v251 = vld [vmem:[%s213 + $0x50] sm:$0xf]
      %v252 = vld [vmem:[%s213 + $0x54] sm:$0xf]
      %v253 = vld [vmem:[%s213 + $0x58] sm:$0xf]
      %v254 = vld [vmem:[%s213 + $0x5c] sm:$0xf]
      %v255 = vld [vmem:[%s213 + $0x60] sm:$0xf]
      %v256 = vld [vmem:[%s213 + $0x64] sm:$0xf]
      %v257 = vld [vmem:[%s213 + $0x68] sm:$0xf]
      %v258 = vld [vmem:[%s213 + $0x6c] sm:$0xf]
      %v259 = vld [vmem:[%s213 + $0x70] sm:$0xf]
      %v260 = vld [vmem:[%s213 + $0x74] sm:$0xf]
      %v261 = vld [vmem:[%s213 + $0x78] sm:$0xf]
      %v262 = vld [vmem:[%s213 + $0x7c] sm:$0xf]
      %v263 = vld [vmem:[%s219] sm:$0xf]
      %v264 = vld [vmem:[%s219 + $0x4] sm:$0xf]
      %v265 = vld [vmem:[%s2] sm:$0x1]
      %v267 = vlaneseq
      %v268 = vshrl.u32 %v267, 7
      %v269 = vsub.s32 0, %v268
      %v270 = vrot.slane %v265, %v269
      %v304 = vunpack.c.l.b16 %v231
      %v305 = vunpack.c.l.b16 %v232
      %v306 = vunpack.c.l.b16 %v233
      %v307 = vunpack.c.l.b16 %v234
      %v308 = vunpack.c.l.b16 %v235
      %v309 = vunpack.c.l.b16 %v236
      %v310 = vunpack.c.l.b16 %v237
      %v311 = vunpack.c.l.b16 %v238
      %v312 = vunpack.c.l.b16 %v239
      %v313 = vunpack.c.l.b16 %v240
      %v314 = vunpack.c.l.b16 %v241
      %v315 = vunpack.c.l.b16 %v242
      %v316 = vunpack.c.l.b16 %v243
      %v317 = vunpack.c.l.b16 %v244
      %v318 = vunpack.c.l.b16 %v245
      %v319 = vunpack.c.l.b16 %v246
      %v320 = vunpack.c.l.b16 %v247
      %v321 = vunpack.c.l.b16 %v248
      %v322 = vunpack.c.l.b16 %v249
      %v323 = vunpack.c.l.b16 %v250
      %v324 = vunpack.c.l.b16 %v251
      %v325 = vunpack.c.l.b16 %v252
      %v326 = vunpack.c.l.b16 %v253
      %v327 = vunpack.c.l.b16 %v254
      %v328 = vunpack.c.l.b16 %v255
      %v329 = vunpack.c.l.b16 %v256
      %v330 = vunpack.c.l.b16 %v257
      %v331 = vunpack.c.l.b16 %v258
      %v332 = vunpack.c.l.b16 %v259
      %v333 = vunpack.c.l.b16 %v260
      %v334 = vunpack.c.l.b16 %v261
      %v335 = vunpack.c.l.b16 %v262
      %v336 = vpack.c.b16 %v305, %v304
      %v337 = vpack.c.b16 %v307, %v306
      %v338 = vpack.c.b16 %v309, %v308
      %v339 = vpack.c.b16 %v311, %v310
      %v340 = vpack.c.b16 %v313, %v312
      %v341 = vpack.c.b16 %v315, %v314
      %v342 = vpack.c.b16 %v317, %v316
      %v343 = vpack.c.b16 %v319, %v318
      %v344 = vpack.c.b16 %v321, %v320
      %v345 = vpack.c.b16 %v323, %v322
      %v346 = vpack.c.b16 %v325, %v324
      %v347 = vpack.c.b16 %v327, %v326
      %v348 = vpack.c.b16 %v329, %v328
      %v349 = vpack.c.b16 %v331, %v330
      %v350 = vpack.c.b16 %v333, %v332
      %v351 = vpack.c.b16 %v335, %v334
      %v354 = vunpack.c.l.b16 %v263
      %v355 = vunpack.c.l.b16 %v264
      %v356 = vpack.c.b16 %v355, %v354
      %vm358 = vcmask 130048
      %v360 = vsel %vm358, %v336, 0
      %v363 = vsel %vm358, %v337, 0
      %v366 = vsel %vm358, %v338, 0
      %v369 = vsel %vm358, %v339, 0
      %v372 = vsel %vm358, %v340, 0
      %v375 = vsel %vm358, %v341, 0
      %v378 = vsel %vm358, %v342, 0
      %v381 = vsel %vm358, %v343, 0
      %v384 = vsel %vm358, %v344, 0
      %v387 = vsel %vm358, %v345, 0
      %v390 = vsel %vm358, %v346, 0
      %v393 = vsel %vm358, %v347, 0
      %v396 = vsel %vm358, %v348, 0
      %v399 = vsel %vm358, %v349, 0
      %v402 = vsel %vm358, %v350, 0
      %v405 = vsel %vm358, %v351, 0
      %407 = vmatprep.subr.bf16.mxu0 0
      %408 = vmatpush1.bf16.msra.mxu0 %v356
      %409 = vmatprep.subr.bf16.mxu0 0
      %410 = vmatpush1.bf16.msra.mxu0 0
      %411 = vmatprep.subr.bf16.mxu0 0
      %412 = vmatpush1.bf16.msra.mxu0 0
      %413 = vmatprep.subr.bf16.mxu0 0
      %414 = vmatpush1.bf16.msra.mxu0 0
      %415 = vmatprep.subr.bf16.mxu0 0
      %416 = vmatpush1.bf16.msra.mxu0 0
      %417 = vmatprep.subr.bf16.mxu0 0
      %418 = vmatpush1.bf16.msra.mxu0 0
      %419 = vmatprep.subr.bf16.mxu0 0
      %420 = vmatpush1.bf16.msra.mxu0 0
      %421 = vmatprep.subr.bf16.mxu0 0
      %422 = vmatpush1.bf16.msra.mxu0 0
      %423 = vmatprep.subr.bf16.mxu0 0
      %424 = vmatpush1.bf16.msra.mxu0 0
      %425 = vmatprep.subr.bf16.mxu0 0
      %426 = vmatpush1.bf16.msra.mxu0 0
      %427 = vmatprep.subr.bf16.mxu0 0
      %428 = vmatpush1.bf16.msra.mxu0 0
      %429 = vmatprep.subr.bf16.mxu0 0
      %430 = vmatpush1.bf16.msra.mxu0 0
      %431 = vmatprep.subr.bf16.mxu0 0
      %432 = vmatpush1.bf16.msra.mxu0 0
      %433 = vmatprep.subr.bf16.mxu0 0
      %434 = vmatpush1.bf16.msra.mxu0 0
      %435 = vmatprep.subr.bf16.mxu0 0
      %436 = vmatpush1.bf16.msra.mxu0 0
      %437 = vmatprep.subr.bf16.mxu0 0
      %438 = vmatpush1.bf16.msra.mxu0 0
      %439 = vmatprep.mubr.bf16.mxu0 0
      %440 = vmatmul.mubr.bf16.gmra.mrb[0].mxu0 %v360
      %v441 = vpop.f32.mrb[0].mxu0
      %v442 = vadd.f32 %v270, %v441
      %v443 = vpop.f32.mrb[0].mxu0
      %v444 = vpop.f32.mrb[0].mxu0
      %v445 = vadd.f32 %v270, %v444
      %v446 = vpop.f32.mrb[0].mxu0
      %447 = vmatprep.mubr.bf16.mxu0 0
      %448 = vmatmul.mubr.bf16.gmra.mrb[0].mxu0 %v363
      %v449 = vpop.f32.mrb[0].mxu0
      %v450 = vadd.f32 %v270, %v449
      %v451 = vpop.f32.mrb[0].mxu0
      %v452 = vpop.f32.mrb[0].mxu0
      %v453 = vadd.f32 %v270, %v452
      %v454 = vpop.f32.mrb[0].mxu0
      %455 = vmatprep.mubr.bf16.mxu0 0
      %456 = vmatmul.mubr.bf16.gmra.mrb[0].mxu0 %v366
      %v457 = vpop.f32.mrb[0].mxu0
      %v458 = vadd.f32 %v270, %v457
      %v459 = vpop.f32.mrb[0].mxu0
      %v460 = vpop.f32.mrb[0].mxu0
      %v461 = vadd.f32 %v270, %v460
      %v462 = vpop.f32.mrb[0].mxu0
      %463 = vmatprep.mubr.bf16.mxu0 0
      %464 = vmatmul.mubr.bf16.gmra.mrb[0].mxu0 %v369
      %v465 = vpop.f32.mrb[0].mxu0
      %v466 = vadd.f32 %v270, %v465
      %v467 = vpop.f32.mrb[0].mxu0
      %v468 = vpop.f32.mrb[0].mxu0
      %v469 = vadd.f32 %v270, %v468
      %v470 = vpop.f32.mrb[0].mxu0
      %471 = vmatprep.mubr.bf16.mxu0 0
      %472 = vmatmul.mubr.bf16.gmra.mrb[0].mxu0 %v372
      %v473 = vpop.f32.mrb[0].mxu0
      %v474 = vadd.f32 %v270, %v473
      %v475 = vpop.f32.mrb[0].mxu0
      %v476 = vpop.f32.mrb[0].mxu0
      %v477 = vadd.f32 %v270, %v476
      %v478 = vpop.f32.mrb[0].mxu0
      %479 = vmatprep.mubr.bf16.mxu0 0
      %480 = vmatmul.mubr.bf16.gmra.mrb[0].mxu0 %v375
      %v481 = vpop.f32.mrb[0].mxu0
      %v482 = vadd.f32 %v270, %v481
      %v483 = vpop.f32.mrb[0].mxu0
      %v484 = vpop.f32.mrb[0].mxu0
      %v485 = vadd.f32 %v270, %v484
      %v486 = vpop.f32.mrb[0].mxu0
      %487 = vmatprep.mubr.bf16.mxu0 0
      %488 = vmatmul.mubr.bf16.gmra.mrb[0].mxu0 %v378
      %v489 = vpop.f32.mrb[0].mxu0
      %v490 = vadd.f32 %v270, %v489
      %v491 = vpop.f32.mrb[0].mxu0
      %v492 = vpop.f32.mrb[0].mxu0
      %v493 = vadd.f32 %v270, %v492
      %v494 = vpop.f32.mrb[0].mxu0
      %495 = vmatprep.mubr.bf16.mxu0 0
      %496 = vmatmul.mubr.bf16.gmra.mrb[0].mxu0 %v381
      %v497 = vpop.f32.mrb[0].mxu0
      %v498 = vadd.f32 %v270, %v497
      %v499 = vpop.f32.mrb[0].mxu0
      %v500 = vpop.f32.mrb[0].mxu0
      %v501 = vadd.f32 %v270, %v500
      %v502 = vpop.f32.mrb[0].mxu0
      %503 = vmatprep.mubr.bf16.mxu0 0
      %504 = vmatmul.mubr.bf16.gmra.mrb[0].mxu0 %v384
      %v505 = vpop.f32.mrb[0].mxu0
      %v506 = vadd.f32 %v270, %v505
      %v507 = vpop.f32.mrb[0].mxu0
      %v508 = vpop.f32.mrb[0].mxu0
      %v509 = vadd.f32 %v270, %v508
      %v510 = vpop.f32.mrb[0].mxu0
      %511 = vmatprep.mubr.bf16.mxu0 0
      %512 = vmatmul.mubr.bf16.gmra.mrb[0].mxu0 %v387
      %v513 = vpop.f32.mrb[0].mxu0
      %v514 = vadd.f32 %v270, %v513
      %v515 = vpop.f32.mrb[0].mxu0
      %v516 = vpop.f32.mrb[0].mxu0
      %v517 = vadd.f32 %v270, %v516
      %v518 = vpop.f32.mrb[0].mxu0
      %519 = vmatprep.mubr.bf16.mxu0 0
      %520 = vmatmul.mubr.bf16.gmra.mrb[0].mxu0 %v390
      %v521 = vpop.f32.mrb[0].mxu0
      %v522 = vadd.f32 %v270, %v521
      %v523 = vpop.f32.mrb[0].mxu0
      %v524 = vpop.f32.mrb[0].mxu0
      %v525 = vadd.f32 %v270, %v524
      %v526 = vpop.f32.mrb[0].mxu0
      %527 = vmatprep.mubr.bf16.mxu0 0
      %528 = vmatmul.mubr.bf16.gmra.mrb[0].mxu0 %v393
      %v529 = vpop.f32.mrb[0].mxu0
      %v530 = vadd.f32 %v270, %v529
      %v531 = vpop.f32.mrb[0].mxu0
      %v532 = vpop.f32.mrb[0].mxu0
      %v533 = vadd.f32 %v270, %v532
      %v534 = vpop.f32.mrb[0].mxu0
      %535 = vmatprep.mubr.bf16.mxu0 0
      %536 = vmatmul.mubr.bf16.gmra.mrb[0].mxu0 %v396
      %v537 = vpop.f32.mrb[0].mxu0
      %v538 = vadd.f32 %v270, %v537
      %v539 = vpop.f32.mrb[0].mxu0
      %v540 = vpop.f32.mrb[0].mxu0
      %v541 = vadd.f32 %v270, %v540
      %v542 = vpop.f32.mrb[0].mxu0
      %543 = vmatprep.mubr.bf16.mxu0 0
      %544 = vmatmul.mubr.bf16.gmra.mrb[0].mxu0 %v399
      %v545 = vpop.f32.mrb[0].mxu0
      %v546 = vadd.f32 %v270, %v545
      %v547 = vpop.f32.mrb[0].mxu0
      %v548 = vpop.f32.mrb[0].mxu0
      %v549 = vadd.f32 %v270, %v548
      %v550 = vpop.f32.mrb[0].mxu0
      %551 = vmatprep.mubr.bf16.mxu0 0
      %552 = vmatmul.mubr.bf16.gmra.mrb[0].mxu0 %v402
      %v553 = vpop.f32.mrb[0].mxu0
      %v554 = vadd.f32 %v270, %v553
      %v555 = vpop.f32.mrb[0].mxu0
      %v556 = vpop.f32.mrb[0].mxu0
      %v557 = vadd.f32 %v270, %v556
      %v558 = vpop.f32.mrb[0].mxu0
      %559 = vmatprep.mubr.bf16.mxu0 0
      %560 = vmatmul.mubr.bf16.gmra.mrb[0].mxu0 %v405
      %v561 = vpop.f32.mrb[0].mxu0
      %v562 = vadd.f32 %v270, %v561
      %v563 = vpop.f32.mrb[0].mxu0
      %v564 = vpop.f32.mrb[0].mxu0
      %v565 = vadd.f32 %v270, %v564
      %v566 = vpop.f32.mrb[0].mxu0
      %567 = vdwg.mxu0
      %v568 = vadd.f32 %v442, 0.5
      %v569 = vadd.f32 %v445, 0.5
      %v570 = vadd.f32 %v450, 0.5
      %v571 = vadd.f32 %v453, 0.5
      %v572 = vadd.f32 %v458, 0.5
      %v573 = vadd.f32 %v461, 0.5
      %v574 = vadd.f32 %v466, 0.5
      %v575 = vadd.f32 %v469, 0.5
      %v576 = vadd.f32 %v474, 0.5
      %v577 = vadd.f32 %v477, 0.5
      %v578 = vadd.f32 %v482, 0.5
      %v579 = vadd.f32 %v485, 0.5
      %v580 = vadd.f32 %v490, 0.5
      %v581 = vadd.f32 %v493, 0.5
      %v582 = vadd.f32 %v498, 0.5
      %v583 = vadd.f32 %v501, 0.5
      %v584 = vadd.f32 %v506, 0.5
      %v585 = vadd.f32 %v509, 0.5
      %v586 = vadd.f32 %v514, 0.5
      %v587 = vadd.f32 %v517, 0.5
      %v588 = vadd.f32 %v522, 0.5
      %v589 = vadd.f32 %v525, 0.5
      %v590 = vadd.f32 %v530, 0.5
      %v591 = vadd.f32 %v533, 0.5
      %v592 = vadd.f32 %v538, 0.5
      %v593 = vadd.f32 %v541, 0.5
      %v594 = vadd.f32 %v546, 0.5
      %v595 = vadd.f32 %v549, 0.5
      %v596 = vadd.f32 %v554, 0.5
      %v597 = vadd.f32 %v557, 0.5
      %v598 = vadd.f32 %v562, 0.5
      %v599 = vadd.f32 %v565, 0.5
      %600 = vst [vmem:[%s228] sm:$0xff] %v568
      %601 = vst [vmem:[%s228 + $0x8] sm:$0xff] %v569
      %602 = vst [vmem:[%s228 + $0x10] sm:$0xff] %v570
      %603 = vst [vmem:[%s228 + $0x18] sm:$0xff] %v571
      %604 = vst [vmem:[%s228 + $0x20] sm:$0xff] %v572
      %605 = vst [vmem:[%s228 + $0x28] sm:$0xff] %v573
      %606 = vst [vmem:[%s228 + $0x30] sm:$0xff] %v574
      %607 = vst [vmem:[%s228 + $0x38] sm:$0xff] %v575
      %608 = vst [vmem:[%s228 + $0x40] sm:$0xff] %v576
      %609 = vst [vmem:[%s228 + $0x48] sm:$0xff] %v577
      %610 = vst [vmem:[%s228 + $0x50] sm:$0xff] %v578
      %611 = vst [vmem:[%s228 + $0x58] sm:$0xff] %v579
      %612 = vst [vmem:[%s228 + $0x60] sm:$0xff] %v580
      %613 = vst [vmem:[%s228 + $0x68] sm:$0xff] %v581
      %614 = vst [vmem:[%s228 + $0x70] sm:$0xff] %v582
      %615 = vst [vmem:[%s228 + $0x78] sm:$0xff] %v583
      %616 = vst [vmem:[%s228 + $0x80] sm:$0xff] %v584
      %617 = vst [vmem:[%s228 + $0x88] sm:$0xff] %v585
      %618 = vst [vmem:[%s228 + $0x90] sm:$0xff] %v586
      %619 = vst [vmem:[%s228 + $0x98] sm:$0xff] %v587
      %620 = vst [vmem:[%s228 + $0xa0] sm:$0xff] %v588
      %621 = vst [vmem:[%s228 + $0xa8] sm:$0xff] %v589
      %622 = vst [vmem:[%s228 + $0xb0] sm:$0xff] %v590
      %623 = vst [vmem:[%s228 + $0xb8] sm:$0xff] %v591
      %624 = vst [vmem:[%s228 + $0xc0] sm:$0xff] %v592
      %625 = vst [vmem:[%s228 + $0xc8] sm:$0xff] %v593
      %626 = vst [vmem:[%s228 + $0xd0] sm:$0xff] %v594
      %627 = vst [vmem:[%s228 + $0xd8] sm:$0xff] %v595
      %628 = vst [vmem:[%s228 + $0xe0] sm:$0xff] %v596
      %629 = vst [vmem:[%s228 + $0xe8] sm:$0xff] %v597
      %630 = vst [vmem:[%s228 + $0xf0] sm:$0xff] %v598
      %631 = vst [vmem:[%s228 + $0xf8] sm:$0xff] %v599
      %s632 = smul.u32 32, %s19
      %p633 = scmp.lt.s32.totalorder %s18, 3
      %s634 = scalar_select %p633, %s18, 3
      %p635 = scmp.lt.s32.totalorder %s632, 511
      %s636 = scalar_select %p635, %s632, 511
      %s637 = smul.addr %s634, 512
      %s638 = sadd.s32 %s636, %s637
      %s639 = smul.addr %s638, 8
      %s640 = scalar_lea.vmem %s3, %s639
      // Predicated region
      $region33: #{cnn_decoder_forward.9} parent=31 // pred_check
        %p641 = pneg %p121
      $region34: #{cnn_decoder_forward.9} parent=31 // pred_check_branch
        %643 = sbr.rel (%p641) target = $region36
      $region35: #{cnn_decoder_forward.9} parent=31 // pred_region
        %s644 = smul.u32 32, %s19
      $region36: #{cnn_decoder_forward.9} parent=31 // pred_fallthru
        _
    $region32: #{cnn_decoder_forward.9} parent=5 // pred_fallthru
      _
    %p645 = scmp.le.s32.totalorder 2, %s9
    // Predicated region
    $region37: #{cnn_decoder_forward.9} parent=5 // pred_check
      %p646 = pneg %p645
    $region38: #{cnn_decoder_forward.9} parent=5 // pred_check_branch
      %648 = sbr.rel (%p646) target = $region40
    $region39: #{cnn_decoder_forward.9} parent=5 // pred_region
      %s649 = ssub.s32 %s9, 2
      // Predicated region
      $region41: #{cnn_decoder_forward.9} parent=39 // pred_check
        %p650 = pneg %p127
      $region42: #{cnn_decoder_forward.9} parent=39 // pred_check_branch
        %652 = sbr.rel (%p650) target = $region44
      $region43: #{cnn_decoder_forward.9} parent=39 // pred_region
        %s653 = smul.u32 32, %s21
        %p654 = scmp.lt.s32.totalorder %s20, 3
        %s655 = scalar_select %p654, %s20, 3
        %p656 = scmp.lt.s32.totalorder %s653, 511
        %s657 = scalar_select %p656, %s653, 511
        %s658 = smul.addr %s655, 512
        %s659 = sadd.s32 %s657, %s658
        %s660 = smul.addr %s659, 8
        %s661 = scalar_lea.vmem %s3, %s660
      $region44: #{cnn_decoder_forward.9} parent=39 // pred_fallthru
        _
    $region40: #{cnn_decoder_forward.9} parent=5 // pred_fallthru
      _
  $region6: #{cnn_decoder_forward.9} parent=0 // loop_footer
    %s13 = sadd.s32 1, %s9
  $region7: #{cnn_decoder_forward.9} parent=0 // loop_footer_branch
    %8 = sbr.rel target = $region3
  $region8: #{cnn_decoder_forward.9} parent=0 // loop_exit
    _

</llo_original>
